<compile_context>
chip_gen: v7x
topology: tpu7x:2x2x1
jax: 0.10.0
libtpu: 0.0.40
codegen_flags: <defaults>
</compile_context>

<pallas_src>
import functools
import math

import jax
import jax.numpy as jnp
import numpy as np
from jax.experimental import pallas as pl
from jax.experimental.pallas import tpu as pltpu

T_FIXED = 344  # hard-coded in the PyTorch module (positional param & expand)


def _round_up(x, m):
    return ((x + m - 1) // m) * m


# ----------------------------------------------------------------------------
# Pallas kernel: WN encoder (dilated conv1d + gated tanh/sigmoid + res/skip)
# followed by the final 1x1 projection conv.
# ----------------------------------------------------------------------------
def prior_encoder_kernel(x0_ref, in_w_ref, in_b_ref, rs_w_ref, rs_b_ref,
                         proj_w_ref, proj_b_ref, o_ref,
                         xbuf_ref, stk_ref, skip_ref, *,
                         hidden, kernel_size, dilation_rate, n_layers,
                         t_pad, t_valid, n_slab, center, kpad):
    H, K, L = hidden, kernel_size, n_layers
    C = center
    W = n_slab * t_pad
    f32, bf16 = jnp.float32, jnp.bfloat16

    # ---- per-program init (never gated on program_id) ----
    # only the xbuf margins need zeroing; the (H, W) center is fully
    # overwritten every layer.
    xbuf_ref[:, :C] = jnp.zeros((H, C), bf16)
    xbuf_ref[:, C + W:] = jnp.zeros((H, C), bf16)
    # zero the unused contraction-pad rows of the stacked operand once: the
    # padded in_w columns are zero, but stale VMEM could hold NaN (0*NaN=NaN).
    if kpad > K * H:
        stk_ref[K * H:, :] = jnp.zeros((kpad - K * H, W), bf16)
    skip_ref[...] = jnp.zeros_like(skip_ref)

    # validity mask hoisted out of the layer loop, built once at full (H, W).
    # lanes >= t_valid inside each concatenated example slab must read back as
    # zero inside the dilated conv (they also serve as the zero margin between
    # lane-concatenated examples).
    lane = jax.lax.broadcasted_iota(jnp.int32, (1, W), 1)
    valid_row = None
    for bb in range(n_slab):
        vb = (lane >= bb * t_pad) & (lane < bb * t_pad + t_valid)
        valid_row = vb if valid_row is None else (valid_row | vb)
    valid = jnp.broadcast_to(valid_row, (H, W))

    x = x0_ref[0]                                   # (H, W) f32 residual stream

    for i in range(L):                              # L is small -> unrolled
        d = dilation_rate ** i
        pad = d * (K - 1) // 2

        # masked residual into the lane-aligned center of the padded buffer
        xbuf_ref[:, C:C + W] = jnp.where(valid, x, 0.0).astype(bf16)

        # build the (kpad, W) stacked conv operand: tap j of the dilated conv
        # is the window shifted by (j*d - pad); it goes into sublane block
        # [j*H:(j+1)*H].  The unaligned lane reads become explicit stores that
        # feed ONE contraction-kpad matmul instead of K contraction-H ones.
        for j in range(K):
            s = C - pad + j * d                     # static lane offset
            stk_ref[j * H:(j + 1) * H, :] = xbuf_ref[:, s:s + W]

        # single fused dilated-conv matmul per layer: (2H, kpad) @ (kpad, W)
        x_in = jnp.dot(in_w_ref[i], stk_ref[...],
                       preferred_element_type=f32) + in_b_ref[i]

        # fused gated unit; sigmoid(b) = 0.5*(1 + tanh(b/2)) -> fewer EUP pushes
        acts = (jnp.tanh(x_in[:H]) *
                (0.5 * jnp.tanh(0.5 * x_in[H:]) + 0.5)).astype(bf16)   # (H, W)

        if i < L - 1:                               # 1x1 res/skip conv
            rs = jnp.dot(rs_w_ref[i], acts, preferred_element_type=f32)
            rs = rs + rs_b_ref[i]                   # (2H, W)
            x = x + rs[:H]                          # residual (stays f32)
            skip_ref[...] += rs[H:]                 # skip
        else:                                       # last layer: skip-only (H)
            rs = jnp.dot(rs_w_ref[i, :H, :], acts, preferred_element_type=f32)
            skip_ref[...] += rs + rs_b_ref[i, :H, :]

    # final 1x1 projection: hidden -> 2 * out_channels
    stats = jnp.dot(proj_w_ref[...], skip_ref[...].astype(bf16),
                    preferred_element_type=f32) + proj_b_ref[...]
    o_ref[0] = stats


# ----------------------------------------------------------------------------
# Wrapper: parameter plumbing + pallas_call
# ----------------------------------------------------------------------------
def _pick_block_b(batch, t_pad, t_valid, pad_max):
    # Pack several examples along lanes per program (bigger matmul N, fewer
    # grid steps) while keeping >= 2 programs so v7x megacore gets both cores.
    if pad_max > t_pad - t_valid:      # inter-example zero margin too thin
        return 1
    for bb in (4, 2):
        if batch % bb == 0 and batch // bb >= 2:
            return bb
    return 1


def prior_encoder_forward(x_idx, z, params, *, out_channels, hidden,
                          kernel_size, dilation_rate, n_layers, block_b=None):
    H, K, L = hidden, kernel_size, n_layers
    B = x_idx.shape[0]
    T = params["positional"].shape[-1]                    # 344 in the module
    T_pad = _round_up(T, 128)                             # lane-dense time (384)
    OC2 = 2 * out_channels
    pad_max = (dilation_rate ** (L - 1)) * (K - 1) // 2   # largest dilation pad
    C = max(128, _round_up(pad_max, 128))                 # lane-aligned margin
    # contraction dim of the fused per-layer conv matmul, rounded up to a lane
    # multiple (=> 256 for K*H=160: matches the v6e/v7x MXU depth and makes the
    # in_w trailing dim lane-dense).  NOTE: on v5e (128-deep MXU) K*H=160
    # already tiles as 128+32; the zero rows cost extra MXU passes there.
    kpad = _round_up(K * H, 128)

    if block_b is None:
        block_b = _pick_block_b(B, T_pad, T, pad_max)
    assert B % block_b == 0
    if block_b > 1:
        assert pad_max <= T_pad - T     # per-example pad lanes isolate slabs
    G = B // block_b
    W = block_b * T_pad

    # ---- glue (plain JAX): embedding gather, noise add, positional, pad,
    #      and lane-concatenation of block_b examples per program ----
    emb_x = params["emb"][x_idx]                          # (B, H) gather
    x0 = emb_x + z * (H ** -0.5)                          # (B, H)
    x0 = x0[:, :, None] + params["positional"]            # (B, H, T)
    x0 = jnp.pad(x0.astype(jnp.float32), ((0, 0), (0, 0), (0, T_pad - T)))
    x0 = x0.reshape(G, block_b, H, T_pad).transpose(0, 2, 1, 3).reshape(G, H, W)

    # fused conv weight: (L, 2H, H, K) -> taps stacked along the contraction,
    # zero-padded to kpad so the trailing dim is a 128 multiple (lane-dense DMA).
    in_w = jnp.transpose(params["in_w"], (0, 1, 3, 2)).reshape(L, 2 * H, K * H)
    in_w = jnp.pad(in_w, ((0, 0), (0, 0), (0, kpad - K * H))).astype(jnp.bfloat16)
    in_b = params["in_b"][..., None].astype(jnp.float32)                 # (L,2H,1)
    rs_w = params["rs_w"].astype(jnp.bfloat16)                           # (L,2H,H)
    rs_b = params["rs_b"][..., None].astype(jnp.float32)                 # (L,2H,1)
    proj_w = params["proj_w"].astype(jnp.bfloat16)                       # (OC2,H)
    proj_b = params["proj_b"][:, None].astype(jnp.float32)               # (OC2,1)

    kern = functools.partial(
        prior_encoder_kernel, hidden=H, kernel_size=K,
        dilation_rate=dilation_rate, n_layers=L,
        t_pad=T_pad, t_valid=T, n_slab=block_b, center=C, kpad=kpad)

    # advisory cost hint for the XLA scheduler around the custom call
    cost = pl.CostEstimate(
        flops=int(2 * B * T_pad * (L * (2 * H * kpad + 2 * H * H) + OC2 * H)),
        transcendentals=int(2 * B * T_pad * L * H),
        bytes_accessed=int(x0.size * 4 + in_w.size * 2 + rs_w.size * 2
                           + B * OC2 * T_pad * 4))

    stats = pl.pallas_call(
        kern,
        out_shape=jax.ShapeDtypeStruct((G, OC2, W), jnp.float32),
        grid=(G,),
        in_specs=[
            pl.BlockSpec((1, H, W), lambda g: (g, 0, 0)),            # x0
            pl.BlockSpec((L, 2 * H, kpad), lambda g: (0, 0, 0)),     # in_w (bf16)
            pl.BlockSpec((L, 2 * H, 1), lambda g: (0, 0, 0)),        # in_b
            pl.BlockSpec((L, 2 * H, H), lambda g: (0, 0, 0)),        # rs_w (bf16)
            pl.BlockSpec((L, 2 * H, 1), lambda g: (0, 0, 0)),        # rs_b
            pl.BlockSpec((OC2, H), lambda g: (0, 0)),                # proj_w (bf16)
            pl.BlockSpec((OC2, 1), lambda g: (0, 0)),                # proj_b
        ],
        out_specs=pl.BlockSpec((1, OC2, W), lambda g: (g, 0, 0)),
        scratch_shapes=[
            pltpu.VMEM((H, C + W + C), jnp.bfloat16),   # zero-margin conv buffer
            pltpu.VMEM((kpad, W), jnp.bfloat16),        # stacked conv operand
            pltpu.VMEM((H, W), jnp.float32),            # skip accumulator
        ],
        compiler_params=pltpu.CompilerParams(
            dimension_semantics=("parallel",)),         # v7x: programs -> 2 TCs
        cost_estimate=cost,
    )(x0, in_w, in_b, rs_w, rs_b, proj_w, proj_b)

    # undo the per-program lane concatenation; drop time padding outside
    stats = stats.reshape(G, OC2, block_b, T_pad).transpose(0, 2, 1, 3)
    return stats.reshape(B, OC2, T_pad)[:, :, :T]


# ----------------------------------------------------------------------------
# Deterministic parameter init (shapes follow the PyTorch __init__)
# ----------------------------------------------------------------------------
def init_params(key, n_class, out_channels, H, K, L, T=T_FIXED):
    ks = jax.random.split(key, 7)
    emb = jax.random.normal(ks[0], (n_class, H), jnp.float32) * (H ** -0.5)
    positional = jnp.zeros((1, H, T), jnp.float32)        # torch init: zeros
    in_w = jax.random.normal(ks[1], (L, 2 * H, H, K), jnp.float32) / math.sqrt(H * K)
    in_b = jax.random.normal(ks[2], (L, 2 * H), jnp.float32) * 0.01
    # last layer's res_skip conv has only H output rows; only rs_w[L-1, :H] /
    # rs_b[L-1, :H] are used (both kernel and reference slice explicitly).
    rs_w = jax.random.normal(ks[3], (L, 2 * H, H), jnp.float32) / math.sqrt(H)
    rs_b = jax.random.normal(ks[4], (L, 2 * H), jnp.float32) * 0.01
    proj_w = jax.random.normal(ks[5], (2 * out_channels, H), jnp.float32) / math.sqrt(H)
    proj_b = jax.random.normal(ks[6], (2 * out_channels,), jnp.float32) * 0.01
    return dict(emb=emb, positional=positional, in_w=in_w, in_b=in_b,
                rs_w=rs_w, rs_b=rs_b, proj_w=proj_w, proj_b=proj_b)


# ----------------------------------------------------------------------------
# Pure-JAX reference (mirrors the PyTorch forward) for correctness check
# ----------------------------------------------------------------------------
def ref_forward(x_idx, z, params, *, out_channels, hidden, kernel_size,
                dilation_rate, n_layers):
    H, K, L = hidden, kernel_size, n_layers
    T = params["positional"].shape[-1]
    hp = jax.lax.Precision.HIGHEST

    xe = params["emb"][x_idx] + z * (H ** -0.5)            # (B, H)
    x = xe[:, :, None] + params["positional"]              # (B, H, T)
    out = jnp.zeros_like(x)
    for i in range(L):
        d = dilation_rate ** i
        pad = d * (K - 1) // 2
        xp = jnp.pad(x, ((0, 0), (0, 0), (pad, pad)))
        W = params["in_w"][i]                              # (2H, H, K)
        x_in = sum(jnp.einsum("oc,bct->bot", W[:, :, j], xp[:, :, j * d: j * d + T],
                              precision=hp) for j in range(K))
        x_in = x_in + params["in_b"][i][None, :, None]
        acts = jnp.tanh(x_in[:, :H]) * jax.nn.sigmoid(x_in[:, H:])
        if i < L - 1:
            rs = jnp.einsum("oc,bct->bot", params["rs_w"][i], acts, precision=hp)
            rs = rs + params["rs_b"][i][None, :, None]
            x = x + rs[:, :H]
            out = out + rs[:, H:]
        else:
            rs = jnp.einsum("oc,bct->bot", params["rs_w"][i, :H], acts, precision=hp)
            out = out + rs + params["rs_b"][i, :H][None, :, None]
    stats = jnp.einsum("oc,bct->bot", params["proj_w"], out, precision=hp)
    return stats + params["proj_b"][None, :, None]


if __name__ == "__main__":
    # small config consistent with the module
    n_class, out_channels, hidden = 10, 4, 32
    kernel_size, dilation_rate, n_layers = 5, 2, 4

    key = jax.random.PRNGKey(0)
    k_param, k_idx, k_z = jax.random.split(key, 3)
    params = init_params(k_param, n_class, out_channels, hidden,
                         kernel_size, n_layers)
    cfg = dict(out_channels=out_channels, hidden=hidden,
               kernel_size=kernel_size, dilation_rate=dilation_rate,
               n_layers=n_layers)

    # B=2 -> one example per program (grid=2: both v7x cores busy);
    # B=4 -> two examples lane-concatenated per program (grid stays 2).
    for B in (2, 4):
        kb = jax.random.fold_in(k_idx, B)
        kz = jax.random.fold_in(k_z, B)
        x_idx = jax.random.randint(kb, (B,), 0, n_class, dtype=jnp.int32)
        z = jax.random.normal(kz, (B, hidden), jnp.float32)  # deterministic "noise"

        stats = prior_encoder_forward(x_idx, z, params, **cfg)
        stats = jax.block_until_ready(stats)
        assert stats.shape == (B, 2 * out_channels, T_FIXED)

        ref = ref_forward(x_idx, z, params, **cfg)
        # bf16 matmul operands (f32 accumulation) vs f32 HIGHEST reference
        np.testing.assert_allclose(np.asarray(stats), np.asarray(ref),
                                   atol=2e-2, rtol=2e-2)

    print("KERNEL_OK")
</pallas_src>

<mosaic_0001>
module attributes {stable_mosaic.version = 11 : i64} {
  func.func @prior_encoder_kernel(%arg0: i32, %arg1: memref<1x32x384xf32, #tpu.memory_space<vmem>>, %arg2: memref<4x64x256xbf16, #tpu.memory_space<vmem>>, %arg3: memref<4x64x1xf32, #tpu.memory_space<vmem>>, %arg4: memref<4x64x32xbf16, #tpu.memory_space<vmem>>, %arg5: memref<4x64x1xf32, #tpu.memory_space<vmem>>, %arg6: memref<8x32xbf16, #tpu.memory_space<vmem>>, %arg7: memref<8x1xf32, #tpu.memory_space<vmem>>, %arg8: memref<1x8x384xf32, #tpu.memory_space<vmem>>, %arg9: memref<32x640xbf16, #tpu.memory_space<vmem>>, %arg10: memref<256x384xbf16, #tpu.memory_space<vmem>>, %arg11: memref<32x384xf32, #tpu.memory_space<vmem>>) attributes {dimension_semantics = [#tpu.dimension_semantics<parallel>], iteration_bounds = array<i64: 2>, scalar_prefetch = 0 : i64, scratch_operands = 3 : i64, tpu.core_type = #tpu.core_type<tc>, window_params = [{transform_indices = @transform_0, window_bounds = array<i64: 1, 32, 384>}, {pipeline_mode = #tpu.pipeline_mode<synchronous>, transform_indices = @transform_1, window_bounds = array<i64: 4, 64, 256>}, {pipeline_mode = #tpu.pipeline_mode<synchronous>, transform_indices = @transform_2, window_bounds = array<i64: 4, 64, 1>}, {pipeline_mode = #tpu.pipeline_mode<synchronous>, transform_indices = @transform_3, window_bounds = array<i64: 4, 64, 32>}, {pipeline_mode = #tpu.pipeline_mode<synchronous>, transform_indices = @transform_4, window_bounds = array<i64: 4, 64, 1>}, {pipeline_mode = #tpu.pipeline_mode<synchronous>, transform_indices = @transform_5, window_bounds = array<i64: 8, 32>}, {pipeline_mode = #tpu.pipeline_mode<synchronous>, transform_indices = @transform_6, window_bounds = array<i64: 8, 1>}, {transform_indices = @transform_7, window_bounds = array<i64: 1, 8, 384>}]} {
    %cst = arith.constant 0.000000e+00 : bf16
    %0 = vector.broadcast %cst : bf16 to vector<32x128xbf16>
    %c0 = arith.constant 0 : index
    %c0_0 = arith.constant 0 : index
    %1 = vector.load %arg9[%c0, %c0_0] : memref<32x640xbf16, #tpu.memory_space<vmem>>, vector<32x128xbf16>
    tpu.vector_store %arg9[%c0, %c0_0], %0 {strides = array<i32>} : memref<32x640xbf16, #tpu.memory_space<vmem>>, vector<32x128xbf16>,
    %cst_1 = arith.constant 0.000000e+00 : bf16
    %2 = vector.broadcast %cst_1 : bf16 to vector<32x128xbf16>
    %c0_2 = arith.constant 0 : index
    %c512 = arith.constant 512 : index
    %3 = vector.load %arg9[%c0_2, %c512] : memref<32x640xbf16, #tpu.memory_space<vmem>>, vector<32x128xbf16>
    tpu.vector_store %arg9[%c0_2, %c512], %2 {strides = array<i32>} : memref<32x640xbf16, #tpu.memory_space<vmem>>, vector<32x128xbf16>,
    %cst_3 = arith.constant 0.000000e+00 : bf16
    %4 = vector.broadcast %cst_3 : bf16 to vector<96x384xbf16>
    %c160 = arith.constant 160 : index
    %c0_4 = arith.constant 0 : index
    %5 = vector.load %arg10[%c160, %c0_4] : memref<256x384xbf16, #tpu.memory_space<vmem>>, vector<96x384xbf16>
    tpu.vector_store %arg10[%c160, %c0_4], %4 {strides = array<i32>} : memref<256x384xbf16, #tpu.memory_space<vmem>>, vector<96x384xbf16>,
    %cst_5 = arith.constant 0.000000e+00 : f32
    %6 = vector.broadcast %cst_5 : f32 to vector<32x384xf32>
    %c0_6 = arith.constant 0 : index
    %c0_7 = arith.constant 0 : index
    %7 = vector.load %arg11[%c0_6, %c0_7] : memref<32x384xf32, #tpu.memory_space<vmem>>, vector<32x384xf32>
    tpu.vector_store %arg11[%c0_6, %c0_7], %6 {strides = array<i32>} : memref<32x384xf32, #tpu.memory_space<vmem>>, vector<32x384xf32>,
    %8 = tpu.iota {dimensions = array<i32: 1>} : vector<1x384xi32>
    %c0_i32 = arith.constant 0 : i32
    %9 = vector.broadcast %c0_i32 : i32 to vector<1x384xi32>
    %10 = arith.cmpi sge, %8, %9 : vector<1x384xi32>
    %c344_i32 = arith.constant 344 : i32
    %11 = vector.broadcast %c344_i32 : i32 to vector<1x384xi32>
    %12 = arith.cmpi slt, %8, %11 : vector<1x384xi32>
    %13 = arith.andi %10, %12 : vector<1x384xi1>
    %14 = vector.shape_cast %13 : vector<1x384xi1> to vector<1x384xi1>
    %15 = vector.broadcast %14 : vector<1x384xi1> to vector<32x384xi1>
    %c0_8 = arith.constant 0 : index
    %c0_9 = arith.constant 0 : index
    %c0_10 = arith.constant 0 : index
    %16 = vector.load %arg1[%c0_8, %c0_9, %c0_10] : memref<1x32x384xf32, #tpu.memory_space<vmem>>, vector<1x32x384xf32>
    %17 = vector.shape_cast %16 : vector<1x32x384xf32> to vector<32x384xf32>
    %cst_11 = arith.constant 0.000000e+00 : f32
    %18 = vector.broadcast %cst_11 : f32 to vector<32x384xf32>
    %19 = arith.select %15, %17, %18 : vector<32x384xi1>, vector<32x384xf32>
    %20 = arith.truncf %19 : vector<32x384xf32> to vector<32x384xbf16>
    %c0_12 = arith.constant 0 : index
    %c128 = arith.constant 128 : index
    %21 = vector.load %arg9[%c0_12, %c128] : memref<32x640xbf16, #tpu.memory_space<vmem>>, vector<32x384xbf16>
    tpu.vector_store %arg9[%c0_12, %c128], %20 {strides = array<i32>} : memref<32x640xbf16, #tpu.memory_space<vmem>>, vector<32x384xbf16>,
    %c0_13 = arith.constant 0 : index
    %c126 = arith.constant 126 : index
    %22 = vector.load %arg9[%c0_13, %c126] : memref<32x640xbf16, #tpu.memory_space<vmem>>, vector<32x384xbf16>
    %c0_14 = arith.constant 0 : index
    %c0_15 = arith.constant 0 : index
    %23 = vector.load %arg10[%c0_14, %c0_15] : memref<256x384xbf16, #tpu.memory_space<vmem>>, vector<32x384xbf16>
    tpu.vector_store %arg10[%c0_14, %c0_15], %22 {strides = array<i32>} : memref<256x384xbf16, #tpu.memory_space<vmem>>, vector<32x384xbf16>,
    %c0_16 = arith.constant 0 : index
    %c127 = arith.constant 127 : index
    %24 = vector.load %arg9[%c0_16, %c127] : memref<32x640xbf16, #tpu.memory_space<vmem>>, vector<32x384xbf16>
    %c32 = arith.constant 32 : index
    %c0_17 = arith.constant 0 : index
    %25 = vector.load %arg10[%c32, %c0_17] : memref<256x384xbf16, #tpu.memory_space<vmem>>, vector<32x384xbf16>
    tpu.vector_store %arg10[%c32, %c0_17], %24 {strides = array<i32>} : memref<256x384xbf16, #tpu.memory_space<vmem>>, vector<32x384xbf16>,
    %c0_18 = arith.constant 0 : index
    %c128_19 = arith.constant 128 : index
    %26 = vector.load %arg9[%c0_18, %c128_19] : memref<32x640xbf16, #tpu.memory_space<vmem>>, vector<32x384xbf16>
    %c64 = arith.constant 64 : index
    %c0_20 = arith.constant 0 : index
    %27 = vector.load %arg10[%c64, %c0_20] : memref<256x384xbf16, #tpu.memory_space<vmem>>, vector<32x384xbf16>
    tpu.vector_store %arg10[%c64, %c0_20], %26 {strides = array<i32>} : memref<256x384xbf16, #tpu.memory_space<vmem>>, vector<32x384xbf16>,
    %c0_21 = arith.constant 0 : index
    %c129 = arith.constant 129 : index
    %28 = vector.load %arg9[%c0_21, %c129] : memref<32x640xbf16, #tpu.memory_space<vmem>>, vector<32x384xbf16>
    %c96 = arith.constant 96 : index
    %c0_22 = arith.constant 0 : index
    %29 = vector.load %arg10[%c96, %c0_22] : memref<256x384xbf16, #tpu.memory_space<vmem>>, vector<32x384xbf16>
    tpu.vector_store %arg10[%c96, %c0_22], %28 {strides = array<i32>} : memref<256x384xbf16, #tpu.memory_space<vmem>>, vector<32x384xbf16>,
    %c0_23 = arith.constant 0 : index
    %c130 = arith.constant 130 : index
    %30 = vector.load %arg9[%c0_23, %c130] : memref<32x640xbf16, #tpu.memory_space<vmem>>, vector<32x384xbf16>
    %c128_24 = arith.constant 128 : index
    %c0_25 = arith.constant 0 : index
    %31 = vector.load %arg10[%c128_24, %c0_25] : memref<256x384xbf16, #tpu.memory_space<vmem>>, vector<32x384xbf16>
    tpu.vector_store %arg10[%c128_24, %c0_25], %30 {strides = array<i32>} : memref<256x384xbf16, #tpu.memory_space<vmem>>, vector<32x384xbf16>,
    %c0_26 = arith.constant 0 : index
    %c0_27 = arith.constant 0 : index
    %c0_28 = arith.constant 0 : index
    %32 = vector.load %arg2[%c0_26, %c0_27, %c0_28] : memref<4x64x256xbf16, #tpu.memory_space<vmem>>, vector<1x64x256xbf16>
    %33 = vector.shape_cast %32 : vector<1x64x256xbf16> to vector<64x256xbf16>
    %c0_29 = arith.constant 0 : index
    %c0_30 = arith.constant 0 : index
    %34 = vector.load %arg10[%c0_29, %c0_30] : memref<256x384xbf16, #tpu.memory_space<vmem>>, vector<256x384xbf16>
    %cst_31 = arith.constant dense<0.000000e+00> : vector<64x384xf32>
    %35 = tpu.matmul %33, %34, %cst_31 {dimension_numbers = #tpu.dot_dimension_numbers<[1], [0], [0], [1], [0, 0, 1, 1], [], []>} : vector<64x256xbf16>, vector<256x384xbf16>, vector<64x384xf32> -> vector<64x384xf32>
    %c0_32 = arith.constant 0 : index
    %c0_33 = arith.constant 0 : index
    %c0_34 = arith.constant 0 : index
    %36 = vector.load %arg3[%c0_32, %c0_33, %c0_34] : memref<4x64x1xf32, #tpu.memory_space<vmem>>, vector<1x64x1xf32>
    %37 = vector.shape_cast %36 : vector<1x64x1xf32> to vector<64x1xf32>
    %38 = vector.broadcast %37 : vector<64x1xf32> to vector<64x384xf32>
    %39 = arith.addf %35, %38 : vector<64x384xf32>
    %40 = vector.extract_strided_slice %39 {offsets = [0, 0], sizes = [32, 384], strides = [1, 1]} : vector<64x384xf32> to vector<32x384xf32>
    %41 = math.tanh %40 : vector<32x384xf32>
    %42 = vector.extract_strided_slice %39 {offsets = [32, 0], sizes = [32, 384], strides = [1, 1]} : vector<64x384xf32> to vector<32x384xf32>
    %cst_35 = arith.constant 5.000000e-01 : f32
    %43 = vector.broadcast %cst_35 : f32 to vector<32x384xf32>
    %44 = arith.mulf %43, %42 : vector<32x384xf32>
    %45 = math.tanh %44 : vector<32x384xf32>
    %cst_36 = arith.constant 5.000000e-01 : f32
    %46 = vector.broadcast %cst_36 : f32 to vector<32x384xf32>
    %47 = arith.mulf %46, %45 : vector<32x384xf32>
    %cst_37 = arith.constant 5.000000e-01 : f32
    %48 = vector.broadcast %cst_37 : f32 to vector<32x384xf32>
    %49 = arith.addf %47, %48 : vector<32x384xf32>
    %50 = arith.mulf %41, %49 : vector<32x384xf32>
    %51 = arith.truncf %50 : vector<32x384xf32> to vector<32x384xbf16>
    %c0_38 = arith.constant 0 : index
    %c0_39 = arith.constant 0 : index
    %c0_40 = arith.constant 0 : index
    %52 = vector.load %arg4[%c0_38, %c0_39, %c0_40] : memref<4x64x32xbf16, #tpu.memory_space<vmem>>, vector<1x64x32xbf16>
    %53 = vector.shape_cast %52 : vector<1x64x32xbf16> to vector<64x32xbf16>
    %cst_41 = arith.constant dense<0.000000e+00> : vector<64x384xf32>
    %54 = tpu.matmul %53, %51, %cst_41 {dimension_numbers = #tpu.dot_dimension_numbers<[1], [0], [0], [1], [0, 0, 1, 1], [], []>} : vector<64x32xbf16>, vector<32x384xbf16>, vector<64x384xf32> -> vector<64x384xf32>
    %c0_42 = arith.constant 0 : index
    %c0_43 = arith.constant 0 : index
    %c0_44 = arith.constant 0 : index
    %55 = vector.load %arg5[%c0_42, %c0_43, %c0_44] : memref<4x64x1xf32, #tpu.memory_space<vmem>>, vector<1x64x1xf32>
    %56 = vector.shape_cast %55 : vector<1x64x1xf32> to vector<64x1xf32>
    %57 = vector.broadcast %56 : vector<64x1xf32> to vector<64x384xf32>
    %58 = arith.addf %54, %57 : vector<64x384xf32>
    %59 = vector.extract_strided_slice %58 {offsets = [0, 0], sizes = [32, 384], strides = [1, 1]} : vector<64x384xf32> to vector<32x384xf32>
    %60 = arith.addf %17, %59 : vector<32x384xf32>
    %c0_45 = arith.constant 0 : index
    %c0_46 = arith.constant 0 : index
    %61 = vector.load %arg11[%c0_45, %c0_46] : memref<32x384xf32, #tpu.memory_space<vmem>>, vector<32x384xf32>
    %62 = vector.extract_strided_slice %58 {offsets = [32, 0], sizes = [32, 384], strides = [1, 1]} : vector<64x384xf32> to vector<32x384xf32>
    %63 = arith.addf %61, %62 : vector<32x384xf32>
    %c0_47 = arith.constant 0 : index
    %c0_48 = arith.constant 0 : index
    %64 = vector.load %arg11[%c0_47, %c0_48] : memref<32x384xf32, #tpu.memory_space<vmem>>, vector<32x384xf32>
    tpu.vector_store %arg11[%c0_47, %c0_48], %63 {strides = array<i32>} : memref<32x384xf32, #tpu.memory_space<vmem>>, vector<32x384xf32>,
    %cst_49 = arith.constant 0.000000e+00 : f32
    %65 = vector.broadcast %cst_49 : f32 to vector<32x384xf32>
    %66 = arith.select %15, %60, %65 : vector<32x384xi1>, vector<32x384xf32>
    %67 = arith.truncf %66 : vector<32x384xf32> to vector<32x384xbf16>
    %c0_50 = arith.constant 0 : index
    %c128_51 = arith.constant 128 : index
    %68 = vector.load %arg9[%c0_50, %c128_51] : memref<32x640xbf16, #tpu.memory_space<vmem>>, vector<32x384xbf16>
    tpu.vector_store %arg9[%c0_50, %c128_51], %67 {strides = array<i32>} : memref<32x640xbf16, #tpu.memory_space<vmem>>, vector<32x384xbf16>,
    %c0_52 = arith.constant 0 : index
    %c124 = arith.constant 124 : index
    %69 = vector.load %arg9[%c0_52, %c124] : memref<32x640xbf16, #tpu.memory_space<vmem>>, vector<32x384xbf16>
    %c0_53 = arith.constant 0 : index
    %c0_54 = arith.constant 0 : index
    %70 = vector.load %arg10[%c0_53, %c0_54] : memref<256x384xbf16, #tpu.memory_space<vmem>>, vector<32x384xbf16>
    tpu.vector_store %arg10[%c0_53, %c0_54], %69 {strides = array<i32>} : memref<256x384xbf16, #tpu.memory_space<vmem>>, vector<32x384xbf16>,
    %c0_55 = arith.constant 0 : index
    %c126_56 = arith.constant 126 : index
    %71 = vector.load %arg9[%c0_55, %c126_56] : memref<32x640xbf16, #tpu.memory_space<vmem>>, vector<32x384xbf16>
    %c32_57 = arith.constant 32 : index
    %c0_58 = arith.constant 0 : index
    %72 = vector.load %arg10[%c32_57, %c0_58] : memref<256x384xbf16, #tpu.memory_space<vmem>>, vector<32x384xbf16>
    tpu.vector_store %arg10[%c32_57, %c0_58], %71 {strides = array<i32>} : memref<256x384xbf16, #tpu.memory_space<vmem>>, vector<32x384xbf16>,
    %c0_59 = arith.constant 0 : index
    %c128_60 = arith.constant 128 : index
    %73 = vector.load %arg9[%c0_59, %c128_60] : memref<32x640xbf16, #tpu.memory_space<vmem>>, vector<32x384xbf16>
    %c64_61 = arith.constant 64 : index
    %c0_62 = arith.constant 0 : index
    %74 = vector.load %arg10[%c64_61, %c0_62] : memref<256x384xbf16, #tpu.memory_space<vmem>>, vector<32x384xbf16>
    tpu.vector_store %arg10[%c64_61, %c0_62], %73 {strides = array<i32>} : memref<256x384xbf16, #tpu.memory_space<vmem>>, vector<32x384xbf16>,
    %c0_63 = arith.constant 0 : index
    %c130_64 = arith.constant 130 : index
    %75 = vector.load %arg9[%c0_63, %c130_64] : memref<32x640xbf16, #tpu.memory_space<vmem>>, vector<32x384xbf16>
    %c96_65 = arith.constant 96 : index
    %c0_66 = arith.constant 0 : index
    %76 = vector.load %arg10[%c96_65, %c0_66] : memref<256x384xbf16, #tpu.memory_space<vmem>>, vector<32x384xbf16>
    tpu.vector_store %arg10[%c96_65, %c0_66], %75 {strides = array<i32>} : memref<256x384xbf16, #tpu.memory_space<vmem>>, vector<32x384xbf16>,
    %c0_67 = arith.constant 0 : index
    %c132 = arith.constant 132 : index
    %77 = vector.load %arg9[%c0_67, %c132] : memref<32x640xbf16, #tpu.memory_space<vmem>>, vector<32x384xbf16>
    %c128_68 = arith.constant 128 : index
    %c0_69 = arith.constant 0 : index
    %78 = vector.load %arg10[%c128_68, %c0_69] : memref<256x384xbf16, #tpu.memory_space<vmem>>, vector<32x384xbf16>
    tpu.vector_store %arg10[%c128_68, %c0_69], %77 {strides = array<i32>} : memref<256x384xbf16, #tpu.memory_space<vmem>>, vector<32x384xbf16>,
    %c1 = arith.constant 1 : index
    %c0_70 = arith.constant 0 : index
    %c0_71 = arith.constant 0 : index
    %79 = vector.load %arg2[%c1, %c0_70, %c0_71] : memref<4x64x256xbf16, #tpu.memory_space<vmem>>, vector<1x64x256xbf16>
    %80 = vector.shape_cast %79 : vector<1x64x256xbf16> to vector<64x256xbf16>
    %c0_72 = arith.constant 0 : index
    %c0_73 = arith.constant 0 : index
    %81 = vector.load %arg10[%c0_72, %c0_73] : memref<256x384xbf16, #tpu.memory_space<vmem>>, vector<256x384xbf16>
    %cst_74 = arith.constant dense<0.000000e+00> : vector<64x384xf32>
    %82 = tpu.matmul %80, %81, %cst_74 {dimension_numbers = #tpu.dot_dimension_numbers<[1], [0], [0], [1], [0, 0, 1, 1], [], []>} : vector<64x256xbf16>, vector<256x384xbf16>, vector<64x384xf32> -> vector<64x384xf32>
    %c1_75 = arith.constant 1 : index
    %c0_76 = arith.constant 0 : index
    %c0_77 = arith.constant 0 : index
    %83 = vector.load %arg3[%c1_75, %c0_76, %c0_77] : memref<4x64x1xf32, #tpu.memory_space<vmem>>, vector<1x64x1xf32>
    %84 = vector.shape_cast %83 : vector<1x64x1xf32> to vector<64x1xf32>
    %85 = vector.broadcast %84 : vector<64x1xf32> to vector<64x384xf32>
    %86 = arith.addf %82, %85 : vector<64x384xf32>
    %87 = vector.extract_strided_slice %86 {offsets = [0, 0], sizes = [32, 384], strides = [1, 1]} : vector<64x384xf32> to vector<32x384xf32>
    %88 = math.tanh %87 : vector<32x384xf32>
    %89 = vector.extract_strided_slice %86 {offsets = [32, 0], sizes = [32, 384], strides = [1, 1]} : vector<64x384xf32> to vector<32x384xf32>
    %cst_78 = arith.constant 5.000000e-01 : f32
    %90 = vector.broadcast %cst_78 : f32 to vector<32x384xf32>
    %91 = arith.mulf %90, %89 : vector<32x384xf32>
    %92 = math.tanh %91 : vector<32x384xf32>
    %cst_79 = arith.constant 5.000000e-01 : f32
    %93 = vector.broadcast %cst_79 : f32 to vector<32x384xf32>
    %94 = arith.mulf %93, %92 : vector<32x384xf32>
    %cst_80 = arith.constant 5.000000e-01 : f32
    %95 = vector.broadcast %cst_80 : f32 to vector<32x384xf32>
    %96 = arith.addf %94, %95 : vector<32x384xf32>
    %97 = arith.mulf %88, %96 : vector<32x384xf32>
    %98 = arith.truncf %97 : vector<32x384xf32> to vector<32x384xbf16>
    %c1_81 = arith.constant 1 : index
    %c0_82 = arith.constant 0 : index
    %c0_83 = arith.constant 0 : index
    %99 = vector.load %arg4[%c1_81, %c0_82, %c0_83] : memref<4x64x32xbf16, #tpu.memory_space<vmem>>, vector<1x64x32xbf16>
    %100 = vector.shape_cast %99 : vector<1x64x32xbf16> to vector<64x32xbf16>
    %cst_84 = arith.constant dense<0.000000e+00> : vector<64x384xf32>
    %101 = tpu.matmul %100, %98, %cst_84 {dimension_numbers = #tpu.dot_dimension_numbers<[1], [0], [0], [1], [0, 0, 1, 1], [], []>} : vector<64x32xbf16>, vector<32x384xbf16>, vector<64x384xf32> -> vector<64x384xf32>
    %c1_85 = arith.constant 1 : index
    %c0_86 = arith.constant 0 : index
    %c0_87 = arith.constant 0 : index
    %102 = vector.load %arg5[%c1_85, %c0_86, %c0_87] : memref<4x64x1xf32, #tpu.memory_space<vmem>>, vector<1x64x1xf32>
    %103 = vector.shape_cast %102 : vector<1x64x1xf32> to vector<64x1xf32>
    %104 = vector.broadcast %103 : vector<64x1xf32> to vector<64x384xf32>
    %105 = arith.addf %101, %104 : vector<64x384xf32>
    %106 = vector.extract_strided_slice %105 {offsets = [0, 0], sizes = [32, 384], strides = [1, 1]} : vector<64x384xf32> to vector<32x384xf32>
    %107 = arith.addf %60, %106 : vector<32x384xf32>
    %c0_88 = arith.constant 0 : index
    %c0_89 = arith.constant 0 : index
    %108 = vector.load %arg11[%c0_88, %c0_89] : memref<32x384xf32, #tpu.memory_space<vmem>>, vector<32x384xf32>
    %109 = vector.extract_strided_slice %105 {offsets = [32, 0], sizes = [32, 384], strides = [1, 1]} : vector<64x384xf32> to vector<32x384xf32>
    %110 = arith.addf %108, %109 : vector<32x384xf32>
    %c0_90 = arith.constant 0 : index
    %c0_91 = arith.constant 0 : index
    %111 = vector.load %arg11[%c0_90, %c0_91] : memref<32x384xf32, #tpu.memory_space<vmem>>, vector<32x384xf32>
    tpu.vector_store %arg11[%c0_90, %c0_91], %110 {strides = array<i32>} : memref<32x384xf32, #tpu.memory_space<vmem>>, vector<32x384xf32>,
    %cst_92 = arith.constant 0.000000e+00 : f32
    %112 = vector.broadcast %cst_92 : f32 to vector<32x384xf32>
    %113 = arith.select %15, %107, %112 : vector<32x384xi1>, vector<32x384xf32>
    %114 = arith.truncf %113 : vector<32x384xf32> to vector<32x384xbf16>
    %c0_93 = arith.constant 0 : index
    %c128_94 = arith.constant 128 : index
    %115 = vector.load %arg9[%c0_93, %c128_94] : memref<32x640xbf16, #tpu.memory_space<vmem>>, vector<32x384xbf16>
    tpu.vector_store %arg9[%c0_93, %c128_94], %114 {strides = array<i32>} : memref<32x640xbf16, #tpu.memory_space<vmem>>, vector<32x384xbf16>,
    %c0_95 = arith.constant 0 : index
    %c120 = arith.constant 120 : index
    %116 = vector.load %arg9[%c0_95, %c120] : memref<32x640xbf16, #tpu.memory_space<vmem>>, vector<32x384xbf16>
    %c0_96 = arith.constant 0 : index
    %c0_97 = arith.constant 0 : index
    %117 = vector.load %arg10[%c0_96, %c0_97] : memref<256x384xbf16, #tpu.memory_space<vmem>>, vector<32x384xbf16>
    tpu.vector_store %arg10[%c0_96, %c0_97], %116 {strides = array<i32>} : memref<256x384xbf16, #tpu.memory_space<vmem>>, vector<32x384xbf16>,
    %c0_98 = arith.constant 0 : index
    %c124_99 = arith.constant 124 : index
    %118 = vector.load %arg9[%c0_98, %c124_99] : memref<32x640xbf16, #tpu.memory_space<vmem>>, vector<32x384xbf16>
    %c32_100 = arith.constant 32 : index
    %c0_101 = arith.constant 0 : index
    %119 = vector.load %arg10[%c32_100, %c0_101] : memref<256x384xbf16, #tpu.memory_space<vmem>>, vector<32x384xbf16>
    tpu.vector_store %arg10[%c32_100, %c0_101], %118 {strides = array<i32>} : memref<256x384xbf16, #tpu.memory_space<vmem>>, vector<32x384xbf16>,
    %c0_102 = arith.constant 0 : index
    %c128_103 = arith.constant 128 : index
    %120 = vector.load %arg9[%c0_102, %c128_103] : memref<32x640xbf16, #tpu.memory_space<vmem>>, vector<32x384xbf16>
    %c64_104 = arith.constant 64 : index
    %c0_105 = arith.constant 0 : index
    %121 = vector.load %arg10[%c64_104, %c0_105] : memref<256x384xbf16, #tpu.memory_space<vmem>>, vector<32x384xbf16>
    tpu.vector_store %arg10[%c64_104, %c0_105], %120 {strides = array<i32>} : memref<256x384xbf16, #tpu.memory_space<vmem>>, vector<32x384xbf16>,
    %c0_106 = arith.constant 0 : index
    %c132_107 = arith.constant 132 : index
    %122 = vector.load %arg9[%c0_106, %c132_107] : memref<32x640xbf16, #tpu.memory_space<vmem>>, vector<32x384xbf16>
    %c96_108 = arith.constant 96 : index
    %c0_109 = arith.constant 0 : index
    %123 = vector.load %arg10[%c96_108, %c0_109] : memref<256x384xbf16, #tpu.memory_space<vmem>>, vector<32x384xbf16>
    tpu.vector_store %arg10[%c96_108, %c0_109], %122 {strides = array<i32>} : memref<256x384xbf16, #tpu.memory_space<vmem>>, vector<32x384xbf16>,
    %c0_110 = arith.constant 0 : index
    %c136 = arith.constant 136 : index
    %124 = vector.load %arg9[%c0_110, %c136] : memref<32x640xbf16, #tpu.memory_space<vmem>>, vector<32x384xbf16>
    %c128_111 = arith.constant 128 : index
    %c0_112 = arith.constant 0 : index
    %125 = vector.load %arg10[%c128_111, %c0_112] : memref<256x384xbf16, #tpu.memory_space<vmem>>, vector<32x384xbf16>
    tpu.vector_store %arg10[%c128_111, %c0_112], %124 {strides = array<i32>} : memref<256x384xbf16, #tpu.memory_space<vmem>>, vector<32x384xbf16>,
    %c2 = arith.constant 2 : index
    %c0_113 = arith.constant 0 : index
    %c0_114 = arith.constant 0 : index
    %126 = vector.load %arg2[%c2, %c0_113, %c0_114] : memref<4x64x256xbf16, #tpu.memory_space<vmem>>, vector<1x64x256xbf16>
    %127 = vector.shape_cast %126 : vector<1x64x256xbf16> to vector<64x256xbf16>
    %c0_115 = arith.constant 0 : index
    %c0_116 = arith.constant 0 : index
    %128 = vector.load %arg10[%c0_115, %c0_116] : memref<256x384xbf16, #tpu.memory_space<vmem>>, vector<256x384xbf16>
    %cst_117 = arith.constant dense<0.000000e+00> : vector<64x384xf32>
    %129 = tpu.matmul %127, %128, %cst_117 {dimension_numbers = #tpu.dot_dimension_numbers<[1], [0], [0], [1], [0, 0, 1, 1], [], []>} : vector<64x256xbf16>, vector<256x384xbf16>, vector<64x384xf32> -> vector<64x384xf32>
    %c2_118 = arith.constant 2 : index
    %c0_119 = arith.constant 0 : index
    %c0_120 = arith.constant 0 : index
    %130 = vector.load %arg3[%c2_118, %c0_119, %c0_120] : memref<4x64x1xf32, #tpu.memory_space<vmem>>, vector<1x64x1xf32>
    %131 = vector.shape_cast %130 : vector<1x64x1xf32> to vector<64x1xf32>
    %132 = vector.broadcast %131 : vector<64x1xf32> to vector<64x384xf32>
    %133 = arith.addf %129, %132 : vector<64x384xf32>
    %134 = vector.extract_strided_slice %133 {offsets = [0, 0], sizes = [32, 384], strides = [1, 1]} : vector<64x384xf32> to vector<32x384xf32>
    %135 = math.tanh %134 : vector<32x384xf32>
    %136 = vector.extract_strided_slice %133 {offsets = [32, 0], sizes = [32, 384], strides = [1, 1]} : vector<64x384xf32> to vector<32x384xf32>
    %cst_121 = arith.constant 5.000000e-01 : f32
    %137 = vector.broadcast %cst_121 : f32 to vector<32x384xf32>
    %138 = arith.mulf %137, %136 : vector<32x384xf32>
    %139 = math.tanh %138 : vector<32x384xf32>
    %cst_122 = arith.constant 5.000000e-01 : f32
    %140 = vector.broadcast %cst_122 : f32 to vector<32x384xf32>
    %141 = arith.mulf %140, %139 : vector<32x384xf32>
    %cst_123 = arith.constant 5.000000e-01 : f32
    %142 = vector.broadcast %cst_123 : f32 to vector<32x384xf32>
    %143 = arith.addf %141, %142 : vector<32x384xf32>
    %144 = arith.mulf %135, %143 : vector<32x384xf32>
    %145 = arith.truncf %144 : vector<32x384xf32> to vector<32x384xbf16>
    %c2_124 = arith.constant 2 : index
    %c0_125 = arith.constant 0 : index
    %c0_126 = arith.constant 0 : index
    %146 = vector.load %arg4[%c2_124, %c0_125, %c0_126] : memref<4x64x32xbf16, #tpu.memory_space<vmem>>, vector<1x64x32xbf16>
    %147 = vector.shape_cast %146 : vector<1x64x32xbf16> to vector<64x32xbf16>
    %cst_127 = arith.constant dense<0.000000e+00> : vector<64x384xf32>
    %148 = tpu.matmul %147, %145, %cst_127 {dimension_numbers = #tpu.dot_dimension_numbers<[1], [0], [0], [1], [0, 0, 1, 1], [], []>} : vector<64x32xbf16>, vector<32x384xbf16>, vector<64x384xf32> -> vector<64x384xf32>
    %c2_128 = arith.constant 2 : index
    %c0_129 = arith.constant 0 : index
    %c0_130 = arith.constant 0 : index
    %149 = vector.load %arg5[%c2_128, %c0_129, %c0_130] : memref<4x64x1xf32, #tpu.memory_space<vmem>>, vector<1x64x1xf32>
    %150 = vector.shape_cast %149 : vector<1x64x1xf32> to vector<64x1xf32>
    %151 = vector.broadcast %150 : vector<64x1xf32> to vector<64x384xf32>
    %152 = arith.addf %148, %151 : vector<64x384xf32>
    %153 = vector.extract_strided_slice %152 {offsets = [0, 0], sizes = [32, 384], strides = [1, 1]} : vector<64x384xf32> to vector<32x384xf32>
    %154 = arith.addf %107, %153 : vector<32x384xf32>
    %c0_131 = arith.constant 0 : index
    %c0_132 = arith.constant 0 : index
    %155 = vector.load %arg11[%c0_131, %c0_132] : memref<32x384xf32, #tpu.memory_space<vmem>>, vector<32x384xf32>
    %156 = vector.extract_strided_slice %152 {offsets = [32, 0], sizes = [32, 384], strides = [1, 1]} : vector<64x384xf32> to vector<32x384xf32>
    %157 = arith.addf %155, %156 : vector<32x384xf32>
    %c0_133 = arith.constant 0 : index
    %c0_134 = arith.constant 0 : index
    %158 = vector.load %arg11[%c0_133, %c0_134] : memref<32x384xf32, #tpu.memory_space<vmem>>, vector<32x384xf32>
    tpu.vector_store %arg11[%c0_133, %c0_134], %157 {strides = array<i32>} : memref<32x384xf32, #tpu.memory_space<vmem>>, vector<32x384xf32>,
    %cst_135 = arith.constant 0.000000e+00 : f32
    %159 = vector.broadcast %cst_135 : f32 to vector<32x384xf32>
    %160 = arith.select %15, %154, %159 : vector<32x384xi1>, vector<32x384xf32>
    %161 = arith.truncf %160 : vector<32x384xf32> to vector<32x384xbf16>
    %c0_136 = arith.constant 0 : index
    %c128_137 = arith.constant 128 : index
    %162 = vector.load %arg9[%c0_136, %c128_137] : memref<32x640xbf16, #tpu.memory_space<vmem>>, vector<32x384xbf16>
    tpu.vector_store %arg9[%c0_136, %c128_137], %161 {strides = array<i32>} : memref<32x640xbf16, #tpu.memory_space<vmem>>, vector<32x384xbf16>,
    %c0_138 = arith.constant 0 : index
    %c112 = arith.constant 112 : index
    %163 = vector.load %arg9[%c0_138, %c112] : memref<32x640xbf16, #tpu.memory_space<vmem>>, vector<32x384xbf16>
    %c0_139 = arith.constant 0 : index
    %c0_140 = arith.constant 0 : index
    %164 = vector.load %arg10[%c0_139, %c0_140] : memref<256x384xbf16, #tpu.memory_space<vmem>>, vector<32x384xbf16>
    tpu.vector_store %arg10[%c0_139, %c0_140], %163 {strides = array<i32>} : memref<256x384xbf16, #tpu.memory_space<vmem>>, vector<32x384xbf16>,
    %c0_141 = arith.constant 0 : index
    %c120_142 = arith.constant 120 : index
    %165 = vector.load %arg9[%c0_141, %c120_142] : memref<32x640xbf16, #tpu.memory_space<vmem>>, vector<32x384xbf16>
    %c32_143 = arith.constant 32 : index
    %c0_144 = arith.constant 0 : index
    %166 = vector.load %arg10[%c32_143, %c0_144] : memref<256x384xbf16, #tpu.memory_space<vmem>>, vector<32x384xbf16>
    tpu.vector_store %arg10[%c32_143, %c0_144], %165 {strides = array<i32>} : memref<256x384xbf16, #tpu.memory_space<vmem>>, vector<32x384xbf16>,
    %c0_145 = arith.constant 0 : index
    %c128_146 = arith.constant 128 : index
    %167 = vector.load %arg9[%c0_145, %c128_146] : memref<32x640xbf16, #tpu.memory_space<vmem>>, vector<32x384xbf16>
    %c64_147 = arith.constant 64 : index
    %c0_148 = arith.constant 0 : index
    %168 = vector.load %arg10[%c64_147, %c0_148] : memref<256x384xbf16, #tpu.memory_space<vmem>>, vector<32x384xbf16>
    tpu.vector_store %arg10[%c64_147, %c0_148], %167 {strides = array<i32>} : memref<256x384xbf16, #tpu.memory_space<vmem>>, vector<32x384xbf16>,
    %c0_149 = arith.constant 0 : index
    %c136_150 = arith.constant 136 : index
    %169 = vector.load %arg9[%c0_149, %c136_150] : memref<32x640xbf16, #tpu.memory_space<vmem>>, vector<32x384xbf16>
    %c96_151 = arith.constant 96 : index
    %c0_152 = arith.constant 0 : index
    %170 = vector.load %arg10[%c96_151, %c0_152] : memref<256x384xbf16, #tpu.memory_space<vmem>>, vector<32x384xbf16>
    tpu.vector_store %arg10[%c96_151, %c0_152], %169 {strides = array<i32>} : memref<256x384xbf16, #tpu.memory_space<vmem>>, vector<32x384xbf16>,
    %c0_153 = arith.constant 0 : index
    %c144 = arith.constant 144 : index
    %171 = vector.load %arg9[%c0_153, %c144] : memref<32x640xbf16, #tpu.memory_space<vmem>>, vector<32x384xbf16>
    %c128_154 = arith.constant 128 : index
    %c0_155 = arith.constant 0 : index
    %172 = vector.load %arg10[%c128_154, %c0_155] : memref<256x384xbf16, #tpu.memory_space<vmem>>, vector<32x384xbf16>
    tpu.vector_store %arg10[%c128_154, %c0_155], %171 {strides = array<i32>} : memref<256x384xbf16, #tpu.memory_space<vmem>>, vector<32x384xbf16>,
    %c3 = arith.constant 3 : index
    %c0_156 = arith.constant 0 : index
    %c0_157 = arith.constant 0 : index
    %173 = vector.load %arg2[%c3, %c0_156, %c0_157] : memref<4x64x256xbf16, #tpu.memory_space<vmem>>, vector<1x64x256xbf16>
    %174 = vector.shape_cast %173 : vector<1x64x256xbf16> to vector<64x256xbf16>
    %c0_158 = arith.constant 0 : index
    %c0_159 = arith.constant 0 : index
    %175 = vector.load %arg10[%c0_158, %c0_159] : memref<256x384xbf16, #tpu.memory_space<vmem>>, vector<256x384xbf16>
    %cst_160 = arith.constant dense<0.000000e+00> : vector<64x384xf32>
    %176 = tpu.matmul %174, %175, %cst_160 {dimension_numbers = #tpu.dot_dimension_numbers<[1], [0], [0], [1], [0, 0, 1, 1], [], []>} : vector<64x256xbf16>, vector<256x384xbf16>, vector<64x384xf32> -> vector<64x384xf32>
    %c3_161 = arith.constant 3 : index
    %c0_162 = arith.constant 0 : index
    %c0_163 = arith.constant 0 : index
    %177 = vector.load %arg3[%c3_161, %c0_162, %c0_163] : memref<4x64x1xf32, #tpu.memory_space<vmem>>, vector<1x64x1xf32>
    %178 = vector.shape_cast %177 : vector<1x64x1xf32> to vector<64x1xf32>
    %179 = vector.broadcast %178 : vector<64x1xf32> to vector<64x384xf32>
    %180 = arith.addf %176, %179 : vector<64x384xf32>
    %181 = vector.extract_strided_slice %180 {offsets = [0, 0], sizes = [32, 384], strides = [1, 1]} : vector<64x384xf32> to vector<32x384xf32>
    %182 = math.tanh %181 : vector<32x384xf32>
    %183 = vector.extract_strided_slice %180 {offsets = [32, 0], sizes = [32, 384], strides = [1, 1]} : vector<64x384xf32> to vector<32x384xf32>
    %cst_164 = arith.constant 5.000000e-01 : f32
    %184 = vector.broadcast %cst_164 : f32 to vector<32x384xf32>
    %185 = arith.mulf %184, %183 : vector<32x384xf32>
    %186 = math.tanh %185 : vector<32x384xf32>
    %cst_165 = arith.constant 5.000000e-01 : f32
    %187 = vector.broadcast %cst_165 : f32 to vector<32x384xf32>
    %188 = arith.mulf %187, %186 : vector<32x384xf32>
    %cst_166 = arith.constant 5.000000e-01 : f32
    %189 = vector.broadcast %cst_166 : f32 to vector<32x384xf32>
    %190 = arith.addf %188, %189 : vector<32x384xf32>
    %191 = arith.mulf %182, %190 : vector<32x384xf32>
    %192 = arith.truncf %191 : vector<32x384xf32> to vector<32x384xbf16>
    %c3_167 = arith.constant 3 : index
    %c0_168 = arith.constant 0 : index
    %c0_169 = arith.constant 0 : index
    %193 = vector.load %arg4[%c3_167, %c0_168, %c0_169] : memref<4x64x32xbf16, #tpu.memory_space<vmem>>, vector<1x32x32xbf16>
    %194 = vector.shape_cast %193 : vector<1x32x32xbf16> to vector<32x32xbf16>
    %cst_170 = arith.constant dense<0.000000e+00> : vector<32x384xf32>
    %195 = tpu.matmul %194, %192, %cst_170 {dimension_numbers = #tpu.dot_dimension_numbers<[1], [0], [0], [1], [0, 0, 1, 1], [], []>} : vector<32x32xbf16>, vector<32x384xbf16>, vector<32x384xf32> -> vector<32x384xf32>
    %c0_171 = arith.constant 0 : index
    %c0_172 = arith.constant 0 : index
    %196 = vector.load %arg11[%c0_171, %c0_172] : memref<32x384xf32, #tpu.memory_space<vmem>>, vector<32x384xf32>
    %c3_173 = arith.constant 3 : index
    %c0_174 = arith.constant 0 : index
    %c0_175 = arith.constant 0 : index
    %197 = vector.load %arg5[%c3_173, %c0_174, %c0_175] : memref<4x64x1xf32, #tpu.memory_space<vmem>>, vector<1x32x1xf32>
    %198 = vector.shape_cast %197 : vector<1x32x1xf32> to vector<32x1xf32>
    %199 = vector.broadcast %198 : vector<32x1xf32> to vector<32x384xf32>
    %200 = arith.addf %195, %199 : vector<32x384xf32>
    %201 = arith.addf %196, %200 : vector<32x384xf32>
    %c0_176 = arith.constant 0 : index
    %c0_177 = arith.constant 0 : index
    %202 = vector.load %arg11[%c0_176, %c0_177] : memref<32x384xf32, #tpu.memory_space<vmem>>, vector<32x384xf32>
    tpu.vector_store %arg11[%c0_176, %c0_177], %201 {strides = array<i32>} : memref<32x384xf32, #tpu.memory_space<vmem>>, vector<32x384xf32>,
    %c0_178 = arith.constant 0 : index
    %c0_179 = arith.constant 0 : index
    %203 = vector.load %arg6[%c0_178, %c0_179] : memref<8x32xbf16, #tpu.memory_space<vmem>>, vector<8x32xbf16>
    %c0_180 = arith.constant 0 : index
    %c0_181 = arith.constant 0 : index
    %204 = vector.load %arg11[%c0_180, %c0_181] : memref<32x384xf32, #tpu.memory_space<vmem>>, vector<32x384xf32>
    %205 = arith.truncf %204 : vector<32x384xf32> to vector<32x384xbf16>
    %cst_182 = arith.constant dense<0.000000e+00> : vector<8x384xf32>
    %206 = tpu.matmul %203, %205, %cst_182 {dimension_numbers = #tpu.dot_dimension_numbers<[1], [0], [0], [1], [0, 0, 1, 1], [], []>} : vector<8x32xbf16>, vector<32x384xbf16>, vector<8x384xf32> -> vector<8x384xf32>
    %c0_183 = arith.constant 0 : index
    %c0_184 = arith.constant 0 : index
    %207 = vector.load %arg7[%c0_183, %c0_184] : memref<8x1xf32, #tpu.memory_space<vmem>>, vector<8x1xf32>
    %208 = vector.broadcast %207 : vector<8x1xf32> to vector<8x384xf32>
    %209 = arith.addf %206, %208 : vector<8x384xf32>
    %c0_185 = arith.constant 0 : index
    %c0_186 = arith.constant 0 : index
    %c0_187 = arith.constant 0 : index
    %210 = vector.load %arg8[%c0_185, %c0_186, %c0_187] : memref<1x8x384xf32, #tpu.memory_space<vmem>>, vector<1x8x384xf32>
    %211 = vector.shape_cast %210 : vector<1x8x384xf32> to vector<8x384xf32>
    %212 = vector.shape_cast %209 : vector<8x384xf32> to vector<1x8x384xf32>
    tpu.vector_store %arg8[%c0_185, %c0_186, %c0_187], %212 {strides = array<i32>} : memref<1x8x384xf32, #tpu.memory_space<vmem>>, vector<1x8x384xf32>,
    return
  }
  func.func @transform_0(%arg0: i32) -> (i32, i32, i32) {
    %c0_i32 = arith.constant 0 : i32
    %c0_i32_0 = arith.constant 0 : i32
    %c0_i32_1 = arith.constant 0 : i32
    return %arg0, %c0_i32, %c0_i32_0 : i32, i32, i32
  }
  func.func @transform_1(%arg0: i32) -> (i32, i32, i32) {
    %c0_i32 = arith.constant 0 : i32
    %c0_i32_0 = arith.constant 0 : i32
    %c0_i32_1 = arith.constant 0 : i32
    %c0_i32_2 = arith.constant 0 : i32
    return %c0_i32, %c0_i32_0, %c0_i32_1 : i32, i32, i32
  }
  func.func @transform_2(%arg0: i32) -> (i32, i32, i32) {
    %c0_i32 = arith.constant 0 : i32
    %c0_i32_0 = arith.constant 0 : i32
    %c0_i32_1 = arith.constant 0 : i32
    %c0_i32_2 = arith.constant 0 : i32
    return %c0_i32, %c0_i32_0, %c0_i32_1 : i32, i32, i32
  }
  func.func @transform_3(%arg0: i32) -> (i32, i32, i32) {
    %c0_i32 = arith.constant 0 : i32
    %c0_i32_0 = arith.constant 0 : i32
    %c0_i32_1 = arith.constant 0 : i32
    %c0_i32_2 = arith.constant 0 : i32
    return %c0_i32, %c0_i32_0, %c0_i32_1 : i32, i32, i32
  }
  func.func @transform_4(%arg0: i32) -> (i32, i32, i32) {
    %c0_i32 = arith.constant 0 : i32
    %c0_i32_0 = arith.constant 0 : i32
    %c0_i32_1 = arith.constant 0 : i32
    %c0_i32_2 = arith.constant 0 : i32
    return %c0_i32, %c0_i32_0, %c0_i32_1 : i32, i32, i32
  }
  func.func @transform_5(%arg0: i32) -> (i32, i32) {
    %c0_i32 = arith.constant 0 : i32
    %c0_i32_0 = arith.constant 0 : i32
    %c0_i32_1 = arith.constant 0 : i32
    return %c0_i32, %c0_i32_0 : i32, i32
  }
  func.func @transform_6(%arg0: i32) -> (i32, i32) {
    %c0_i32 = arith.constant 0 : i32
    %c0_i32_0 = arith.constant 0 : i32
    %c0_i32_1 = arith.constant 0 : i32
    return %c0_i32, %c0_i32_0 : i32, i32
  }
  func.func @transform_7(%arg0: i32) -> (i32, i32, i32) {
    %c0_i32 = arith.constant 0 : i32
    %c0_i32_0 = arith.constant 0 : i32
    %c0_i32_1 = arith.constant 0 : i32
    return %arg0, %c0_i32, %c0_i32_0 : i32, i32, i32
  }
}

</mosaic_0001>

<llo_original>
// kernel: tpu_custom_call.1
$region0: #{tpu_custom_call.1}
  #allocation0 [shape = 'u32[]', space=smem, size = 0x4, offset = 0x4, fixed_abs, tag = 'smem constant byte address 0x4 - core index']
  #allocation1 [shape = 'u32[144,128]{1,0:T(1,128)}', space=vmem, size = 0x12000, scoped, tag = 'internal scratch']
  #allocation2 [shape = 'bf16[32,640]{1,0:T(16,128)(2,1)}', space=vmem, size = 0xa000, scoped, tag = 'scratch operand']
  #allocation3 [shape = 'bf16[256,384]{1,0:T(16,128)(2,1)}', space=vmem, size = 0x30000, scoped, tag = 'scratch operand']
  #allocation4 [shape = 'f32[32,384]{1,0:T(8,128)}', space=vmem, size = 0xc000, scoped, tag = 'scratch operand']
  %s0 = inlined_call_operand.vmem [shape: f32[2,32,384], index: 0, kind: input, shape index: {}]
  %s1 = inlined_call_operand.vmem [shape: bf16[4,64,256], index: 1, kind: input, shape index: {}]
  %s2 = inlined_call_operand.vmem [shape: f32[4,64,1], index: 2, kind: input, shape index: {}]
  %s3 = inlined_call_operand.vmem [shape: bf16[4,64,32], index: 3, kind: input, shape index: {}]
  %s4 = inlined_call_operand.vmem [shape: f32[4,64,1], index: 4, kind: input, shape index: {}]
  %s5 = inlined_call_operand.vmem [shape: bf16[8,32], index: 5, kind: input, shape index: {}]
  %s6 = inlined_call_operand.vmem [shape: f32[8,1], index: 6, kind: input, shape index: {}]
  %s7 = inlined_call_operand.hbm [shape: f32[2,8,384], index: 7, kind: output, shape index: {}]
  %s8 = sld [smem:[#allocation0]]
  $region61: #{tpu_custom_call.1} parent=0
    _
  %s10 = ssub.s32 1, %s8
  %s11 = scalar_select 0, %s10, %s8
  $region1: #{tpu_custom_call.1} parent=0
    #allocation5 [shape = 'u8[24576]{0}', space=vmem, size = 0x6000, scoped, tag = 'output window, operand 0']
    #allocation6 [shape = 's32[2]{0}', space=sflag, size = 0x8, scoped, tag = 'scoped memory for tpu_custom_call.1']
    %12 = vsyncpa [#allocation6], 0
    %s13 = scalar_lea.sflag [#allocation6], 1
    %14 = vsyncpa %s13, 0
    loop: start=0, step=1, limit=4
    $region2: #{tpu_custom_call.1} parent=1 // loop_pre_header
      _
    $region3: #{tpu_custom_call.1} parent=1 // loop_header
      %s16 = sphi 0, %s20
      %p17 = scmp.ge.s32.totalorder %s16, 4
      %s26 = sphi 0, %s28
      %s29 = sphi 0, %s26
      %s30 = sphi 0, %s29
      %s46 = sphi 0, %s30
      %s50 = sphi 0, %s50
      %s52 = sphi 0, %s50
      %s53 = sphi 0, %s52
      %s67 = sphi 0, %s53
      %s71 = sphi 0, %s71
      %s73 = sphi 0, %s71
      %s74 = sphi 0, %s73
      %s88 = sphi 0, %s74
      %s92 = sphi 0, %s92
      %s94 = sphi 0, %s92
      %s95 = sphi 0, %s94
      %s109 = sphi 0, %s95
      %s113 = sphi 0, %s113
      %s115 = sphi 0, %s113
      %s116 = sphi 0, %s115
      %s130 = sphi 0, %s116
      %s134 = sphi 0, %s134
      %s136 = sphi 0, %s134
      %s137 = sphi 0, %s136
      %s151 = sphi 0, %s137
      %s155 = sphi 0, %s155
      %s157 = sphi 0, %s155
      %s158 = sphi 0, %s157
      %s172 = sphi 0, %s158
      %s178 = sphi 0, %s180
      %s181 = sphi 0, %s178
      %s182 = sphi 0, %s181
      %s198 = sphi 0, %s182
    $region4: #{tpu_custom_call.1} parent=1 // loop_header_branch
      %19 = sbr.rel (%p17) target = $region8
    $region5: #{tpu_custom_call.1} parent=1 // loop_body
      %s21 = ssub.s32 %s16, 1
      %s22 = ssub.s32 %s16, 2
      %s23 = sadd.s32 %s16, 1
      %s24 = ssub.s32 %s16, %s23
      %p25 = scmp.eq.s32.totalorder %s24, 0
      %s27 = sadd.s32 %s26, 1
      %s28 = scalar_select %p25, %s26, %s27
      %p31 = pneg %p25
      %p32 = scmp.eq.s32.totalorder %s16, 1
      %p33 = por %p31, %p32
      %p34 = scmp.ne.s32.totalorder %s26, %s29
      %p35 = scmp.eq.s32.totalorder %s16, 0
      %p36 = por %p34, %p35
      %p37 = scmp.ne.s32.totalorder %s26, %s29
      %p38 = scmp.eq.s32.totalorder %s21, 1
      %p39 = por %p37, %p38
      %p40 = scmp.ne.s32.totalorder %s29, %s30
      %p41 = scmp.eq.s32.totalorder %s21, 0
      %p42 = por %p40, %p41
      %p43 = scmp.ne.s32.totalorder %s29, %s30
      %p44 = scmp.eq.s32.totalorder %s22, 1
      %p45 = por %p43, %p44
      %p47 = scmp.ne.s32.totalorder %s30, %s46
      %p48 = scmp.eq.s32.totalorder %s22, 0
      %p49 = por %p47, %p48
      %s51 = sadd.s32 %s50, 1
      %p54 = scmp.eq.s32.totalorder %s16, 1
      %p55 = scmp.ne.s32.totalorder %s50, %s52
      %p56 = scmp.eq.s32.totalorder %s16, 0
      %p57 = por %p55, %p56
      %p58 = scmp.ne.s32.totalorder %s50, %s52
      %p59 = scmp.eq.s32.totalorder %s21, 1
      %p60 = por %p58, %p59
      %p61 = scmp.ne.s32.totalorder %s52, %s53
      %p62 = scmp.eq.s32.totalorder %s21, 0
      %p63 = por %p61, %p62
      %p64 = scmp.ne.s32.totalorder %s52, %s53
      %p65 = scmp.eq.s32.totalorder %s22, 1
      %p66 = por %p64, %p65
      %p68 = scmp.ne.s32.totalorder %s53, %s67
      %p69 = scmp.eq.s32.totalorder %s22, 0
      %p70 = por %p68, %p69
      %s72 = sadd.s32 %s71, 1
      %p75 = scmp.eq.s32.totalorder %s16, 1
      %p76 = scmp.ne.s32.totalorder %s71, %s73
      %p77 = scmp.eq.s32.totalorder %s16, 0
      %p78 = por %p76, %p77
      %p79 = scmp.ne.s32.totalorder %s71, %s73
      %p80 = scmp.eq.s32.totalorder %s21, 1
      %p81 = por %p79, %p80
      %p82 = scmp.ne.s32.totalorder %s73, %s74
      %p83 = scmp.eq.s32.totalorder %s21, 0
      %p84 = por %p82, %p83
      %p85 = scmp.ne.s32.totalorder %s73, %s74
      %p86 = scmp.eq.s32.totalorder %s22, 1
      %p87 = por %p85, %p86
      %p89 = scmp.ne.s32.totalorder %s74, %s88
      %p90 = scmp.eq.s32.totalorder %s22, 0
      %p91 = por %p89, %p90
      %s93 = sadd.s32 %s92, 1
      %p96 = scmp.eq.s32.totalorder %s16, 1
      %p97 = scmp.ne.s32.totalorder %s92, %s94
      %p98 = scmp.eq.s32.totalorder %s16, 0
      %p99 = por %p97, %p98
      %p100 = scmp.ne.s32.totalorder %s92, %s94
      %p101 = scmp.eq.s32.totalorder %s21, 1
      %p102 = por %p100, %p101
      %p103 = scmp.ne.s32.totalorder %s94, %s95
      %p104 = scmp.eq.s32.totalorder %s21, 0
      %p105 = por %p103, %p104
      %p106 = scmp.ne.s32.totalorder %s94, %s95
      %p107 = scmp.eq.s32.totalorder %s22, 1
      %p108 = por %p106, %p107
      %p110 = scmp.ne.s32.totalorder %s95, %s109
      %p111 = scmp.eq.s32.totalorder %s22, 0
      %p112 = por %p110, %p111
      %s114 = sadd.s32 %s113, 1
      %p117 = scmp.eq.s32.totalorder %s16, 1
      %p118 = scmp.ne.s32.totalorder %s113, %s115
      %p119 = scmp.eq.s32.totalorder %s16, 0
      %p120 = por %p118, %p119
      %p121 = scmp.ne.s32.totalorder %s113, %s115
      %p122 = scmp.eq.s32.totalorder %s21, 1
      %p123 = por %p121, %p122
      %p124 = scmp.ne.s32.totalorder %s115, %s116
      %p125 = scmp.eq.s32.totalorder %s21, 0
      %p126 = por %p124, %p125
      %p127 = scmp.ne.s32.totalorder %s115, %s116
      %p128 = scmp.eq.s32.totalorder %s22, 1
      %p129 = por %p127, %p128
      %p131 = scmp.ne.s32.totalorder %s116, %s130
      %p132 = scmp.eq.s32.totalorder %s22, 0
      %p133 = por %p131, %p132
      %s135 = sadd.s32 %s134, 1
      %p138 = scmp.eq.s32.totalorder %s16, 1
      %p139 = scmp.ne.s32.totalorder %s134, %s136
      %p140 = scmp.eq.s32.totalorder %s16, 0
      %p141 = por %p139, %p140
      %p142 = scmp.ne.s32.totalorder %s134, %s136
      %p143 = scmp.eq.s32.totalorder %s21, 1
      %p144 = por %p142, %p143
      %p145 = scmp.ne.s32.totalorder %s136, %s137
      %p146 = scmp.eq.s32.totalorder %s21, 0
      %p147 = por %p145, %p146
      %p148 = scmp.ne.s32.totalorder %s136, %s137
      %p149 = scmp.eq.s32.totalorder %s22, 1
      %p150 = por %p148, %p149
      %p152 = scmp.ne.s32.totalorder %s137, %s151
      %p153 = scmp.eq.s32.totalorder %s22, 0
      %p154 = por %p152, %p153
      %s156 = sadd.s32 %s155, 1
      %p159 = scmp.eq.s32.totalorder %s16, 1
      %p160 = scmp.ne.s32.totalorder %s155, %s157
      %p161 = scmp.eq.s32.totalorder %s16, 0
      %p162 = por %p160, %p161
      %p163 = scmp.ne.s32.totalorder %s155, %s157
      %p164 = scmp.eq.s32.totalorder %s21, 1
      %p165 = por %p163, %p164
      %p166 = scmp.ne.s32.totalorder %s157, %s158
      %p167 = scmp.eq.s32.totalorder %s21, 0
      %p168 = por %p166, %p167
      %p169 = scmp.ne.s32.totalorder %s157, %s158
      %p170 = scmp.eq.s32.totalorder %s22, 1
      %p171 = por %p169, %p170
      %p173 = scmp.ne.s32.totalorder %s158, %s172
      %p174 = scmp.eq.s32.totalorder %s22, 0
      %p175 = por %p173, %p174
      %s176 = ssub.s32 %s16, %s23
      %p177 = scmp.eq.s32.totalorder %s176, 0
      %s179 = sadd.s32 %s178, 1
      %s180 = scalar_select %p177, %s178, %s179
      %p183 = pneg %p177
      %p184 = scmp.eq.s32.totalorder %s16, 1
      %p185 = por %p183, %p184
      %p186 = scmp.ne.s32.totalorder %s178, %s181
      %p187 = scmp.eq.s32.totalorder %s16, 0
      %p188 = por %p186, %p187
      %p189 = scmp.ne.s32.totalorder %s178, %s181
      %p190 = scmp.eq.s32.totalorder %s21, 1
      %p191 = por %p189, %p190
      %p192 = scmp.ne.s32.totalorder %s181, %s182
      %p193 = scmp.eq.s32.totalorder %s21, 0
      %p194 = por %p192, %p193
      %p195 = scmp.ne.s32.totalorder %s181, %s182
      %p196 = scmp.eq.s32.totalorder %s22, 1
      %p197 = por %p195, %p196
      %p199 = scmp.ne.s32.totalorder %s182, %s198
      %p200 = scmp.eq.s32.totalorder %s22, 0
      %p201 = por %p199, %p200
      %p202 = scmp.le.s32.totalorder 1, %s16
      %p203 = scmp.lt.s32.totalorder %s16, 3
      %p204 = pnand %p202, %p203
      %p205 = pneg %p204
      // Predicated region
      $region9: #{tpu_custom_call.1} parent=5 // pred_check
        _
      $region10: #{tpu_custom_call.1} parent=5 // pred_check_branch
        %207 = sbr.rel (%p204) target = $region12
      $region11: #{tpu_custom_call.1} parent=5 // pred_region
        %s208 = ssub.s32 %s16, 1
        // Predicated region
        $region13: #{tpu_custom_call.1} parent=11 // pred_check
          %p209 = pneg %p63
        $region14: #{tpu_custom_call.1} parent=11 // pred_check_branch
          %211 = sbr.rel (%p209) target = $region16
        $region15: #{tpu_custom_call.1} parent=11 // pred_region
          _
        $region16: #{tpu_custom_call.1} parent=11 // pred_fallthru
          _
        // Predicated region
        $region17: #{tpu_custom_call.1} parent=11 // pred_check
          %p212 = pneg %p84
        $region18: #{tpu_custom_call.1} parent=11 // pred_check_branch
          %214 = sbr.rel (%p212) target = $region20
        $region19: #{tpu_custom_call.1} parent=11 // pred_region
          _
        $region20: #{tpu_custom_call.1} parent=11 // pred_fallthru
          _
        // Predicated region
        $region21: #{tpu_custom_call.1} parent=11 // pred_check
          %p215 = pneg %p105
        $region22: #{tpu_custom_call.1} parent=11 // pred_check_branch
          %217 = sbr.rel (%p215) target = $region24
        $region23: #{tpu_custom_call.1} parent=11 // pred_region
          _
        $region24: #{tpu_custom_call.1} parent=11 // pred_fallthru
          _
        // Predicated region
        $region25: #{tpu_custom_call.1} parent=11 // pred_check
          %p218 = pneg %p126
        $region26: #{tpu_custom_call.1} parent=11 // pred_check_branch
          %220 = sbr.rel (%p218) target = $region28
        $region27: #{tpu_custom_call.1} parent=11 // pred_region
          _
        $region28: #{tpu_custom_call.1} parent=11 // pred_fallthru
          _
        // Predicated region
        $region29: #{tpu_custom_call.1} parent=11 // pred_check
          %p221 = pneg %p147
        $region30: #{tpu_custom_call.1} parent=11 // pred_check_branch
          %223 = sbr.rel (%p221) target = $region32
        $region31: #{tpu_custom_call.1} parent=11 // pred_region
          _
        $region32: #{tpu_custom_call.1} parent=11 // pred_fallthru
          _
        // Predicated region
        $region33: #{tpu_custom_call.1} parent=11 // pred_check
          %p224 = pneg %p168
        $region34: #{tpu_custom_call.1} parent=11 // pred_check_branch
          %226 = sbr.rel (%p224) target = $region36
        $region35: #{tpu_custom_call.1} parent=11 // pred_region
          _
        $region36: #{tpu_custom_call.1} parent=11 // pred_fallthru
          _
      $region12: #{tpu_custom_call.1} parent=5 // pred_fallthru
        _
      %p227 = scmp.lt.s32.totalorder %s16, 2
      // Predicated region
      $region37: #{tpu_custom_call.1} parent=5 // pred_check
        %p228 = pneg %p227
      $region38: #{tpu_custom_call.1} parent=5 // pred_check_branch
        %230 = sbr.rel (%p228) target = $region40
      $region39: #{tpu_custom_call.1} parent=5 // pred_region
        // Predicated region
        $region41: #{tpu_custom_call.1} parent=39 // pred_check
          %p231 = pneg %p36
        $region42: #{tpu_custom_call.1} parent=39 // pred_check_branch
          %233 = sbr.rel (%p231) target = $region44
        $region43: #{tpu_custom_call.1} parent=39 // pred_region
          %p234 = scmp.lt.s32.totalorder %s16, 1
          %s235 = scalar_select %p234, %s16, 1
          %s236 = smul.addr %s235, 12
          %s237 = smul.addr %s236, 8
          %s238 = scalar_lea.vmem %s0, %s237
        $region44: #{tpu_custom_call.1} parent=39 // pred_fallthru
          _
      $region40: #{tpu_custom_call.1} parent=5 // pred_fallthru
        _
      %p239 = scmp.le.s32.totalorder 1, %s16
      %p240 = scmp.lt.s32.totalorder %s16, 3
      %p241 = pnand %p239, %p240
      %p242 = pneg %p241
      // Predicated region
      $region45: #{tpu_custom_call.1} parent=5 // pred_check
        _
      $region46: #{tpu_custom_call.1} parent=5 // pred_check_branch
        %244 = sbr.rel (%p241) target = $region48
      $region47: #{tpu_custom_call.1} parent=5 // pred_region
        %s245 = ssub.s32 %s16, 1
        %p246 = scmp.lt.s32.totalorder %s21, 1
        %s247 = scalar_select %p246, %s21, 1
        %s248 = smul.addr %s247, 12
        %s249 = smul.addr %s248, 8
        %s250 = scalar_lea.vmem %s0, %s249
        %p251 = pneg %p42
        %p252 = pneg %p39
        %p253 = pneg %p63
        %p254 = pneg %p60
        %p255 = pneg %p84
        %p256 = pneg %p81
        %p257 = pneg %p105
        %p258 = pneg %p102
        %p259 = pneg %p126
        %p260 = pneg %p123
        %p261 = pneg %p147
        %p262 = pneg %p144
        %p263 = pneg %p168
        %p264 = pneg %p165
        %p265 = pneg %p194
        %p266 = pneg %p191
        %s267 = sand.u32 %s181, 1
        %s268 = scalar_lea.sflag [#allocation6], %s267
        %s269 = sand.u32 %s181, 1
        %s270 = smul.addr %s269, 24
        %s271 = scalar_lea.vmem [#allocation5], %s270
        %p272 = scmp.lt.s32.totalorder %s21, 1
        %s273 = scalar_select %p272, %s21, 1
        %s274 = smul.addr %s273, 12
        %s275 = smul.addr %s274, 8
        %s276 = scalar_lea.vmem %s0, %s275
        %278 = vst [vmem:[#allocation2] sm:$0xff] 0
        %279 = vst [vmem:[#allocation2 + $0x28] sm:$0xff] 0
        %280 = vst [vmem:[#allocation2 + $0x20] sm:$0xff] 0
        %281 = vst [vmem:[#allocation2 + $0x48] sm:$0xff] 0
        %282 = vst [vmem:[#allocation3 + $0xf0] sm:$0xff] 0
        %283 = vst [vmem:[#allocation3 + $0xf8] sm:$0xff] 0
        %284 = vst [vmem:[#allocation3 + $0x100] sm:$0xff] 0
        %285 = vst [vmem:[#allocation3 + $0x108] sm:$0xff] 0
        %286 = vst [vmem:[#allocation3 + $0x110] sm:$0xff] 0
        %287 = vst [vmem:[#allocation3 + $0x118] sm:$0xff] 0
        %288 = vst [vmem:[#allocation3 + $0x120] sm:$0xff] 0
        %289 = vst [vmem:[#allocation3 + $0x128] sm:$0xff] 0
        %290 = vst [vmem:[#allocation3 + $0x130] sm:$0xff] 0
        %291 = vst [vmem:[#allocation3 + $0x138] sm:$0xff] 0
        %292 = vst [vmem:[#allocation3 + $0x140] sm:$0xff] 0
        %293 = vst [vmem:[#allocation3 + $0x148] sm:$0xff] 0
        %294 = vst [vmem:[#allocation3 + $0x150] sm:$0xff] 0
        %295 = vst [vmem:[#allocation3 + $0x158] sm:$0xff] 0
        %296 = vst [vmem:[#allocation3 + $0x160] sm:$0xff] 0
        %297 = vst [vmem:[#allocation3 + $0x168] sm:$0xff] 0
        %298 = vst [vmem:[#allocation3 + $0x170] sm:$0xff] 0
        %299 = vst [vmem:[#allocation3 + $0x178] sm:$0xff] 0
        %300 = vst [vmem:[#allocation4] sm:$0xff] 0.0
        %301 = vst [vmem:[#allocation4 + $0x8] sm:$0xff] 0.0
        %302 = vst [vmem:[#allocation4 + $0x10] sm:$0xff] 0.0
        %303 = vst [vmem:[#allocation4 + $0x18] sm:$0xff] 0.0
        %304 = vst [vmem:[#allocation4 + $0x20] sm:$0xff] 0.0
        %305 = vst [vmem:[#allocation4 + $0x28] sm:$0xff] 0.0
        %306 = vst [vmem:[#allocation4 + $0x30] sm:$0xff] 0.0
        %307 = vst [vmem:[#allocation4 + $0x38] sm:$0xff] 0.0
        %308 = vst [vmem:[#allocation4 + $0x40] sm:$0xff] 0.0
        %309 = vst [vmem:[#allocation4 + $0x48] sm:$0xff] 0.0
        %310 = vst [vmem:[#allocation4 + $0x50] sm:$0xff] 0.0
        %311 = vst [vmem:[#allocation4 + $0x58] sm:$0xff] 0.0
        %v312 = vlaneseq
        %v313 = vand.u32 %v312, 127
        %v314 = vadd.s32 %v313, 128
        %v315 = vadd.s32 %v313, 256
        %vm316 = vcmp.ge.s32.totalorder %v313, 0
        %vm317 = vcmp.ge.s32.totalorder %v314, 0
        %vm318 = vcmp.ge.s32.totalorder %v315, 0
        %vm319 = vcmp.lt.s32.totalorder %v313, 344
        %vm320 = vcmp.lt.s32.totalorder %v314, 344
        %vm321 = vcmp.lt.s32.totalorder %v315, 344
        %vm322 = vmand %vm316, %vm319
        %vm323 = vmand %vm317, %vm320
        %vm324 = vmand %vm318, %vm321
        %v325 = vsel %vm322, 1, 0
        %v326 = vsel %vm323, 1, 0
        %v327 = vsel %vm324, 1, 0
        %vm328 = vcmp.eq.s32.totalorder %v325, 1
        %vm329 = vcmp.eq.s32.totalorder %v326, 1
        %vm330 = vcmp.eq.s32.totalorder %v327, 1
        %v331 = vld [vmem:[%s276] sm:$0xff]
        %v332 = vld [vmem:[%s276 + $0x8] sm:$0xff]
        %v333 = vld [vmem:[%s276 + $0x10] sm:$0xff]
        %v334 = vld [vmem:[%s276 + $0x18] sm:$0xff]
        %v335 = vld [vmem:[%s276 + $0x20] sm:$0xff]
        %v336 = vld [vmem:[%s276 + $0x28] sm:$0xff]
        %v337 = vld [vmem:[%s276 + $0x30] sm:$0xff]
        %v338 = vld [vmem:[%s276 + $0x38] sm:$0xff]
        %v339 = vld [vmem:[%s276 + $0x40] sm:$0xff]
        %v340 = vld [vmem:[%s276 + $0x48] sm:$0xff]
        %v341 = vld [vmem:[%s276 + $0x50] sm:$0xff]
        %v342 = vld [vmem:[%s276 + $0x58] sm:$0xff]
        %v343 = vsel %vm328, %v331, 0.0
        %v344 = vsel %vm329, %v332, 0.0
        %v345 = vsel %vm330, %v333, 0.0
        %v346 = vsel %vm328, %v334, 0.0
        %v347 = vsel %vm329, %v335, 0.0
        %v348 = vsel %vm330, %v336, 0.0
        %v349 = vsel %vm328, %v337, 0.0
        %v350 = vsel %vm329, %v338, 0.0
        %v351 = vsel %vm330, %v339, 0.0
        %v352 = vsel %vm328, %v340, 0.0
        %v353 = vsel %vm329, %v341, 0.0
        %v354 = vsel %vm330, %v342, 0.0
        %v355 = vpack.c.bf16 %v346, %v343
        %v356 = vpack.c.bf16 %v347, %v344
        %v357 = vpack.c.bf16 %v348, %v345
        %v358 = vpack.c.bf16 %v352, %v349
        %v359 = vpack.c.bf16 %v353, %v350
        %v360 = vpack.c.bf16 %v354, %v351
        %361 = vst [vmem:[#allocation2 + $0x8] sm:$0xff] %v355
        %362 = vst [vmem:[#allocation2 + $0x10] sm:$0xff] %v356
        %363 = vst [vmem:[#allocation2 + $0x18] sm:$0xff] %v357
        %364 = vst [vmem:[#allocation2 + $0x30] sm:$0xff] %v358
        %365 = vst [vmem:[#allocation2 + $0x38] sm:$0xff] %v359
        %366 = vst [vmem:[#allocation2 + $0x40] sm:$0xff] %v360
        %v367 = vld [vmem:[#allocation2] sm:$0xff]
        %v368 = vld [vmem:[#allocation2 + $0x8] sm:$0xff]
        %v369 = vld [vmem:[#allocation2 + $0x10] sm:$0xff]
        %v370 = vld [vmem:[#allocation2 + $0x18] sm:$0xff]
        %v371 = vld [vmem:[#allocation2 + $0x28] sm:$0xff]
        %v372 = vld [vmem:[#allocation2 + $0x30] sm:$0xff]
        %v373 = vld [vmem:[#allocation2 + $0x38] sm:$0xff]
        %v374 = vld [vmem:[#allocation2 + $0x40] sm:$0xff]
        %383 = vrot.lane.b32.xlu0 %v367, 2
        %v384 = vpop.permute.xlu0 %383
        %385 = vrot.lane.b32.xlu0 %v368, 2
        %v386 = vpop.permute.xlu0 %385
        %387 = vrot.lane.b32.xlu0 %v369, 2
        %v388 = vpop.permute.xlu0 %387
        %389 = vrot.lane.b32.xlu0 %v370, 2
        %v390 = vpop.permute.xlu0 %389
        %391 = vrot.lane.b32.xlu0 %v371, 2
        %v392 = vpop.permute.xlu0 %391
        %393 = vrot.lane.b32.xlu0 %v372, 2
        %v394 = vpop.permute.xlu0 %393
        %395 = vrot.lane.b32.xlu0 %v373, 2
        %v396 = vpop.permute.xlu0 %395
        %397 = vrot.lane.b32.xlu0 %v374, 2
        %v398 = vpop.permute.xlu0 %397
        %vm399 = vcmask 15360
        %v400 = vsel %vm399, %v384, %v386
        %v401 = vsel %vm399, %v386, %v388
        %v402 = vsel %vm399, %v388, %v390
        %v403 = vsel %vm399, %v392, %v394
        %v404 = vsel %vm399, %v394, %v396
        %v405 = vsel %vm399, %v396, %v398
        %412 = vst [vmem:[#allocation3] sm:$0xff] %v400
        %413 = vst [vmem:[#allocation3 + $0x8] sm:$0xff] %v401
        %414 = vst [vmem:[#allocation3 + $0x10] sm:$0xff] %v402
        %415 = vst [vmem:[#allocation3 + $0x18] sm:$0xff] %v403
        %416 = vst [vmem:[#allocation3 + $0x20] sm:$0xff] %v404
        %417 = vst [vmem:[#allocation3 + $0x28] sm:$0xff] %v405
        %v418 = vld [vmem:[#allocation2] sm:$0xff]
        %v419 = vld [vmem:[#allocation2 + $0x8] sm:$0xff]
        %v420 = vld [vmem:[#allocation2 + $0x10] sm:$0xff]
        %v421 = vld [vmem:[#allocation2 + $0x18] sm:$0xff]
        %v422 = vld [vmem:[#allocation2 + $0x28] sm:$0xff]
        %v423 = vld [vmem:[#allocation2 + $0x30] sm:$0xff]
        %v424 = vld [vmem:[#allocation2 + $0x38] sm:$0xff]
        %v425 = vld [vmem:[#allocation2 + $0x40] sm:$0xff]
        %434 = vrot.lane.b32.xlu0 %v418, 1
        %v435 = vpop.permute.xlu0 %434
        %436 = vrot.lane.b32.xlu0 %v419, 1
        %v437 = vpop.permute.xlu0 %436
        %438 = vrot.lane.b32.xlu0 %v420, 1
        %v439 = vpop.permute.xlu0 %438
        %440 = vrot.lane.b32.xlu0 %v421, 1
        %v441 = vpop.permute.xlu0 %440
        %442 = vrot.lane.b32.xlu0 %v422, 1
        %v443 = vpop.permute.xlu0 %442
        %444 = vrot.lane.b32.xlu0 %v423, 1
        %v445 = vpop.permute.xlu0 %444
        %446 = vrot.lane.b32.xlu0 %v424, 1
        %v447 = vpop.permute.xlu0 %446
        %448 = vrot.lane.b32.xlu0 %v425, 1
        %v449 = vpop.permute.xlu0 %448
        %vm450 = vcmask 7168
        %v451 = vsel %vm450, %v435, %v437
        %v452 = vsel %vm450, %v437, %v439
        %v453 = vsel %vm450, %v439, %v441
        %v454 = vsel %vm450, %v443, %v445
        %v455 = vsel %vm450, %v445, %v447
        %v456 = vsel %vm450, %v447, %v449
        %463 = vst [vmem:[#allocation3 + $0x30] sm:$0xff] %v451
        %464 = vst [vmem:[#allocation3 + $0x38] sm:$0xff] %v452
        %465 = vst [vmem:[#allocation3 + $0x40] sm:$0xff] %v453
        %466 = vst [vmem:[#allocation3 + $0x48] sm:$0xff] %v454
        %467 = vst [vmem:[#allocation3 + $0x50] sm:$0xff] %v455
        %468 = vst [vmem:[#allocation3 + $0x58] sm:$0xff] %v456
        %v469 = vld [vmem:[#allocation2 + $0x8] sm:$0xff]
        %v470 = vld [vmem:[#allocation2 + $0x10] sm:$0xff]
        %v471 = vld [vmem:[#allocation2 + $0x18] sm:$0xff]
        %v472 = vld [vmem:[#allocation2 + $0x30] sm:$0xff]
        %v473 = vld [vmem:[#allocation2 + $0x38] sm:$0xff]
        %v474 = vld [vmem:[#allocation2 + $0x40] sm:$0xff]
        %475 = vst [vmem:[#allocation3 + $0x60] sm:$0xff] %v469
        %476 = vst [vmem:[#allocation3 + $0x68] sm:$0xff] %v470
        %477 = vst [vmem:[#allocation3 + $0x70] sm:$0xff] %v471
        %478 = vst [vmem:[#allocation3 + $0x78] sm:$0xff] %v472
        %479 = vst [vmem:[#allocation3 + $0x80] sm:$0xff] %v473
        %480 = vst [vmem:[#allocation3 + $0x88] sm:$0xff] %v474
        %v481 = vld [vmem:[#allocation2 + $0x8] sm:$0xff]
        %v482 = vld [vmem:[#allocation2 + $0x10] sm:$0xff]
        %v483 = vld [vmem:[#allocation2 + $0x18] sm:$0xff]
        %v484 = vld [vmem:[#allocation2 + $0x20] sm:$0xff]
        %v485 = vld [vmem:[#allocation2 + $0x30] sm:$0xff]
        %v486 = vld [vmem:[#allocation2 + $0x38] sm:$0xff]
        %v487 = vld [vmem:[#allocation2 + $0x40] sm:$0xff]
        %v488 = vld [vmem:[#allocation2 + $0x48] sm:$0xff]
        %497 = vrot.lane.b32.xlu0 %v481, 127
        %v498 = vpop.permute.xlu0 %497
        %499 = vrot.lane.b32.xlu0 %v482, 127
        %v500 = vpop.permute.xlu0 %499
        %501 = vrot.lane.b32.xlu0 %v483, 127
        %v502 = vpop.permute.xlu0 %501
        %503 = vrot.lane.b32.xlu0 %v484, 127
        %v504 = vpop.permute.xlu0 %503
        %505 = vrot.lane.b32.xlu0 %v485, 127
        %v506 = vpop.permute.xlu0 %505
        %507 = vrot.lane.b32.xlu0 %v486, 127
        %v508 = vpop.permute.xlu0 %507
        %509 = vrot.lane.b32.xlu0 %v487, 127
        %v510 = vpop.permute.xlu0 %509
        %511 = vrot.lane.b32.xlu0 %v488, 127
        %v512 = vpop.permute.xlu0 %511
        %vm513 = vcmask 1039360
        %v514 = vsel %vm513, %v498, %v500
        %v515 = vsel %vm513, %v500, %v502
        %v516 = vsel %vm513, %v502, %v504
        %v517 = vsel %vm513, %v506, %v508
        %v518 = vsel %vm513, %v508, %v510
        %v519 = vsel %vm513, %v510, %v512
        %526 = vst [vmem:[#allocation3 + $0x90] sm:$0xff] %v514
        %527 = vst [vmem:[#allocation3 + $0x98] sm:$0xff] %v515
        %528 = vst [vmem:[#allocation3 + $0xa0] sm:$0xff] %v516
        %529 = vst [vmem:[#allocation3 + $0xa8] sm:$0xff] %v517
        %530 = vst [vmem:[#allocation3 + $0xb0] sm:$0xff] %v518
        %531 = vst [vmem:[#allocation3 + $0xb8] sm:$0xff] %v519
        %v532 = vld [vmem:[#allocation2 + $0x8] sm:$0xff]
        %v533 = vld [vmem:[#allocation2 + $0x10] sm:$0xff]
        %v534 = vld [vmem:[#allocation2 + $0x18] sm:$0xff]
        %v535 = vld [vmem:[#allocation2 + $0x20] sm:$0xff]
        %v536 = vld [vmem:[#allocation2 + $0x30] sm:$0xff]
        %v537 = vld [vmem:[#allocation2 + $0x38] sm:$0xff]
        %v538 = vld [vmem:[#allocation2 + $0x40] sm:$0xff]
        %v539 = vld [vmem:[#allocation2 + $0x48] sm:$0xff]
        %548 = vrot.lane.b32.xlu0 %v532, 126
        %v549 = vpop.permute.xlu0 %548
        %550 = vrot.lane.b32.xlu0 %v533, 126
        %v551 = vpop.permute.xlu0 %550
        %552 = vrot.lane.b32.xlu0 %v534, 126
        %v553 = vpop.permute.xlu0 %552
        %554 = vrot.lane.b32.xlu0 %v535, 126
        %v555 = vpop.permute.xlu0 %554
        %556 = vrot.lane.b32.xlu0 %v536, 126
        %v557 = vpop.permute.xlu0 %556
        %558 = vrot.lane.b32.xlu0 %v537, 126
        %v559 = vpop.permute.xlu0 %558
        %560 = vrot.lane.b32.xlu0 %v538, 126
        %v561 = vpop.permute.xlu0 %560
        %562 = vrot.lane.b32.xlu0 %v539, 126
        %v563 = vpop.permute.xlu0 %562
        %vm564 = vcmask 1031168
        %v565 = vsel %vm564, %v549, %v551
        %v566 = vsel %vm564, %v551, %v553
        %v567 = vsel %vm564, %v553, %v555
        %v568 = vsel %vm564, %v557, %v559
        %v569 = vsel %vm564, %v559, %v561
        %v570 = vsel %vm564, %v561, %v563
        %577 = vst [vmem:[#allocation3 + $0xc0] sm:$0xff] %v565
        %578 = vst [vmem:[#allocation3 + $0xc8] sm:$0xff] %v566
        %579 = vst [vmem:[#allocation3 + $0xd0] sm:$0xff] %v567
        %580 = vst [vmem:[#allocation3 + $0xd8] sm:$0xff] %v568
        %581 = vst [vmem:[#allocation3 + $0xe0] sm:$0xff] %v569
        %582 = vst [vmem:[#allocation3 + $0xe8] sm:$0xff] %v570
        %v583 = vld [vmem:[%s1] sm:$0xff]
        %v584 = vld [vmem:[%s1 + $0x8] sm:$0xff]
        %v585 = vld [vmem:[%s1 + $0x10] sm:$0xff]
        %v586 = vld [vmem:[%s1 + $0x18] sm:$0xff]
        %v587 = vld [vmem:[%s1 + $0x20] sm:$0xff]
        %v588 = vld [vmem:[%s1 + $0x28] sm:$0xff]
        %v589 = vld [vmem:[%s1 + $0x30] sm:$0xff]
        %v590 = vld [vmem:[%s1 + $0x38] sm:$0xff]
        %v591 = vld [vmem:[#allocation3] sm:$0xff]
        %v592 = vld [vmem:[#allocation3 + $0x8] sm:$0xff]
        %v593 = vld [vmem:[#allocation3 + $0x10] sm:$0xff]
        %v594 = vld [vmem:[#allocation3 + $0x18] sm:$0xff]
        %v595 = vld [vmem:[#allocation3 + $0x20] sm:$0xff]
        %v596 = vld [vmem:[#allocation3 + $0x28] sm:$0xff]
        %v597 = vld [vmem:[#allocation3 + $0x30] sm:$0xff]
        %v598 = vld [vmem:[#allocation3 + $0x38] sm:$0xff]
        %v599 = vld [vmem:[#allocation3 + $0x40] sm:$0xff]
        %v600 = vld [vmem:[#allocation3 + $0x48] sm:$0xff]
        %v601 = vld [vmem:[#allocation3 + $0x50] sm:$0xff]
        %v602 = vld [vmem:[#allocation3 + $0x58] sm:$0xff]
        %v603 = vld [vmem:[#allocation3 + $0x60] sm:$0xff]
        %v604 = vld [vmem:[#allocation3 + $0x68] sm:$0xff]
        %v605 = vld [vmem:[#allocation3 + $0x70] sm:$0xff]
        %v606 = vld [vmem:[#allocation3 + $0x78] sm:$0xff]
        %v607 = vld [vmem:[#allocation3 + $0x80] sm:$0xff]
        %v608 = vld [vmem:[#allocation3 + $0x88] sm:$0xff]
        %v609 = vld [vmem:[#allocation3 + $0x90] sm:$0xff]
        %v610 = vld [vmem:[#allocation3 + $0x98] sm:$0xff]
        %v611 = vld [vmem:[#allocation3 + $0xa0] sm:$0xff]
        %v612 = vld [vmem:[#allocation3 + $0xa8] sm:$0xff]
        %v613 = vld [vmem:[#allocation3 + $0xb0] sm:$0xff]
        %v614 = vld [vmem:[#allocation3 + $0xb8] sm:$0xff]
        %v615 = vld [vmem:[#allocation3 + $0xc0] sm:$0xff]
        %v616 = vld [vmem:[#allocation3 + $0xc8] sm:$0xff]
        %v617 = vld [vmem:[#allocation3 + $0xd0] sm:$0xff]
        %v618 = vld [vmem:[#allocation3 + $0xd8] sm:$0xff]
        %v619 = vld [vmem:[#allocation3 + $0xe0] sm:$0xff]
        %v620 = vld [vmem:[#allocation3 + $0xe8] sm:$0xff]
        %v621 = vld [vmem:[#allocation3 + $0xf0] sm:$0xff]
        %v622 = vld [vmem:[#allocation3 + $0xf8] sm:$0xff]
        %v623 = vld [vmem:[#allocation3 + $0x100] sm:$0xff]
        %v624 = vld [vmem:[#allocation3 + $0x108] sm:$0xff]
        %v625 = vld [vmem:[#allocation3 + $0x110] sm:$0xff]
        %v626 = vld [vmem:[#allocation3 + $0x118] sm:$0xff]
        %v627 = vld [vmem:[#allocation3 + $0x120] sm:$0xff]
        %v628 = vld [vmem:[#allocation3 + $0x128] sm:$0xff]
        %v629 = vld [vmem:[#allocation3 + $0x130] sm:$0xff]
        %v630 = vld [vmem:[#allocation3 + $0x138] sm:$0xff]
        %v631 = vld [vmem:[#allocation3 + $0x140] sm:$0xff]
        %v632 = vld [vmem:[#allocation3 + $0x148] sm:$0xff]
        %v633 = vld [vmem:[#allocation3 + $0x150] sm:$0xff]
        %v634 = vld [vmem:[#allocation3 + $0x158] sm:$0xff]
        %v635 = vld [vmem:[#allocation3 + $0x160] sm:$0xff]
        %v636 = vld [vmem:[#allocation3 + $0x168] sm:$0xff]
        %v637 = vld [vmem:[#allocation3 + $0x170] sm:$0xff]
        %v638 = vld [vmem:[#allocation3 + $0x178] sm:$0xff]
        %v639 = vld [vmem:[%s2] sm:$0xff]
        %v640 = vld [vmem:[%s2 + $0x8] sm:$0xff]
        %v641 = vld [vmem:[%s2 + $0x10] sm:$0xff]
        %v642 = vld [vmem:[%s2 + $0x18] sm:$0xff]
        %v643 = vld [vmem:[%s2 + $0x20] sm:$0xff]
        %v644 = vld [vmem:[%s2 + $0x28] sm:$0xff]
        %v645 = vld [vmem:[%s2 + $0x30] sm:$0xff]
        %v646 = vld [vmem:[%s2 + $0x38] sm:$0xff]
        %648 = vset.pattern.permute.xlu0 0
        %649 = vperm.xlu0 %648, %v639
        %v650 = vpop.permute.xlu0 %649
        %653 = vset.pattern.permute.xlu0 0
        %654 = vperm.xlu0 %653, %v640
        %v655 = vpop.permute.xlu0 %654
        %658 = vset.pattern.permute.xlu0 0
        %659 = vperm.xlu0 %658, %v641
        %v660 = vpop.permute.xlu0 %659
        %663 = vset.pattern.permute.xlu0 0
        %664 = vperm.xlu0 %663, %v642
        %v665 = vpop.permute.xlu0 %664
        %668 = vset.pattern.permute.xlu0 0
        %669 = vperm.xlu0 %668, %v643
        %v670 = vpop.permute.xlu0 %669
        %673 = vset.pattern.permute.xlu0 0
        %674 = vperm.xlu0 %673, %v644
        %v675 = vpop.permute.xlu0 %674
        %678 = vset.pattern.permute.xlu0 0
        %679 = vperm.xlu0 %678, %v645
        %v680 = vpop.permute.xlu0 %679
        %683 = vset.pattern.permute.xlu0 0
        %684 = vperm.xlu0 %683, %v646
        %v685 = vpop.permute.xlu0 %684
        %v695 = vunpack.c.l.b16 %v583
        %v696 = vunpack.c.h.b16 %v583
        %v697 = vunpack.c.l.b16 %v584
        %v698 = vunpack.c.h.b16 %v584
        %v699 = vunpack.c.l.b16 %v585
        %v700 = vunpack.c.h.b16 %v585
        %v701 = vunpack.c.l.b16 %v586
        %v702 = vunpack.c.h.b16 %v586
        %v703 = vunpack.c.l.b16 %v587
        %v704 = vunpack.c.h.b16 %v587
        %v705 = vunpack.c.l.b16 %v588
        %v706 = vunpack.c.h.b16 %v588
        %v707 = vunpack.c.l.b16 %v589
        %v708 = vunpack.c.h.b16 %v589
        %v709 = vunpack.c.l.b16 %v590
        %v710 = vunpack.c.h.b16 %v590
        %v711 = vpack.c.b16 %v697, %v695
        %v712 = vpack.c.b16 %v698, %v696
        %v713 = vpack.c.b16 %v701, %v699
        %v714 = vpack.c.b16 %v702, %v700
        %v715 = vpack.c.b16 %v705, %v703
        %v716 = vpack.c.b16 %v706, %v704
        %v717 = vpack.c.b16 %v709, %v707
        %v718 = vpack.c.b16 %v710, %v708
        %727 = vmatprep.subr.bf16.mxu0 %v592
        %728 = vmatpush1.bf16.msra.mxu0 %v591
        %729 = vmatprep.subr.bf16.mxu0 %v595
        %730 = vmatpush1.bf16.msra.mxu0 %v594
        %731 = vmatprep.subr.bf16.mxu0 %v598
        %732 = vmatpush1.bf16.msra.mxu0 %v597
        %733 = vmatprep.subr.bf16.mxu0 %v601
        %734 = vmatpush1.bf16.msra.mxu0 %v600
        %735 = vmatprep.subr.bf16.mxu0 %v604
        %736 = vmatpush1.bf16.msra.mxu0 %v603
        %737 = vmatprep.subr.bf16.mxu0 %v607
        %738 = vmatpush1.bf16.msra.mxu0 %v606
        %739 = vmatprep.subr.bf16.mxu0 %v610
        %740 = vmatpush1.bf16.msra.mxu0 %v609
        %741 = vmatprep.subr.bf16.mxu0 %v613
        %742 = vmatpush1.bf16.msra.mxu0 %v612
        %743 = vmatprep.subr.bf16.mxu0 %v616
        %744 = vmatpush1.bf16.msra.mxu0 %v615
        %745 = vmatprep.subr.bf16.mxu0 %v619
        %746 = vmatpush1.bf16.msra.mxu0 %v618
        %747 = vmatprep.subr.bf16.mxu0 %v622
        %748 = vmatpush1.bf16.msra.mxu0 %v621
        %749 = vmatprep.subr.bf16.mxu0 %v625
        %750 = vmatpush1.bf16.msra.mxu0 %v624
        %751 = vmatprep.subr.bf16.mxu0 %v628
        %752 = vmatpush1.bf16.msra.mxu0 %v627
        %753 = vmatprep.subr.bf16.mxu0 %v631
        %754 = vmatpush1.bf16.msra.mxu0 %v630
        %755 = vmatprep.subr.bf16.mxu0 %v634
        %756 = vmatpush1.bf16.msra.mxu0 %v633
        %757 = vmatprep.subr.bf16.mxu0 %v637
        %758 = vmatpush1.bf16.msra.mxu0 %v636
        %759 = vmatprep.mubr.bf16.mxu0 %v712
        %760 = vmatmul.mubr.bf16.gmra.mrb[0].mxu0 %v711
        %v761 = vpop.f32.mrb[0].mxu0
        %v762 = vadd.f32 %v650, %v761
        %v763 = vpop.f32.mrb[0].mxu0
        %v764 = vadd.f32 %v650, %v763
        %v765 = vpop.f32.mrb[0].mxu0
        %v766 = vadd.f32 %v655, %v765
        %v767 = vpop.f32.mrb[0].mxu0
        %v768 = vadd.f32 %v655, %v767
        %769 = vmatprep.mubr.bf16.mxu0 %v714
        %770 = vmatmul.mubr.bf16.gmra.mrb[0].mxu0 %v713
        %v771 = vpop.f32.mrb[0].mxu0
        %v772 = vadd.f32 %v660, %v771
        %v773 = vpop.f32.mrb[0].mxu0
        %v774 = vadd.f32 %v660, %v773
        %v775 = vpop.f32.mrb[0].mxu0
        %v776 = vadd.f32 %v665, %v775
        %v777 = vpop.f32.mrb[0].mxu0
        %v778 = vadd.f32 %v665, %v777
        %779 = vmatprep.mubr.bf16.mxu0 %v716
        %780 = vmatmul.mubr.bf16.gmra.mrb[0].mxu0 %v715
        %v781 = vpop.f32.mrb[0].mxu0
        %v782 = vadd.f32 %v670, %v781
        %v783 = vpop.f32.mrb[0].mxu0
        %v784 = vadd.f32 %v670, %v783
        %v785 = vpop.f32.mrb[0].mxu0
        %v786 = vadd.f32 %v675, %v785
        %v787 = vpop.f32.mrb[0].mxu0
        %v788 = vadd.f32 %v675, %v787
        %789 = vmatprep.mubr.bf16.mxu0 %v718
        %790 = vmatmul.mubr.bf16.gmra.mrb[0].mxu0 %v717
        %v791 = vpop.f32.mrb[0].mxu0
        %v792 = vadd.f32 %v680, %v791
        %v793 = vpop.f32.mrb[0].mxu0
        %v794 = vadd.f32 %v680, %v793
        %v795 = vpop.f32.mrb[0].mxu0
        %v796 = vadd.f32 %v685, %v795
        %v797 = vpop.f32.mrb[0].mxu0
        %v798 = vadd.f32 %v685, %v797
        %799 = vdwg.mxu0
        %800 = vmatprep.subr.bf16.mxu0 0
        %801 = vmatpush1.bf16.msra.mxu0 %v593
        %802 = vmatprep.subr.bf16.mxu0 0
        %803 = vmatpush1.bf16.msra.mxu0 %v596
        %804 = vmatprep.subr.bf16.mxu0 0
        %805 = vmatpush1.bf16.msra.mxu0 %v599
        %806 = vmatprep.subr.bf16.mxu0 0
        %807 = vmatpush1.bf16.msra.mxu0 %v602
        %808 = vmatprep.subr.bf16.mxu0 0
        %809 = vmatpush1.bf16.msra.mxu0 %v605
        %810 = vmatprep.subr.bf16.mxu0 0
        %811 = vmatpush1.bf16.msra.mxu0 %v608
        %812 = vmatprep.subr.bf16.mxu0 0
        %813 = vmatpush1.bf16.msra.mxu0 %v611
        %814 = vmatprep.subr.bf16.mxu0 0
        %815 = vmatpush1.bf16.msra.mxu0 %v614
        %816 = vmatprep.subr.bf16.mxu0 0
        %817 = vmatpush1.bf16.msra.mxu0 %v617
        %818 = vmatprep.subr.bf16.mxu0 0
        %819 = vmatpush1.bf16.msra.mxu0 %v620
        %820 = vmatprep.subr.bf16.mxu0 0
        %821 = vmatpush1.bf16.msra.mxu0 %v623
        %822 = vmatprep.subr.bf16.mxu0 0
        %823 = vmatpush1.bf16.msra.mxu0 %v626
        %824 = vmatprep.subr.bf16.mxu0 0
        %825 = vmatpush1.bf16.msra.mxu0 %v629
        %826 = vmatprep.subr.bf16.mxu0 0
        %827 = vmatpush1.bf16.msra.mxu0 %v632
        %828 = vmatprep.subr.bf16.mxu0 0
        %829 = vmatpush1.bf16.msra.mxu0 %v635
        %830 = vmatprep.subr.bf16.mxu0 0
        %831 = vmatpush1.bf16.msra.mxu0 %v638
        %832 = vmatprep.mubr.bf16.mxu0 %v712
        %833 = vmatmul.mubr.bf16.gmra.mrb[0].mxu0 %v711
        %v834 = vpop.f32.mrb[0].mxu0
        %v835 = vadd.f32 %v650, %v834
        %v836 = vpop.f32.mrb[0].mxu0
        %v837 = vpop.f32.mrb[0].mxu0
        %v838 = vadd.f32 %v655, %v837
        %v839 = vpop.f32.mrb[0].mxu0
        %840 = vmatprep.mubr.bf16.mxu0 %v714
        %841 = vmatmul.mubr.bf16.gmra.mrb[0].mxu0 %v713
        %v842 = vpop.f32.mrb[0].mxu0
        %v843 = vadd.f32 %v660, %v842
        %v844 = vpop.f32.mrb[0].mxu0
        %v845 = vpop.f32.mrb[0].mxu0
        %v846 = vadd.f32 %v665, %v845
        %v847 = vpop.f32.mrb[0].mxu0
        %848 = vmatprep.mubr.bf16.mxu0 %v716
        %849 = vmatmul.mubr.bf16.gmra.mrb[0].mxu0 %v715
        %v850 = vpop.f32.mrb[0].mxu0
        %v851 = vadd.f32 %v670, %v850
        %v852 = vpop.f32.mrb[0].mxu0
        %v853 = vpop.f32.mrb[0].mxu0
        %v854 = vadd.f32 %v675, %v853
        %v855 = vpop.f32.mrb[0].mxu0
        %856 = vmatprep.mubr.bf16.mxu0 %v718
        %857 = vmatmul.mubr.bf16.gmra.mrb[0].mxu0 %v717
        %v858 = vpop.f32.mrb[0].mxu0
        %v859 = vadd.f32 %v680, %v858
        %v860 = vpop.f32.mrb[0].mxu0
        %v861 = vpop.f32.mrb[0].mxu0
        %v862 = vadd.f32 %v685, %v861
        %v863 = vpop.f32.mrb[0].mxu0
        %864 = vdwg.mxu0
        %v865 = vtanh.pop %v762
        %v866 = vtanh.pop %v764
        %v867 = vtanh.pop %v835
        %v868 = vtanh.pop %v766
        %v869 = vtanh.pop %v768
        %v870 = vtanh.pop %v838
        %v871 = vtanh.pop %v772
        %v872 = vtanh.pop %v774
        %v873 = vtanh.pop %v843
        %v874 = vtanh.pop %v776
        %v875 = vtanh.pop %v778
        %v876 = vtanh.pop %v846
        %v877 = vmul.f32 %v782, 0.5
        %v878 = vmul.f32 %v784, 0.5
        %v879 = vmul.f32 %v851, 0.5
        %v880 = vmul.f32 %v786, 0.5
        %v881 = vmul.f32 %v788, 0.5
        %v882 = vmul.f32 %v854, 0.5
        %v883 = vmul.f32 %v792, 0.5
        %v884 = vmul.f32 %v794, 0.5
        %v885 = vmul.f32 %v859, 0.5
        %v886 = vmul.f32 %v796, 0.5
        %v887 = vmul.f32 %v798, 0.5
        %v888 = vmul.f32 %v862, 0.5
        %v889 = vtanh.pop %v877
        %v890 = vtanh.pop %v878
        %v891 = vtanh.pop %v879
        %v892 = vtanh.pop %v880
        %v893 = vtanh.pop %v881
        %v894 = vtanh.pop %v882
        %v895 = vtanh.pop %v883
        %v896 = vtanh.pop %v884
        %v897 = vtanh.pop %v885
        %v898 = vtanh.pop %v886
        %v899 = vtanh.pop %v887
        %v900 = vtanh.pop %v888
        %v901 = vmul.f32 %v889, 0.5
        %v902 = vmul.f32 %v890, 0.5
        %v903 = vmul.f32 %v891, 0.5
        %v904 = vmul.f32 %v892, 0.5
        %v905 = vmul.f32 %v893, 0.5
        %v906 = vmul.f32 %v894, 0.5
        %v907 = vmul.f32 %v895, 0.5
        %v908 = vmul.f32 %v896, 0.5
        %v909 = vmul.f32 %v897, 0.5
        %v910 = vmul.f32 %v898, 0.5
        %v911 = vmul.f32 %v899, 0.5
        %v912 = vmul.f32 %v900, 0.5
        %v913 = vadd.f32 %v901, 0.5
        %v914 = vadd.f32 %v902, 0.5
        %v915 = vadd.f32 %v903, 0.5
        %v916 = vadd.f32 %v904, 0.5
        %v917 = vadd.f32 %v905, 0.5
        %v918 = vadd.f32 %v906, 0.5
        %v919 = vadd.f32 %v907, 0.5
        %v920 = vadd.f32 %v908, 0.5
        %v921 = vadd.f32 %v909, 0.5
        %v922 = vadd.f32 %v910, 0.5
        %v923 = vadd.f32 %v911, 0.5
        %v924 = vadd.f32 %v912, 0.5
        %v925 = vmul.f32 %v865, %v913
        %v926 = vmul.f32 %v866, %v914
        %v927 = vmul.f32 %v867, %v915
        %v928 = vmul.f32 %v868, %v916
        %v929 = vmul.f32 %v869, %v917
        %v930 = vmul.f32 %v870, %v918
        %v931 = vmul.f32 %v871, %v919
        %v932 = vmul.f32 %v872, %v920
        %v933 = vmul.f32 %v873, %v921
        %v934 = vmul.f32 %v874, %v922
        %v935 = vmul.f32 %v875, %v923
        %v936 = vmul.f32 %v876, %v924
        %v937 = vpack.c.bf16 %v928, %v925
        %v938 = vpack.c.bf16 %v929, %v926
        %v939 = vpack.c.bf16 %v930, %v927
        %v940 = vpack.c.bf16 %v934, %v931
        %v941 = vpack.c.bf16 %v935, %v932
        %v942 = vpack.c.bf16 %v936, %v933
        %v943 = vld [vmem:[%s3] sm:$0xf]
        %v944 = vld [vmem:[%s3 + $0x4] sm:$0xf]
        %v945 = vld [vmem:[%s3 + $0x8] sm:$0xf]
        %v946 = vld [vmem:[%s3 + $0xc] sm:$0xf]
        %v947 = vld [vmem:[%s3 + $0x10] sm:$0xf]
        %v948 = vld [vmem:[%s3 + $0x14] sm:$0xf]
        %v949 = vld [vmem:[%s3 + $0x18] sm:$0xf]
        %v950 = vld [vmem:[%s3 + $0x1c] sm:$0xf]
        %v951 = vld [vmem:[%s4] sm:$0xff]
        %v952 = vld [vmem:[%s4 + $0x8] sm:$0xff]
        %v953 = vld [vmem:[%s4 + $0x10] sm:$0xff]
        %v954 = vld [vmem:[%s4 + $0x18] sm:$0xff]
        %v955 = vld [vmem:[%s4 + $0x20] sm:$0xff]
        %v956 = vld [vmem:[%s4 + $0x28] sm:$0xff]
        %v957 = vld [vmem:[%s4 + $0x30] sm:$0xff]
        %v958 = vld [vmem:[%s4 + $0x38] sm:$0xff]
        %960 = vset.pattern.permute.xlu0 0
        %961 = vperm.xlu0 %960, %v951
        %v962 = vpop.permute.xlu0 %961
        %965 = vset.pattern.permute.xlu0 0
        %966 = vperm.xlu0 %965, %v952
        %v967 = vpop.permute.xlu0 %966
        %970 = vset.pattern.permute.xlu0 0
        %971 = vperm.xlu0 %970, %v953
        %v972 = vpop.permute.xlu0 %971
        %975 = vset.pattern.permute.xlu0 0
        %976 = vperm.xlu0 %975, %v954
        %v977 = vpop.permute.xlu0 %976
        %980 = vset.pattern.permute.xlu0 0
        %981 = vperm.xlu0 %980, %v955
        %v982 = vpop.permute.xlu0 %981
        %985 = vset.pattern.permute.xlu0 0
        %986 = vperm.xlu0 %985, %v956
        %v987 = vpop.permute.xlu0 %986
        %990 = vset.pattern.permute.xlu0 0
        %991 = vperm.xlu0 %990, %v957
        %v992 = vpop.permute.xlu0 %991
        %995 = vset.pattern.permute.xlu0 0
        %996 = vperm.xlu0 %995, %v958
        %v997 = vpop.permute.xlu0 %996
        %v1007 = vunpack.c.l.b16 %v943
        %v1008 = vunpack.c.l.b16 %v944
        %v1009 = vunpack.c.l.b16 %v945
        %v1010 = vunpack.c.l.b16 %v946
        %v1011 = vunpack.c.l.b16 %v947
        %v1012 = vunpack.c.l.b16 %v948
        %v1013 = vunpack.c.l.b16 %v949
        %v1014 = vunpack.c.l.b16 %v950
        %v1015 = vpack.c.b16 %v1008, %v1007
        %v1016 = vpack.c.b16 %v1010, %v1009
        %v1017 = vpack.c.b16 %v1012, %v1011
        %v1018 = vpack.c.b16 %v1014, %v1013
        %vm1019 = vcmask 261120
        %v1021 = vsel %vm1019, %v1015, 0
        %v1024 = vsel %vm1019, %v1016, 0
        %v1027 = vsel %vm1019, %v1017, 0
        %v1030 = vsel %vm1019, %v1018, 0
        %1032 = vmatprep.subr.bf16.mxu0 %v938
        %1033 = vmatpush1.bf16.msra.mxu0 %v937
        %1034 = vmatprep.subr.bf16.mxu0 %v941
        %1035 = vmatpush1.bf16.msra.mxu0 %v940
        %1036 = vmatprep.subr.bf16.mxu0 0
        %1037 = vmatpush1.bf16.msra.mxu0 0
        %1038 = vmatprep.subr.bf16.mxu0 0
        %1039 = vmatpush1.bf16.msra.mxu0 0
        %1040 = vmatprep.subr.bf16.mxu0 0
        %1041 = vmatpush1.bf16.msra.mxu0 0
        %1042 = vmatprep.subr.bf16.mxu0 0
        %1043 = vmatpush1.bf16.msra.mxu0 0
        %1044 = vmatprep.subr.bf16.mxu0 0
        %1045 = vmatpush1.bf16.msra.mxu0 0
        %1046 = vmatprep.subr.bf16.mxu0 0
        %1047 = vmatpush1.bf16.msra.mxu0 0
        %1048 = vmatprep.subr.bf16.mxu0 0
        %1049 = vmatpush1.bf16.msra.mxu0 0
        %1050 = vmatprep.subr.bf16.mxu0 0
        %1051 = vmatpush1.bf16.msra.mxu0 0
        %1052 = vmatprep.subr.bf16.mxu0 0
        %1053 = vmatpush1.bf16.msra.mxu0 0
        %1054 = vmatprep.subr.bf16.mxu0 0
        %1055 = vmatpush1.bf16.msra.mxu0 0
        %1056 = vmatprep.subr.bf16.mxu0 0
        %1057 = vmatpush1.bf16.msra.mxu0 0
        %1058 = vmatprep.subr.bf16.mxu0 0
        %1059 = vmatpush1.bf16.msra.mxu0 0
        %1060 = vmatprep.subr.bf16.mxu0 0
        %1061 = vmatpush1.bf16.msra.mxu0 0
        %1062 = vmatprep.subr.bf16.mxu0 0
        %1063 = vmatpush1.bf16.msra.mxu0 0
        %1064 = vmatprep.mubr.bf16.mxu0 0
        %1065 = vmatmul.mubr.bf16.gmra.mrb[0].mxu0 %v1021
        %v1066 = vpop.f32.mrb[0].mxu0
        %v1067 = vadd.f32 %v962, %v1066
        %v1068 = vpop.f32.mrb[0].mxu0
        %v1069 = vadd.f32 %v962, %v1068
        %v1070 = vpop.f32.mrb[0].mxu0
        %v1071 = vadd.f32 %v967, %v1070
        %v1072 = vpop.f32.mrb[0].mxu0
        %v1073 = vadd.f32 %v967, %v1072
        %1074 = vmatprep.mubr.bf16.mxu0 0
        %1075 = vmatmul.mubr.bf16.gmra.mrb[0].mxu0 %v1024
        %v1076 = vpop.f32.mrb[0].mxu0
        %v1077 = vadd.f32 %v972, %v1076
        %v1078 = vpop.f32.mrb[0].mxu0
        %v1079 = vadd.f32 %v972, %v1078
        %v1080 = vpop.f32.mrb[0].mxu0
        %v1081 = vadd.f32 %v977, %v1080
        %v1082 = vpop.f32.mrb[0].mxu0
        %v1083 = vadd.f32 %v977, %v1082
        %1084 = vmatprep.mubr.bf16.mxu0 0
        %1085 = vmatmul.mubr.bf16.gmra.mrb[0].mxu0 %v1027
        %v1086 = vpop.f32.mrb[0].mxu0
        %v1087 = vadd.f32 %v982, %v1086
        %v1088 = vpop.f32.mrb[0].mxu0
        %v1089 = vadd.f32 %v982, %v1088
        %v1090 = vpop.f32.mrb[0].mxu0
        %v1091 = vadd.f32 %v987, %v1090
        %v1092 = vpop.f32.mrb[0].mxu0
        %v1093 = vadd.f32 %v987, %v1092
        %1094 = vmatprep.mubr.bf16.mxu0 0
        %1095 = vmatmul.mubr.bf16.gmra.mrb[0].mxu0 %v1030
        %v1096 = vpop.f32.mrb[0].mxu0
        %v1097 = vadd.f32 %v992, %v1096
        %v1098 = vpop.f32.mrb[0].mxu0
        %v1099 = vadd.f32 %v992, %v1098
        %v1100 = vpop.f32.mrb[0].mxu0
        %v1101 = vadd.f32 %v997, %v1100
        %v1102 = vpop.f32.mrb[0].mxu0
        %v1103 = vadd.f32 %v997, %v1102
        %1104 = vdwg.mxu0
        %1105 = vmatprep.subr.bf16.mxu0 0
        %1106 = vmatpush1.bf16.msra.mxu0 %v939
        %1107 = vmatprep.subr.bf16.mxu0 0
        %1108 = vmatpush1.bf16.msra.mxu0 %v942
        %1109 = vmatprep.subr.bf16.mxu0 0
        %1110 = vmatpush1.bf16.msra.mxu0 0
        %1111 = vmatprep.subr.bf16.mxu0 0
        %1112 = vmatpush1.bf16.msra.mxu0 0
        %1113 = vmatprep.subr.bf16.mxu0 0
        %1114 = vmatpush1.bf16.msra.mxu0 0
        %1115 = vmatprep.subr.bf16.mxu0 0
        %1116 = vmatpush1.bf16.msra.mxu0 0
        %1117 = vmatprep.subr.bf16.mxu0 0
        %1118 = vmatpush1.bf16.msra.mxu0 0
        %1119 = vmatprep.subr.bf16.mxu0 0
        %1120 = vmatpush1.bf16.msra.mxu0 0
        %1121 = vmatprep.subr.bf16.mxu0 0
        %1122 = vmatpush1.bf16.msra.mxu0 0
        %1123 = vmatprep.subr.bf16.mxu0 0
        %1124 = vmatpush1.bf16.msra.mxu0 0
        %1125 = vmatprep.subr.bf16.mxu0 0
        %1126 = vmatpush1.bf16.msra.mxu0 0
        %1127 = vmatprep.subr.bf16.mxu0 0
        %1128 = vmatpush1.bf16.msra.mxu0 0
        %1129 = vmatprep.subr.bf16.mxu0 0
        %1130 = vmatpush1.bf16.msra.mxu0 0
        %1131 = vmatprep.subr.bf16.mxu0 0
        %1132 = vmatpush1.bf16.msra.mxu0 0
        %1133 = vmatprep.subr.bf16.mxu0 0
        %1134 = vmatpush1.bf16.msra.mxu0 0
        %1135 = vmatprep.subr.bf16.mxu0 0
        %1136 = vmatpush1.bf16.msra.mxu0 0
        %1137 = vmatprep.mubr.bf16.mxu0 0
        %1138 = vmatmul.mubr.bf16.gmra.mrb[0].mxu0 %v1021
        %v1139 = vpop.f32.mrb[0].mxu0
        %v1140 = vadd.f32 %v962, %v1139
        %v1141 = vpop.f32.mrb[0].mxu0
        %v1142 = vpop.f32.mrb[0].mxu0
        %v1143 = vadd.f32 %v967, %v1142
        %v1144 = vpop.f32.mrb[0].mxu0
        %1145 = vmatprep.mubr.bf16.mxu0 0
        %1146 = vmatmul.mubr.bf16.gmra.mrb[0].mxu0 %v1024
        %v1147 = vpop.f32.mrb[0].mxu0
        %v1148 = vadd.f32 %v972, %v1147
        %v1149 = vpop.f32.mrb[0].mxu0
        %v1150 = vpop.f32.mrb[0].mxu0
        %v1151 = vadd.f32 %v977, %v1150
        %v1152 = vpop.f32.mrb[0].mxu0
        %1153 = vmatprep.mubr.bf16.mxu0 0
        %1154 = vmatmul.mubr.bf16.gmra.mrb[0].mxu0 %v1027
        %v1155 = vpop.f32.mrb[0].mxu0
        %v1156 = vadd.f32 %v982, %v1155
        %v1157 = vpop.f32.mrb[0].mxu0
        %v1158 = vpop.f32.mrb[0].mxu0
        %v1159 = vadd.f32 %v987, %v1158
        %v1160 = vpop.f32.mrb[0].mxu0
        %1161 = vmatprep.mubr.bf16.mxu0 0
        %1162 = vmatmul.mubr.bf16.gmra.mrb[0].mxu0 %v1030
        %v1163 = vpop.f32.mrb[0].mxu0
        %v1164 = vadd.f32 %v992, %v1163
        %v1165 = vpop.f32.mrb[0].mxu0
        %v1166 = vpop.f32.mrb[0].mxu0
        %v1167 = vadd.f32 %v997, %v1166
        %v1168 = vpop.f32.mrb[0].mxu0
        %1169 = vdwg.mxu0
        %v1170 = vadd.f32 %v331, %v1067
        %v1171 = vadd.f32 %v332, %v1069
        %v1172 = vadd.f32 %v333, %v1140
        %v1173 = vadd.f32 %v334, %v1071
        %v1174 = vadd.f32 %v335, %v1073
        %v1175 = vadd.f32 %v336, %v1143
        %v1176 = vadd.f32 %v337, %v1077
        %v1177 = vadd.f32 %v338, %v1079
        %v1178 = vadd.f32 %v339, %v1148
        %v1179 = vadd.f32 %v340, %v1081
        %v1180 = vadd.f32 %v341, %v1083
        %v1181 = vadd.f32 %v342, %v1151
        %v1182 = vld [vmem:[#allocation4] sm:$0xff]
        %v1183 = vld [vmem:[#allocation4 + $0x8] sm:$0xff]
        %v1184 = vld [vmem:[#allocation4 + $0x10] sm:$0xff]
        %v1185 = vld [vmem:[#allocation4 + $0x18] sm:$0xff]
        %v1186 = vld [vmem:[#allocation4 + $0x20] sm:$0xff]
        %v1187 = vld [vmem:[#allocation4 + $0x28] sm:$0xff]
        %v1188 = vld [vmem:[#allocation4 + $0x30] sm:$0xff]
        %v1189 = vld [vmem:[#allocation4 + $0x38] sm:$0xff]
        %v1190 = vld [vmem:[#allocation4 + $0x40] sm:$0xff]
        %v1191 = vld [vmem:[#allocation4 + $0x48] sm:$0xff]
        %v1192 = vld [vmem:[#allocation4 + $0x50] sm:$0xff]
        %v1193 = vld [vmem:[#allocation4 + $0x58] sm:$0xff]
        %v1194 = vadd.f32 %v1182, %v1087
        %v1195 = vadd.f32 %v1183, %v1089
        %v1196 = vadd.f32 %v1184, %v1156
        %v1197 = vadd.f32 %v1185, %v1091
        %v1198 = vadd.f32 %v1186, %v1093
        %v1199 = vadd.f32 %v1187, %v1159
        %v1200 = vadd.f32 %v1188, %v1097
        %v1201 = vadd.f32 %v1189, %v1099
        %v1202 = vadd.f32 %v1190, %v1164
        %v1203 = vadd.f32 %v1191, %v1101
        %v1204 = vadd.f32 %v1192, %v1103
        %v1205 = vadd.f32 %v1193, %v1167
        %1206 = vst [vmem:[#allocation4] sm:$0xff] %v1194
        %1207 = vst [vmem:[#allocation4 + $0x8] sm:$0xff] %v1195
        %1208 = vst [vmem:[#allocation4 + $0x10] sm:$0xff] %v1196
        %1209 = vst [vmem:[#allocation4 + $0x18] sm:$0xff] %v1197
        %1210 = vst [vmem:[#allocation4 + $0x20] sm:$0xff] %v1198
        %1211 = vst [vmem:[#allocation4 + $0x28] sm:$0xff] %v1199
        %1212 = vst [vmem:[#allocation4 + $0x30] sm:$0xff] %v1200
        %1213 = vst [vmem:[#allocation4 + $0x38] sm:$0xff] %v1201
        %1214 = vst [vmem:[#allocation4 + $0x40] sm:$0xff] %v1202
        %1215 = vst [vmem:[#allocation4 + $0x48] sm:$0xff] %v1203
        %1216 = vst [vmem:[#allocation4 + $0x50] sm:$0xff] %v1204
        %1217 = vst [vmem:[#allocation4 + $0x58] sm:$0xff] %v1205
        %v1218 = vsel %vm328, %v1170, 0.0
        %v1219 = vsel %vm329, %v1171, 0.0
        %v1220 = vsel %vm330, %v1172, 0.0
        %v1221 = vsel %vm328, %v1173, 0.0
        %v1222 = vsel %vm329, %v1174, 0.0
        %v1223 = vsel %vm330, %v1175, 0.0
        %v1224 = vsel %vm328, %v1176, 0.0
        %v1225 = vsel %vm329, %v1177, 0.0
        %v1226 = vsel %vm330, %v1178, 0.0
        %v1227 = vsel %vm328, %v1179, 0.0
        %v1228 = vsel %vm329, %v1180, 0.0
        %v1229 = vsel %vm330, %v1181, 0.0
        %v1230 = vpack.c.bf16 %v1221, %v1218
        %v1231 = vpack.c.bf16 %v1222, %v1219
        %v1232 = vpack.c.bf16 %v1223, %v1220
        %v1233 = vpack.c.bf16 %v1227, %v1224
        %v1234 = vpack.c.bf16 %v1228, %v1225
        %v1235 = vpack.c.bf16 %v1229, %v1226
        %1236 = vst [vmem:[#allocation2 + $0x8] sm:$0xff] %v1230
        %1237 = vst [vmem:[#allocation2 + $0x10] sm:$0xff] %v1231
        %1238 = vst [vmem:[#allocation2 + $0x18] sm:$0xff] %v1232
        %1239 = vst [vmem:[#allocation2 + $0x30] sm:$0xff] %v1233
        %1240 = vst [vmem:[#allocation2 + $0x38] sm:$0xff] %v1234
        %1241 = vst [vmem:[#allocation2 + $0x40] sm:$0xff] %v1235
        %v1242 = vld [vmem:[#allocation2] sm:$0xff]
        %v1243 = vld [vmem:[#allocation2 + $0x8] sm:$0xff]
        %v1244 = vld [vmem:[#allocation2 + $0x10] sm:$0xff]
        %v1245 = vld [vmem:[#allocation2 + $0x18] sm:$0xff]
        %v1246 = vld [vmem:[#allocation2 + $0x28] sm:$0xff]
        %v1247 = vld [vmem:[#allocation2 + $0x30] sm:$0xff]
        %v1248 = vld [vmem:[#allocation2 + $0x38] sm:$0xff]
        %v1249 = vld [vmem:[#allocation2 + $0x40] sm:$0xff]
        %1258 = vrot.lane.b32.xlu0 %v1242, 4
        %v1259 = vpop.permute.xlu0 %1258
        %1260 = vrot.lane.b32.xlu0 %v1243, 4
        %v1261 = vpop.permute.xlu0 %1260
        %1262 = vrot.lane.b32.xlu0 %v1244, 4
        %v1263 = vpop.permute.xlu0 %1262
        %1264 = vrot.lane.b32.xlu0 %v1245, 4
        %v1265 = vpop.permute.xlu0 %1264
        %1266 = vrot.lane.b32.xlu0 %v1246, 4
        %v1267 = vpop.permute.xlu0 %1266
        %1268 = vrot.lane.b32.xlu0 %v1247, 4
        %v1269 = vpop.permute.xlu0 %1268
        %1270 = vrot.lane.b32.xlu0 %v1248, 4
        %v1271 = vpop.permute.xlu0 %1270
        %1272 = vrot.lane.b32.xlu0 %v1249, 4
        %v1273 = vpop.permute.xlu0 %1272
        %vm1274 = vcmask 31744
        %v1275 = vsel %vm1274, %v1259, %v1261
        %v1276 = vsel %vm1274, %v1261, %v1263
        %v1277 = vsel %vm1274, %v1263, %v1265
        %v1278 = vsel %vm1274, %v1267, %v1269
        %v1279 = vsel %vm1274, %v1269, %v1271
        %v1280 = vsel %vm1274, %v1271, %v1273
        %1287 = vst [vmem:[#allocation3] sm:$0xff] %v1275
        %1288 = vst [vmem:[#allocation3 + $0x8] sm:$0xff] %v1276
        %1289 = vst [vmem:[#allocation3 + $0x10] sm:$0xff] %v1277
        %1290 = vst [vmem:[#allocation3 + $0x18] sm:$0xff] %v1278
        %1291 = vst [vmem:[#allocation3 + $0x20] sm:$0xff] %v1279
        %1292 = vst [vmem:[#allocation3 + $0x28] sm:$0xff] %v1280
        %v1293 = vld [vmem:[#allocation2] sm:$0xff]
        %v1294 = vld [vmem:[#allocation2 + $0x8] sm:$0xff]
        %v1295 = vld [vmem:[#allocation2 + $0x10] sm:$0xff]
        %v1296 = vld [vmem:[#allocation2 + $0x18] sm:$0xff]
        %v1297 = vld [vmem:[#allocation2 + $0x28] sm:$0xff]
        %v1298 = vld [vmem:[#allocation2 + $0x30] sm:$0xff]
        %v1299 = vld [vmem:[#allocation2 + $0x38] sm:$0xff]
        %v1300 = vld [vmem:[#allocation2 + $0x40] sm:$0xff]
        %1309 = vrot.lane.b32.xlu0 %v1293, 2
        %v1310 = vpop.permute.xlu0 %1309
        %1311 = vrot.lane.b32.xlu0 %v1294, 2
        %v1312 = vpop.permute.xlu0 %1311
        %1313 = vrot.lane.b32.xlu0 %v1295, 2
        %v1314 = vpop.permute.xlu0 %1313
        %1315 = vrot.lane.b32.xlu0 %v1296, 2
        %v1316 = vpop.permute.xlu0 %1315
        %1317 = vrot.lane.b32.xlu0 %v1297, 2
        %v1318 = vpop.permute.xlu0 %1317
        %1319 = vrot.lane.b32.xlu0 %v1298, 2
        %v1320 = vpop.permute.xlu0 %1319
        %1321 = vrot.lane.b32.xlu0 %v1299, 2
        %v1322 = vpop.permute.xlu0 %1321
        %1323 = vrot.lane.b32.xlu0 %v1300, 2
        %v1324 = vpop.permute.xlu0 %1323
        %v1325 = vsel %vm399, %v1310, %v1312
        %v1326 = vsel %vm399, %v1312, %v1314
        %v1327 = vsel %vm399, %v1314, %v1316
        %v1328 = vsel %vm399, %v1318, %v1320
        %v1329 = vsel %vm399, %v1320, %v1322
        %v1330 = vsel %vm399, %v1322, %v1324
        %1337 = vst [vmem:[#allocation3 + $0x30] sm:$0xff] %v1325
        %1338 = vst [vmem:[#allocation3 + $0x38] sm:$0xff] %v1326
        %1339 = vst [vmem:[#allocation3 + $0x40] sm:$0xff] %v1327
        %1340 = vst [vmem:[#allocation3 + $0x48] sm:$0xff] %v1328
        %1341 = vst [vmem:[#allocation3 + $0x50] sm:$0xff] %v1329
        %1342 = vst [vmem:[#allocation3 + $0x58] sm:$0xff] %v1330
        %v1343 = vld [vmem:[#allocation2 + $0x8] sm:$0xff]
        %v1344 = vld [vmem:[#allocation2 + $0x10] sm:$0xff]
        %v1345 = vld [vmem:[#allocation2 + $0x18] sm:$0xff]
        %v1346 = vld [vmem:[#allocation2 + $0x30] sm:$0xff]
        %v1347 = vld [vmem:[#allocation2 + $0x38] sm:$0xff]
        %v1348 = vld [vmem:[#allocation2 + $0x40] sm:$0xff]
        %1349 = vst [vmem:[#allocation3 + $0x60] sm:$0xff] %v1343
        %1350 = vst [vmem:[#allocation3 + $0x68] sm:$0xff] %v1344
        %1351 = vst [vmem:[#allocation3 + $0x70] sm:$0xff] %v1345
        %1352 = vst [vmem:[#allocation3 + $0x78] sm:$0xff] %v1346
        %1353 = vst [vmem:[#allocation3 + $0x80] sm:$0xff] %v1347
        %1354 = vst [vmem:[#allocation3 + $0x88] sm:$0xff] %v1348
        %v1355 = vld [vmem:[#allocation2 + $0x8] sm:$0xff]
        %v1356 = vld [vmem:[#allocation2 + $0x10] sm:$0xff]
        %v1357 = vld [vmem:[#allocation2 + $0x18] sm:$0xff]
        %v1358 = vld [vmem:[#allocation2 + $0x20] sm:$0xff]
        %v1359 = vld [vmem:[#allocation2 + $0x30] sm:$0xff]
        %v1360 = vld [vmem:[#allocation2 + $0x38] sm:$0xff]
        %v1361 = vld [vmem:[#allocation2 + $0x40] sm:$0xff]
        %v1362 = vld [vmem:[#allocation2 + $0x48] sm:$0xff]
        %1371 = vrot.lane.b32.xlu0 %v1355, 126
        %v1372 = vpop.permute.xlu0 %1371
        %1373 = vrot.lane.b32.xlu0 %v1356, 126
        %v1374 = vpop.permute.xlu0 %1373
        %1375 = vrot.lane.b32.xlu0 %v1357, 126
        %v1376 = vpop.permute.xlu0 %1375
        %1377 = vrot.lane.b32.xlu0 %v1358, 126
        %v1378 = vpop.permute.xlu0 %1377
        %1379 = vrot.lane.b32.xlu0 %v1359, 126
        %v1380 = vpop.permute.xlu0 %1379
        %1381 = vrot.lane.b32.xlu0 %v1360, 126
        %v1382 = vpop.permute.xlu0 %1381
        %1383 = vrot.lane.b32.xlu0 %v1361, 126
        %v1384 = vpop.permute.xlu0 %1383
        %1385 = vrot.lane.b32.xlu0 %v1362, 126
        %v1386 = vpop.permute.xlu0 %1385
        %v1387 = vsel %vm564, %v1372, %v1374
        %v1388 = vsel %vm564, %v1374, %v1376
        %v1389 = vsel %vm564, %v1376, %v1378
        %v1390 = vsel %vm564, %v1380, %v1382
        %v1391 = vsel %vm564, %v1382, %v1384
        %v1392 = vsel %vm564, %v1384, %v1386
        %1399 = vst [vmem:[#allocation3 + $0x90] sm:$0xff] %v1387
        %1400 = vst [vmem:[#allocation3 + $0x98] sm:$0xff] %v1388
        %1401 = vst [vmem:[#allocation3 + $0xa0] sm:$0xff] %v1389
        %1402 = vst [vmem:[#allocation3 + $0xa8] sm:$0xff] %v1390
        %1403 = vst [vmem:[#allocation3 + $0xb0] sm:$0xff] %v1391
        %1404 = vst [vmem:[#allocation3 + $0xb8] sm:$0xff] %v1392
        %v1405 = vld [vmem:[#allocation2 + $0x8] sm:$0xff]
        %v1406 = vld [vmem:[#allocation2 + $0x10] sm:$0xff]
        %v1407 = vld [vmem:[#allocation2 + $0x18] sm:$0xff]
        %v1408 = vld [vmem:[#allocation2 + $0x20] sm:$0xff]
        %v1409 = vld [vmem:[#allocation2 + $0x30] sm:$0xff]
        %v1410 = vld [vmem:[#allocation2 + $0x38] sm:$0xff]
        %v1411 = vld [vmem:[#allocation2 + $0x40] sm:$0xff]
        %v1412 = vld [vmem:[#allocation2 + $0x48] sm:$0xff]
        %1421 = vrot.lane.b32.xlu0 %v1405, 124
        %v1422 = vpop.permute.xlu0 %1421
        %1423 = vrot.lane.b32.xlu0 %v1406, 124
        %v1424 = vpop.permute.xlu0 %1423
        %1425 = vrot.lane.b32.xlu0 %v1407, 124
        %v1426 = vpop.permute.xlu0 %1425
        %1427 = vrot.lane.b32.xlu0 %v1408, 124
        %v1428 = vpop.permute.xlu0 %1427
        %1429 = vrot.lane.b32.xlu0 %v1409, 124
        %v1430 = vpop.permute.xlu0 %1429
        %1431 = vrot.lane.b32.xlu0 %v1410, 124
        %v1432 = vpop.permute.xlu0 %1431
        %1433 = vrot.lane.b32.xlu0 %v1411, 124
        %v1434 = vpop.permute.xlu0 %1433
        %1435 = vrot.lane.b32.xlu0 %v1412, 124
        %v1436 = vpop.permute.xlu0 %1435
        %vm1437 = vcmask 1014784
        %v1438 = vsel %vm1437, %v1422, %v1424
        %v1439 = vsel %vm1437, %v1424, %v1426
        %v1440 = vsel %vm1437, %v1426, %v1428
        %v1441 = vsel %vm1437, %v1430, %v1432
        %v1442 = vsel %vm1437, %v1432, %v1434
        %v1443 = vsel %vm1437, %v1434, %v1436
        %1450 = vst [vmem:[#allocation3 + $0xc0] sm:$0xff] %v1438
        %1451 = vst [vmem:[#allocation3 + $0xc8] sm:$0xff] %v1439
        %1452 = vst [vmem:[#allocation3 + $0xd0] sm:$0xff] %v1440
        %1453 = vst [vmem:[#allocation3 + $0xd8] sm:$0xff] %v1441
        %1454 = vst [vmem:[#allocation3 + $0xe0] sm:$0xff] %v1442
        %1455 = vst [vmem:[#allocation3 + $0xe8] sm:$0xff] %v1443
        %s1456 = scalar_lea.vmem %s1, 64
        %v1457 = vld [vmem:[%s1456] sm:$0xff]
        %v1458 = vld [vmem:[%s1456 + $0x8] sm:$0xff]
        %v1459 = vld [vmem:[%s1456 + $0x10] sm:$0xff]
        %v1460 = vld [vmem:[%s1456 + $0x18] sm:$0xff]
        %v1461 = vld [vmem:[%s1456 + $0x20] sm:$0xff]
        %v1462 = vld [vmem:[%s1456 + $0x28] sm:$0xff]
        %v1463 = vld [vmem:[%s1456 + $0x30] sm:$0xff]
        %v1464 = vld [vmem:[%s1456 + $0x38] sm:$0xff]
        %v1465 = vld [vmem:[#allocation3] sm:$0xff]
        %v1466 = vld [vmem:[#allocation3 + $0x8] sm:$0xff]
        %v1467 = vld [vmem:[#allocation3 + $0x10] sm:$0xff]
        %v1468 = vld [vmem:[#allocation3 + $0x18] sm:$0xff]
        %v1469 = vld [vmem:[#allocation3 + $0x20] sm:$0xff]
        %v1470 = vld [vmem:[#allocation3 + $0x28] sm:$0xff]
        %v1471 = vld [vmem:[#allocation3 + $0x30] sm:$0xff]
        %v1472 = vld [vmem:[#allocation3 + $0x38] sm:$0xff]
        %v1473 = vld [vmem:[#allocation3 + $0x40] sm:$0xff]
        %v1474 = vld [vmem:[#allocation3 + $0x48] sm:$0xff]
        %v1475 = vld [vmem:[#allocation3 + $0x50] sm:$0xff]
        %v1476 = vld [vmem:[#allocation3 + $0x58] sm:$0xff]
        %v1477 = vld [vmem:[#allocation3 + $0x60] sm:$0xff]
        %v1478 = vld [vmem:[#allocation3 + $0x68] sm:$0xff]
        %v1479 = vld [vmem:[#allocation3 + $0x70] sm:$0xff]
        %v1480 = vld [vmem:[#allocation3 + $0x78] sm:$0xff]
        %v1481 = vld [vmem:[#allocation3 + $0x80] sm:$0xff]
        %v1482 = vld [vmem:[#allocation3 + $0x88] sm:$0xff]
        %v1483 = vld [vmem:[#allocation3 + $0x90] sm:$0xff]
        %v1484 = vld [vmem:[#allocation3 + $0x98] sm:$0xff]
        %v1485 = vld [vmem:[#allocation3 + $0xa0] sm:$0xff]
        %v1486 = vld [vmem:[#allocation3 + $0xa8] sm:$0xff]
        %v1487 = vld [vmem:[#allocation3 + $0xb0] sm:$0xff]
        %v1488 = vld [vmem:[#allocation3 + $0xb8] sm:$0xff]
        %v1489 = vld [vmem:[#allocation3 + $0xc0] sm:$0xff]
        %v1490 = vld [vmem:[#allocation3 + $0xc8] sm:$0xff]
        %v1491 = vld [vmem:[#allocation3 + $0xd0] sm:$0xff]
        %v1492 = vld [vmem:[#allocation3 + $0xd8] sm:$0xff]
        %v1493 = vld [vmem:[#allocation3 + $0xe0] sm:$0xff]
        %v1494 = vld [vmem:[#allocation3 + $0xe8] sm:$0xff]
        %v1495 = vld [vmem:[#allocation3 + $0xf0] sm:$0xff]
        %v1496 = vld [vmem:[#allocation3 + $0xf8] sm:$0xff]
        %v1497 = vld [vmem:[#allocation3 + $0x100] sm:$0xff]
        %v1498 = vld [vmem:[#allocation3 + $0x108] sm:$0xff]
        %v1499 = vld [vmem:[#allocation3 + $0x110] sm:$0xff]
        %v1500 = vld [vmem:[#allocation3 + $0x118] sm:$0xff]
        %v1501 = vld [vmem:[#allocation3 + $0x120] sm:$0xff]
        %v1502 = vld [vmem:[#allocation3 + $0x128] sm:$0xff]
        %v1503 = vld [vmem:[#allocation3 + $0x130] sm:$0xff]
        %v1504 = vld [vmem:[#allocation3 + $0x138] sm:$0xff]
        %v1505 = vld [vmem:[#allocation3 + $0x140] sm:$0xff]
        %v1506 = vld [vmem:[#allocation3 + $0x148] sm:$0xff]
        %v1507 = vld [vmem:[#allocation3 + $0x150] sm:$0xff]
        %v1508 = vld [vmem:[#allocation3 + $0x158] sm:$0xff]
        %v1509 = vld [vmem:[#allocation3 + $0x160] sm:$0xff]
        %v1510 = vld [vmem:[#allocation3 + $0x168] sm:$0xff]
        %v1511 = vld [vmem:[#allocation3 + $0x170] sm:$0xff]
        %v1512 = vld [vmem:[#allocation3 + $0x178] sm:$0xff]
        %s1513 = scalar_lea.vmem %s2, 64
        %v1514 = vld [vmem:[%s1513] sm:$0xff]
        %v1515 = vld [vmem:[%s1513 + $0x8] sm:$0xff]
        %v1516 = vld [vmem:[%s1513 + $0x10] sm:$0xff]
        %v1517 = vld [vmem:[%s1513 + $0x18] sm:$0xff]
        %v1518 = vld [vmem:[%s1513 + $0x20] sm:$0xff]
        %v1519 = vld [vmem:[%s1513 + $0x28] sm:$0xff]
        %v1520 = vld [vmem:[%s1513 + $0x30] sm:$0xff]
        %v1521 = vld [vmem:[%s1513 + $0x38] sm:$0xff]
        %1523 = vset.pattern.permute.xlu0 0
        %1524 = vperm.xlu0 %1523, %v1514
        %v1525 = vpop.permute.xlu0 %1524
        %1528 = vset.pattern.permute.xlu0 0
        %1529 = vperm.xlu0 %1528, %v1515
        %v1530 = vpop.permute.xlu0 %1529
        %1533 = vset.pattern.permute.xlu0 0
        %1534 = vperm.xlu0 %1533, %v1516
        %v1535 = vpop.permute.xlu0 %1534
        %1538 = vset.pattern.permute.xlu0 0
        %1539 = vperm.xlu0 %1538, %v1517
        %v1540 = vpop.permute.xlu0 %1539
        %1543 = vset.pattern.permute.xlu0 0
        %1544 = vperm.xlu0 %1543, %v1518
        %v1545 = vpop.permute.xlu0 %1544
        %1548 = vset.pattern.permute.xlu0 0
        %1549 = vperm.xlu0 %1548, %v1519
        %v1550 = vpop.permute.xlu0 %1549
        %1553 = vset.pattern.permute.xlu0 0
        %1554 = vperm.xlu0 %1553, %v1520
        %v1555 = vpop.permute.xlu0 %1554
        %1558 = vset.pattern.permute.xlu0 0
        %1559 = vperm.xlu0 %1558, %v1521
        %v1560 = vpop.permute.xlu0 %1559
        %v1570 = vunpack.c.l.b16 %v1457
        %v1571 = vunpack.c.h.b16 %v1457
        %v1572 = vunpack.c.l.b16 %v1458
        %v1573 = vunpack.c.h.b16 %v1458
        %v1574 = vunpack.c.l.b16 %v1459
        %v1575 = vunpack.c.h.b16 %v1459
        %v1576 = vunpack.c.l.b16 %v1460
        %v1577 = vunpack.c.h.b16 %v1460
        %v1578 = vunpack.c.l.b16 %v1461
        %v1579 = vunpack.c.h.b16 %v1461
        %v1580 = vunpack.c.l.b16 %v1462
        %v1581 = vunpack.c.h.b16 %v1462
        %v1582 = vunpack.c.l.b16 %v1463
        %v1583 = vunpack.c.h.b16 %v1463
        %v1584 = vunpack.c.l.b16 %v1464
        %v1585 = vunpack.c.h.b16 %v1464
        %v1586 = vpack.c.b16 %v1572, %v1570
        %v1587 = vpack.c.b16 %v1573, %v1571
        %v1588 = vpack.c.b16 %v1576, %v1574
        %v1589 = vpack.c.b16 %v1577, %v1575
        %v1590 = vpack.c.b16 %v1580, %v1578
        %v1591 = vpack.c.b16 %v1581, %v1579
        %v1592 = vpack.c.b16 %v1584, %v1582
        %v1593 = vpack.c.b16 %v1585, %v1583
        %1602 = vmatprep.subr.bf16.mxu0 %v1466
        %1603 = vmatpush1.bf16.msra.mxu0 %v1465
        %1604 = vmatprep.subr.bf16.mxu0 %v1469
        %1605 = vmatpush1.bf16.msra.mxu0 %v1468
        %1606 = vmatprep.subr.bf16.mxu0 %v1472
        %1607 = vmatpush1.bf16.msra.mxu0 %v1471
        %1608 = vmatprep.subr.bf16.mxu0 %v1475
        %1609 = vmatpush1.bf16.msra.mxu0 %v1474
        %1610 = vmatprep.subr.bf16.mxu0 %v1478
        %1611 = vmatpush1.bf16.msra.mxu0 %v1477
        %1612 = vmatprep.subr.bf16.mxu0 %v1481
        %1613 = vmatpush1.bf16.msra.mxu0 %v1480
        %1614 = vmatprep.subr.bf16.mxu0 %v1484
        %1615 = vmatpush1.bf16.msra.mxu0 %v1483
        %1616 = vmatprep.subr.bf16.mxu0 %v1487
        %1617 = vmatpush1.bf16.msra.mxu0 %v1486
        %1618 = vmatprep.subr.bf16.mxu0 %v1490
        %1619 = vmatpush1.bf16.msra.mxu0 %v1489
        %1620 = vmatprep.subr.bf16.mxu0 %v1493
        %1621 = vmatpush1.bf16.msra.mxu0 %v1492
        %1622 = vmatprep.subr.bf16.mxu0 %v1496
        %1623 = vmatpush1.bf16.msra.mxu0 %v1495
        %1624 = vmatprep.subr.bf16.mxu0 %v1499
        %1625 = vmatpush1.bf16.msra.mxu0 %v1498
        %1626 = vmatprep.subr.bf16.mxu0 %v1502
        %1627 = vmatpush1.bf16.msra.mxu0 %v1501
        %1628 = vmatprep.subr.bf16.mxu0 %v1505
        %1629 = vmatpush1.bf16.msra.mxu0 %v1504
        %1630 = vmatprep.subr.bf16.mxu0 %v1508
        %1631 = vmatpush1.bf16.msra.mxu0 %v1507
        %1632 = vmatprep.subr.bf16.mxu0 %v1511
        %1633 = vmatpush1.bf16.msra.mxu0 %v1510
        %1634 = vmatprep.mubr.bf16.mxu0 %v1587
        %1635 = vmatmul.mubr.bf16.gmra.mrb[0].mxu0 %v1586
        %v1636 = vpop.f32.mrb[0].mxu0
        %v1637 = vadd.f32 %v1525, %v1636
        %v1638 = vpop.f32.mrb[0].mxu0
        %v1639 = vadd.f32 %v1525, %v1638
        %v1640 = vpop.f32.mrb[0].mxu0
        %v1641 = vadd.f32 %v1530, %v1640
        %v1642 = vpop.f32.mrb[0].mxu0
        %v1643 = vadd.f32 %v1530, %v1642
        %1644 = vmatprep.mubr.bf16.mxu0 %v1589
        %1645 = vmatmul.mubr.bf16.gmra.mrb[0].mxu0 %v1588
        %v1646 = vpop.f32.mrb[0].mxu0
        %v1647 = vadd.f32 %v1535, %v1646
        %v1648 = vpop.f32.mrb[0].mxu0
        %v1649 = vadd.f32 %v1535, %v1648
        %v1650 = vpop.f32.mrb[0].mxu0
        %v1651 = vadd.f32 %v1540, %v1650
        %v1652 = vpop.f32.mrb[0].mxu0
        %v1653 = vadd.f32 %v1540, %v1652
        %1654 = vmatprep.mubr.bf16.mxu0 %v1591
        %1655 = vmatmul.mubr.bf16.gmra.mrb[0].mxu0 %v1590
        %v1656 = vpop.f32.mrb[0].mxu0
        %v1657 = vadd.f32 %v1545, %v1656
        %v1658 = vpop.f32.mrb[0].mxu0
        %v1659 = vadd.f32 %v1545, %v1658
        %v1660 = vpop.f32.mrb[0].mxu0
        %v1661 = vadd.f32 %v1550, %v1660
        %v1662 = vpop.f32.mrb[0].mxu0
        %v1663 = vadd.f32 %v1550, %v1662
        %1664 = vmatprep.mubr.bf16.mxu0 %v1593
        %1665 = vmatmul.mubr.bf16.gmra.mrb[0].mxu0 %v1592
        %v1666 = vpop.f32.mrb[0].mxu0
        %v1667 = vadd.f32 %v1555, %v1666
        %v1668 = vpop.f32.mrb[0].mxu0
        %v1669 = vadd.f32 %v1555, %v1668
        %v1670 = vpop.f32.mrb[0].mxu0
        %v1671 = vadd.f32 %v1560, %v1670
        %v1672 = vpop.f32.mrb[0].mxu0
        %v1673 = vadd.f32 %v1560, %v1672
        %1674 = vdwg.mxu0
        %1675 = vmatprep.subr.bf16.mxu0 0
        %1676 = vmatpush1.bf16.msra.mxu0 %v1467
        %1677 = vmatprep.subr.bf16.mxu0 0
        %1678 = vmatpush1.bf16.msra.mxu0 %v1470
        %1679 = vmatprep.subr.bf16.mxu0 0
        %1680 = vmatpush1.bf16.msra.mxu0 %v1473
        %1681 = vmatprep.subr.bf16.mxu0 0
        %1682 = vmatpush1.bf16.msra.mxu0 %v1476
        %1683 = vmatprep.subr.bf16.mxu0 0
        %1684 = vmatpush1.bf16.msra.mxu0 %v1479
        %1685 = vmatprep.subr.bf16.mxu0 0
        %1686 = vmatpush1.bf16.msra.mxu0 %v1482
        %1687 = vmatprep.subr.bf16.mxu0 0
        %1688 = vmatpush1.bf16.msra.mxu0 %v1485
        %1689 = vmatprep.subr.bf16.mxu0 0
        %1690 = vmatpush1.bf16.msra.mxu0 %v1488
        %1691 = vmatprep.subr.bf16.mxu0 0
        %1692 = vmatpush1.bf16.msra.mxu0 %v1491
        %1693 = vmatprep.subr.bf16.mxu0 0
        %1694 = vmatpush1.bf16.msra.mxu0 %v1494
        %1695 = vmatprep.subr.bf16.mxu0 0
        %1696 = vmatpush1.bf16.msra.mxu0 %v1497
        %1697 = vmatprep.subr.bf16.mxu0 0
        %1698 = vmatpush1.bf16.msra.mxu0 %v1500
        %1699 = vmatprep.subr.bf16.mxu0 0
        %1700 = vmatpush1.bf16.msra.mxu0 %v1503
        %1701 = vmatprep.subr.bf16.mxu0 0
        %1702 = vmatpush1.bf16.msra.mxu0 %v1506
        %1703 = vmatprep.subr.bf16.mxu0 0
        %1704 = vmatpush1.bf16.msra.mxu0 %v1509
        %1705 = vmatprep.subr.bf16.mxu0 0
        %1706 = vmatpush1.bf16.msra.mxu0 %v1512
        %1707 = vmatprep.mubr.bf16.mxu0 %v1587
        %1708 = vmatmul.mubr.bf16.gmra.mrb[0].mxu0 %v1586
        %v1709 = vpop.f32.mrb[0].mxu0
        %v1710 = vadd.f32 %v1525, %v1709
        %v1711 = vpop.f32.mrb[0].mxu0
        %v1712 = vpop.f32.mrb[0].mxu0
        %v1713 = vadd.f32 %v1530, %v1712
        %v1714 = vpop.f32.mrb[0].mxu0
        %1715 = vmatprep.mubr.bf16.mxu0 %v1589
        %1716 = vmatmul.mubr.bf16.gmra.mrb[0].mxu0 %v1588
        %v1717 = vpop.f32.mrb[0].mxu0
        %v1718 = vadd.f32 %v1535, %v1717
        %v1719 = vpop.f32.mrb[0].mxu0
        %v1720 = vpop.f32.mrb[0].mxu0
        %v1721 = vadd.f32 %v1540, %v1720
        %v1722 = vpop.f32.mrb[0].mxu0
        %1723 = vmatprep.mubr.bf16.mxu0 %v1591
        %1724 = vmatmul.mubr.bf16.gmra.mrb[0].mxu0 %v1590
        %v1725 = vpop.f32.mrb[0].mxu0
        %v1726 = vadd.f32 %v1545, %v1725
        %v1727 = vpop.f32.mrb[0].mxu0
        %v1728 = vpop.f32.mrb[0].mxu0
        %v1729 = vadd.f32 %v1550, %v1728
        %v1730 = vpop.f32.mrb[0].mxu0
        %1731 = vmatprep.mubr.bf16.mxu0 %v1593
        %1732 = vmatmul.mubr.bf16.gmra.mrb[0].mxu0 %v1592
        %v1733 = vpop.f32.mrb[0].mxu0
        %v1734 = vadd.f32 %v1555, %v1733
        %v1735 = vpop.f32.mrb[0].mxu0
        %v1736 = vpop.f32.mrb[0].mxu0
        %v1737 = vadd.f32 %v1560, %v1736
        %v1738 = vpop.f32.mrb[0].mxu0
        %1739 = vdwg.mxu0
        %v1740 = vtanh.pop %v1637
        %v1741 = vtanh.pop %v1639
        %v1742 = vtanh.pop %v1710
        %v1743 = vtanh.pop %v1641
        %v1744 = vtanh.pop %v1643
        %v1745 = vtanh.pop %v1713
        %v1746 = vtanh.pop %v1647
        %v1747 = vtanh.pop %v1649
        %v1748 = vtanh.pop %v1718
        %v1749 = vtanh.pop %v1651
        %v1750 = vtanh.pop %v1653
        %v1751 = vtanh.pop %v1721
        %v1752 = vmul.f32 %v1657, 0.5
        %v1753 = vmul.f32 %v1659, 0.5
        %v1754 = vmul.f32 %v1726, 0.5
        %v1755 = vmul.f32 %v1661, 0.5
        %v1756 = vmul.f32 %v1663, 0.5
        %v1757 = vmul.f32 %v1729, 0.5
        %v1758 = vmul.f32 %v1667, 0.5
        %v1759 = vmul.f32 %v1669, 0.5
        %v1760 = vmul.f32 %v1734, 0.5
        %v1761 = vmul.f32 %v1671, 0.5
        %v1762 = vmul.f32 %v1673, 0.5
        %v1763 = vmul.f32 %v1737, 0.5
        %v1764 = vtanh.pop %v1752
        %v1765 = vtanh.pop %v1753
        %v1766 = vtanh.pop %v1754
        %v1767 = vtanh.pop %v1755
        %v1768 = vtanh.pop %v1756
        %v1769 = vtanh.pop %v1757
        %v1770 = vtanh.pop %v1758
        %v1771 = vtanh.pop %v1759
        %v1772 = vtanh.pop %v1760
        %v1773 = vtanh.pop %v1761
        %v1774 = vtanh.pop %v1762
        %v1775 = vtanh.pop %v1763
        %v1776 = vmul.f32 %v1764, 0.5
        %v1777 = vmul.f32 %v1765, 0.5
        %v1778 = vmul.f32 %v1766, 0.5
        %v1779 = vmul.f32 %v1767, 0.5
        %v1780 = vmul.f32 %v1768, 0.5
        %v1781 = vmul.f32 %v1769, 0.5
        %v1782 = vmul.f32 %v1770, 0.5
        %v1783 = vmul.f32 %v1771, 0.5
        %v1784 = vmul.f32 %v1772, 0.5
        %v1785 = vmul.f32 %v1773, 0.5
        %v1786 = vmul.f32 %v1774, 0.5
        %v1787 = vmul.f32 %v1775, 0.5
        %v1788 = vadd.f32 %v1776, 0.5
        %v1789 = vadd.f32 %v1777, 0.5
        %v1790 = vadd.f32 %v1778, 0.5
        %v1791 = vadd.f32 %v1779, 0.5
        %v1792 = vadd.f32 %v1780, 0.5
        %v1793 = vadd.f32 %v1781, 0.5
        %v1794 = vadd.f32 %v1782, 0.5
        %v1795 = vadd.f32 %v1783, 0.5
        %v1796 = vadd.f32 %v1784, 0.5
        %v1797 = vadd.f32 %v1785, 0.5
        %v1798 = vadd.f32 %v1786, 0.5
        %v1799 = vadd.f32 %v1787, 0.5
        %v1800 = vmul.f32 %v1740, %v1788
        %v1801 = vmul.f32 %v1741, %v1789
        %v1802 = vmul.f32 %v1742, %v1790
        %v1803 = vmul.f32 %v1743, %v1791
        %v1804 = vmul.f32 %v1744, %v1792
        %v1805 = vmul.f32 %v1745, %v1793
        %v1806 = vmul.f32 %v1746, %v1794
        %v1807 = vmul.f32 %v1747, %v1795
        %v1808 = vmul.f32 %v1748, %v1796
        %v1809 = vmul.f32 %v1749, %v1797
        %v1810 = vmul.f32 %v1750, %v1798
        %v1811 = vmul.f32 %v1751, %v1799
        %v1812 = vpack.c.bf16 %v1803, %v1800
        %v1813 = vpack.c.bf16 %v1804, %v1801
        %v1814 = vpack.c.bf16 %v1805, %v1802
        %v1815 = vpack.c.bf16 %v1809, %v1806
        %v1816 = vpack.c.bf16 %v1810, %v1807
        %v1817 = vpack.c.bf16 %v1811, %v1808
        %s1818 = scalar_lea.vmem %s3, 32
        %v1819 = vld [vmem:[%s1818] sm:$0xf]
        %v1820 = vld [vmem:[%s1818 + $0x4] sm:$0xf]
        %v1821 = vld [vmem:[%s1818 + $0x8] sm:$0xf]
        %v1822 = vld [vmem:[%s1818 + $0xc] sm:$0xf]
        %v1823 = vld [vmem:[%s1818 + $0x10] sm:$0xf]
        %v1824 = vld [vmem:[%s1818 + $0x14] sm:$0xf]
        %v1825 = vld [vmem:[%s1818 + $0x18] sm:$0xf]
        %v1826 = vld [vmem:[%s1818 + $0x1c] sm:$0xf]
        %s1827 = scalar_lea.vmem %s4, 64
        %v1828 = vld [vmem:[%s1827] sm:$0xff]
        %v1829 = vld [vmem:[%s1827 + $0x8] sm:$0xff]
        %v1830 = vld [vmem:[%s1827 + $0x10] sm:$0xff]
        %v1831 = vld [vmem:[%s1827 + $0x18] sm:$0xff]
        %v1832 = vld [vmem:[%s1827 + $0x20] sm:$0xff]
        %v1833 = vld [vmem:[%s1827 + $0x28] sm:$0xff]
        %v1834 = vld [vmem:[%s1827 + $0x30] sm:$0xff]
        %v1835 = vld [vmem:[%s1827 + $0x38] sm:$0xff]
        %1837 = vset.pattern.permute.xlu0 0
        %1838 = vperm.xlu0 %1837, %v1828
        %v1839 = vpop.permute.xlu0 %1838
        %1842 = vset.pattern.permute.xlu0 0
        %1843 = vperm.xlu0 %1842, %v1829
        %v1844 = vpop.permute.xlu0 %1843
        %1847 = vset.pattern.permute.xlu0 0
        %1848 = vperm.xlu0 %1847, %v1830
        %v1849 = vpop.permute.xlu0 %1848
        %1852 = vset.pattern.permute.xlu0 0
        %1853 = vperm.xlu0 %1852, %v1831
        %v1854 = vpop.permute.xlu0 %1853
        %1857 = vset.pattern.permute.xlu0 0
        %1858 = vperm.xlu0 %1857, %v1832
        %v1859 = vpop.permute.xlu0 %1858
        %1862 = vset.pattern.permute.xlu0 0
        %1863 = vperm.xlu0 %1862, %v1833
        %v1864 = vpop.permute.xlu0 %1863
        %1867 = vset.pattern.permute.xlu0 0
        %1868 = vperm.xlu0 %1867, %v1834
        %v1869 = vpop.permute.xlu0 %1868
        %1872 = vset.pattern.permute.xlu0 0
        %1873 = vperm.xlu0 %1872, %v1835
        %v1874 = vpop.permute.xlu0 %1873
        %v1884 = vunpack.c.l.b16 %v1819
        %v1885 = vunpack.c.l.b16 %v1820
        %v1886 = vunpack.c.l.b16 %v1821
        %v1887 = vunpack.c.l.b16 %v1822
        %v1888 = vunpack.c.l.b16 %v1823
        %v1889 = vunpack.c.l.b16 %v1824
        %v1890 = vunpack.c.l.b16 %v1825
        %v1891 = vunpack.c.l.b16 %v1826
        %v1892 = vpack.c.b16 %v1885, %v1884
        %v1893 = vpack.c.b16 %v1887, %v1886
        %v1894 = vpack.c.b16 %v1889, %v1888
        %v1895 = vpack.c.b16 %v1891, %v1890
        %v1897 = vsel %vm1019, %v1892, 0
        %v1900 = vsel %vm1019, %v1893, 0
        %v1903 = vsel %vm1019, %v1894, 0
        %v1906 = vsel %vm1019, %v1895, 0
        %1908 = vmatprep.subr.bf16.mxu0 %v1813
        %1909 = vmatpush1.bf16.msra.mxu0 %v1812
        %1910 = vmatprep.subr.bf16.mxu0 %v1816
        %1911 = vmatpush1.bf16.msra.mxu0 %v1815
        %1912 = vmatprep.subr.bf16.mxu0 0
        %1913 = vmatpush1.bf16.msra.mxu0 0
        %1914 = vmatprep.subr.bf16.mxu0 0
        %1915 = vmatpush1.bf16.msra.mxu0 0
        %1916 = vmatprep.subr.bf16.mxu0 0
        %1917 = vmatpush1.bf16.msra.mxu0 0
        %1918 = vmatprep.subr.bf16.mxu0 0
        %1919 = vmatpush1.bf16.msra.mxu0 0
        %1920 = vmatprep.subr.bf16.mxu0 0
        %1921 = vmatpush1.bf16.msra.mxu0 0
        %1922 = vmatprep.subr.bf16.mxu0 0
        %1923 = vmatpush1.bf16.msra.mxu0 0
        %1924 = vmatprep.subr.bf16.mxu0 0
        %1925 = vmatpush1.bf16.msra.mxu0 0
        %1926 = vmatprep.subr.bf16.mxu0 0
        %1927 = vmatpush1.bf16.msra.mxu0 0
        %1928 = vmatprep.subr.bf16.mxu0 0
        %1929 = vmatpush1.bf16.msra.mxu0 0
        %1930 = vmatprep.subr.bf16.mxu0 0
        %1931 = vmatpush1.bf16.msra.mxu0 0
        %1932 = vmatprep.subr.bf16.mxu0 0
        %1933 = vmatpush1.bf16.msra.mxu0 0
        %1934 = vmatprep.subr.bf16.mxu0 0
        %1935 = vmatpush1.bf16.msra.mxu0 0
        %1936 = vmatprep.subr.bf16.mxu0 0
        %1937 = vmatpush1.bf16.msra.mxu0 0
        %1938 = vmatprep.subr.bf16.mxu0 0
        %1939 = vmatpush1.bf16.msra.mxu0 0
        %1940 = vmatprep.mubr.bf16.mxu0 0
        %1941 = vmatmul.mubr.bf16.gmra.mrb[0].mxu0 %v1897
        %v1942 = vpop.f32.mrb[0].mxu0
        %v1943 = vadd.f32 %v1839, %v1942
        %v1944 = vpop.f32.mrb[0].mxu0
        %v1945 = vadd.f32 %v1839, %v1944
        %v1946 = vpop.f32.mrb[0].mxu0
        %v1947 = vadd.f32 %v1844, %v1946
        %v1948 = vpop.f32.mrb[0].mxu0
        %v1949 = vadd.f32 %v1844, %v1948
        %1950 = vmatprep.mubr.bf16.mxu0 0
        %1951 = vmatmul.mubr.bf16.gmra.mrb[0].mxu0 %v1900
        %v1952 = vpop.f32.mrb[0].mxu0
        %v1953 = vadd.f32 %v1849, %v1952
        %v1954 = vpop.f32.mrb[0].mxu0
        %v1955 = vadd.f32 %v1849, %v1954
        %v1956 = vpop.f32.mrb[0].mxu0
        %v1957 = vadd.f32 %v1854, %v1956
        %v1958 = vpop.f32.mrb[0].mxu0
        %v1959 = vadd.f32 %v1854, %v1958
        %1960 = vmatprep.mubr.bf16.mxu0 0
        %1961 = vmatmul.mubr.bf16.gmra.mrb[0].mxu0 %v1903
        %v1962 = vpop.f32.mrb[0].mxu0
        %v1963 = vadd.f32 %v1859, %v1962
        %v1964 = vpop.f32.mrb[0].mxu0
        %v1965 = vadd.f32 %v1859, %v1964
        %v1966 = vpop.f32.mrb[0].mxu0
        %v1967 = vadd.f32 %v1864, %v1966
        %v1968 = vpop.f32.mrb[0].mxu0
        %v1969 = vadd.f32 %v1864, %v1968
        %1970 = vmatprep.mubr.bf16.mxu0 0
        %1971 = vmatmul.mubr.bf16.gmra.mrb[0].mxu0 %v1906
        %v1972 = vpop.f32.mrb[0].mxu0
        %v1973 = vadd.f32 %v1869, %v1972
        %v1974 = vpop.f32.mrb[0].mxu0
        %v1975 = vadd.f32 %v1869, %v1974
        %v1976 = vpop.f32.mrb[0].mxu0
        %v1977 = vadd.f32 %v1874, %v1976
        %v1978 = vpop.f32.mrb[0].mxu0
        %v1979 = vadd.f32 %v1874, %v1978
        %1980 = vdwg.mxu0
        %1981 = vmatprep.subr.bf16.mxu0 0
        %1982 = vmatpush1.bf16.msra.mxu0 %v1814
        %1983 = vmatprep.subr.bf16.mxu0 0
        %1984 = vmatpush1.bf16.msra.mxu0 %v1817
        %1985 = vmatprep.subr.bf16.mxu0 0
        %1986 = vmatpush1.bf16.msra.mxu0 0
        %1987 = vmatprep.subr.bf16.mxu0 0
        %1988 = vmatpush1.bf16.msra.mxu0 0
        %1989 = vmatprep.subr.bf16.mxu0 0
        %1990 = vmatpush1.bf16.msra.mxu0 0
        %1991 = vmatprep.subr.bf16.mxu0 0
        %1992 = vmatpush1.bf16.msra.mxu0 0
        %1993 = vmatprep.subr.bf16.mxu0 0
        %1994 = vmatpush1.bf16.msra.mxu0 0
        %1995 = vmatprep.subr.bf16.mxu0 0
        %1996 = vmatpush1.bf16.msra.mxu0 0
        %1997 = vmatprep.subr.bf16.mxu0 0
        %1998 = vmatpush1.bf16.msra.mxu0 0
        %1999 = vmatprep.subr.bf16.mxu0 0
        %2000 = vmatpush1.bf16.msra.mxu0 0
        %2001 = vmatprep.subr.bf16.mxu0 0
        %2002 = vmatpush1.bf16.msra.mxu0 0
        %2003 = vmatprep.subr.bf16.mxu0 0
        %2004 = vmatpush1.bf16.msra.mxu0 0
        %2005 = vmatprep.subr.bf16.mxu0 0
        %2006 = vmatpush1.bf16.msra.mxu0 0
        %2007 = vmatprep.subr.bf16.mxu0 0
        %2008 = vmatpush1.bf16.msra.mxu0 0
        %2009 = vmatprep.subr.bf16.mxu0 0
        %2010 = vmatpush1.bf16.msra.mxu0 0
        %2011 = vmatprep.subr.bf16.mxu0 0
        %2012 = vmatpush1.bf16.msra.mxu0 0
        %2013 = vmatprep.mubr.bf16.mxu0 0
        %2014 = vmatmul.mubr.bf16.gmra.mrb[0].mxu0 %v1897
        %v2015 = vpop.f32.mrb[0].mxu0
        %v2016 = vadd.f32 %v1839, %v2015
        %v2017 = vpop.f32.mrb[0].mxu0
        %v2018 = vpop.f32.mrb[0].mxu0
        %v2019 = vadd.f32 %v1844, %v2018
        %v2020 = vpop.f32.mrb[0].mxu0
        %2021 = vmatprep.mubr.bf16.mxu0 0
        %2022 = vmatmul.mubr.bf16.gmra.mrb[0].mxu0 %v1900
        %v2023 = vpop.f32.mrb[0].mxu0
        %v2024 = vadd.f32 %v1849, %v2023
        %v2025 = vpop.f32.mrb[0].mxu0
        %v2026 = vpop.f32.mrb[0].mxu0
        %v2027 = vadd.f32 %v1854, %v2026
        %v2028 = vpop.f32.mrb[0].mxu0
        %2029 = vmatprep.mubr.bf16.mxu0 0
        %2030 = vmatmul.mubr.bf16.gmra.mrb[0].mxu0 %v1903
        %v2031 = vpop.f32.mrb[0].mxu0
        %v2032 = vadd.f32 %v1859, %v2031
        %v2033 = vpop.f32.mrb[0].mxu0
        %v2034 = vpop.f32.mrb[0].mxu0
        %v2035 = vadd.f32 %v1864, %v2034
        %v2036 = vpop.f32.mrb[0].mxu0
        %2037 = vmatprep.mubr.bf16.mxu0 0
        %2038 = vmatmul.mubr.bf16.gmra.mrb[0].mxu0 %v1906
        %v2039 = vpop.f32.mrb[0].mxu0
        %v2040 = vadd.f32 %v1869, %v2039
        %v2041 = vpop.f32.mrb[0].mxu0
        %v2042 = vpop.f32.mrb[0].mxu0
        %v2043 = vadd.f32 %v1874, %v2042
        %v2044 = vpop.f32.mrb[0].mxu0
        %2045 = vdwg.mxu0
        %v2046 = vadd.f32 %v1170, %v1943
        %v2047 = vadd.f32 %v1171, %v1945
        %v2048 = vadd.f32 %v1172, %v2016
        %v2049 = vadd.f32 %v1173, %v1947
        %v2050 = vadd.f32 %v1174, %v1949
        %v2051 = vadd.f32 %v1175, %v2019
        %v2052 = vadd.f32 %v1176, %v1953
        %v2053 = vadd.f32 %v1177, %v1955
        %v2054 = vadd.f32 %v1178, %v2024
        %v2055 = vadd.f32 %v1179, %v1957
        %v2056 = vadd.f32 %v1180, %v1959
        %v2057 = vadd.f32 %v1181, %v2027
        %v2058 = vld [vmem:[#allocation4] sm:$0xff]
        %v2059 = vld [vmem:[#allocation4 + $0x8] sm:$0xff]
        %v2060 = vld [vmem:[#allocation4 + $0x10] sm:$0xff]
        %v2061 = vld [vmem:[#allocation4 + $0x18] sm:$0xff]
        %v2062 = vld [vmem:[#allocation4 + $0x20] sm:$0xff]
        %v2063 = vld [vmem:[#allocation4 + $0x28] sm:$0xff]
        %v2064 = vld [vmem:[#allocation4 + $0x30] sm:$0xff]
        %v2065 = vld [vmem:[#allocation4 + $0x38] sm:$0xff]
        %v2066 = vld [vmem:[#allocation4 + $0x40] sm:$0xff]
        %v2067 = vld [vmem:[#allocation4 + $0x48] sm:$0xff]
        %v2068 = vld [vmem:[#allocation4 + $0x50] sm:$0xff]
        %v2069 = vld [vmem:[#allocation4 + $0x58] sm:$0xff]
        %v2070 = vadd.f32 %v2058, %v1963
        %v2071 = vadd.f32 %v2059, %v1965
        %v2072 = vadd.f32 %v2060, %v2032
        %v2073 = vadd.f32 %v2061, %v1967
        %v2074 = vadd.f32 %v2062, %v1969
        %v2075 = vadd.f32 %v2063, %v2035
        %v2076 = vadd.f32 %v2064, %v1973
        %v2077 = vadd.f32 %v2065, %v1975
        %v2078 = vadd.f32 %v2066, %v2040
        %v2079 = vadd.f32 %v2067, %v1977
        %v2080 = vadd.f32 %v2068, %v1979
        %v2081 = vadd.f32 %v2069, %v2043
        %2082 = vst [vmem:[#allocation4] sm:$0xff] %v2070
        %2083 = vst [vmem:[#allocation4 + $0x8] sm:$0xff] %v2071
        %2084 = vst [vmem:[#allocation4 + $0x10] sm:$0xff] %v2072
        %2085 = vst [vmem:[#allocation4 + $0x18] sm:$0xff] %v2073
        %2086 = vst [vmem:[#allocation4 + $0x20] sm:$0xff] %v2074
        %2087 = vst [vmem:[#allocation4 + $0x28] sm:$0xff] %v2075
        %2088 = vst [vmem:[#allocation4 + $0x30] sm:$0xff] %v2076
        %2089 = vst [vmem:[#allocation4 + $0x38] sm:$0xff] %v2077
        %2090 = vst [vmem:[#allocation4 + $0x40] sm:$0xff] %v2078
        %2091 = vst [vmem:[#allocation4 + $0x48] sm:$0xff] %v2079
        %2092 = vst [vmem:[#allocation4 + $0x50] sm:$0xff] %v2080
        %2093 = vst [vmem:[#allocation4 + $0x58] sm:$0xff] %v2081
        %v2094 = vsel %vm328, %v2046, 0.0
        %v2095 = vsel %vm329, %v2047, 0.0
        %v2096 = vsel %vm330, %v2048, 0.0
        %v2097 = vsel %vm328, %v2049, 0.0
        %v2098 = vsel %vm329, %v2050, 0.0
        %v2099 = vsel %vm330, %v2051, 0.0
        %v2100 = vsel %vm328, %v2052, 0.0
        %v2101 = vsel %vm329, %v2053, 0.0
        %v2102 = vsel %vm330, %v2054, 0.0
        %v2103 = vsel %vm328, %v2055, 0.0
        %v2104 = vsel %vm329, %v2056, 0.0
        %v2105 = vsel %vm330, %v2057, 0.0
        %v2106 = vpack.c.bf16 %v2097, %v2094
        %v2107 = vpack.c.bf16 %v2098, %v2095
        %v2108 = vpack.c.bf16 %v2099, %v2096
        %v2109 = vpack.c.bf16 %v2103, %v2100
        %v2110 = vpack.c.bf16 %v2104, %v2101
        %v2111 = vpack.c.bf16 %v2105, %v2102
        %2112 = vst [vmem:[#allocation2 + $0x8] sm:$0xff] %v2106
        %2113 = vst [vmem:[#allocation2 + $0x10] sm:$0xff] %v2107
        %2114 = vst [vmem:[#allocation2 + $0x18] sm:$0xff] %v2108
        %2115 = vst [vmem:[#allocation2 + $0x30] sm:$0xff] %v2109
        %2116 = vst [vmem:[#allocation2 + $0x38] sm:$0xff] %v2110
        %2117 = vst [vmem:[#allocation2 + $0x40] sm:$0xff] %v2111
        %v2118 = vld [vmem:[#allocation2] sm:$0xff]
        %v2119 = vld [vmem:[#allocation2 + $0x8] sm:$0xff]
        %v2120 = vld [vmem:[#allocation2 + $0x10] sm:$0xff]
        %v2121 = vld [vmem:[#allocation2 + $0x18] sm:$0xff]
        %v2122 = vld [vmem:[#allocation2 + $0x28] sm:$0xff]
        %v2123 = vld [vmem:[#allocation2 + $0x30] sm:$0xff]
        %v2124 = vld [vmem:[#allocation2 + $0x38] sm:$0xff]
        %v2125 = vld [vmem:[#allocation2 + $0x40] sm:$0xff]
        %2134 = vrot.lane.b32.xlu0 %v2118, 8
        %v2135 = vpop.permute.xlu0 %2134
        %2136 = vrot.lane.b32.xlu0 %v2119, 8
        %v2137 = vpop.permute.xlu0 %2136
        %2138 = vrot.lane.b32.xlu0 %v2120, 8
        %v2139 = vpop.permute.xlu0 %2138
        %2140 = vrot.lane.b32.xlu0 %v2121, 8
        %v2141 = vpop.permute.xlu0 %2140
        %2142 = vrot.lane.b32.xlu0 %v2122, 8
        %v2143 = vpop.permute.xlu0 %2142
        %2144 = vrot.lane.b32.xlu0 %v2123, 8
        %v2145 = vpop.permute.xlu0 %2144
        %2146 = vrot.lane.b32.xlu0 %v2124, 8
        %v2147 = vpop.permute.xlu0 %2146
        %2148 = vrot.lane.b32.xlu0 %v2125, 8
        %v2149 = vpop.permute.xlu0 %2148
        %vm2150 = vcmask 64512
        %v2151 = vsel %vm2150, %v2135, %v2137
        %v2152 = vsel %vm2150, %v2137, %v2139
        %v2153 = vsel %vm2150, %v2139, %v2141
        %v2154 = vsel %vm2150, %v2143, %v2145
        %v2155 = vsel %vm2150, %v2145, %v2147
        %v2156 = vsel %vm2150, %v2147, %v2149
        %2163 = vst [vmem:[#allocation3] sm:$0xff] %v2151
        %2164 = vst [vmem:[#allocation3 + $0x8] sm:$0xff] %v2152
        %2165 = vst [vmem:[#allocation3 + $0x10] sm:$0xff] %v2153
        %2166 = vst [vmem:[#allocation3 + $0x18] sm:$0xff] %v2154
        %2167 = vst [vmem:[#allocation3 + $0x20] sm:$0xff] %v2155
        %2168 = vst [vmem:[#allocation3 + $0x28] sm:$0xff] %v2156
        %v2169 = vld [vmem:[#allocation2] sm:$0xff]
        %v2170 = vld [vmem:[#allocation2 + $0x8] sm:$0xff]
        %v2171 = vld [vmem:[#allocation2 + $0x10] sm:$0xff]
        %v2172 = vld [vmem:[#allocation2 + $0x18] sm:$0xff]
        %v2173 = vld [vmem:[#allocation2 + $0x28] sm:$0xff]
        %v2174 = vld [vmem:[#allocation2 + $0x30] sm:$0xff]
        %v2175 = vld [vmem:[#allocation2 + $0x38] sm:$0xff]
        %v2176 = vld [vmem:[#allocation2 + $0x40] sm:$0xff]
        %2185 = vrot.lane.b32.xlu0 %v2169, 4
        %v2186 = vpop.permute.xlu0 %2185
        %2187 = vrot.lane.b32.xlu0 %v2170, 4
        %v2188 = vpop.permute.xlu0 %2187
        %2189 = vrot.lane.b32.xlu0 %v2171, 4
        %v2190 = vpop.permute.xlu0 %2189
        %2191 = vrot.lane.b32.xlu0 %v2172, 4
        %v2192 = vpop.permute.xlu0 %2191
        %2193 = vrot.lane.b32.xlu0 %v2173, 4
        %v2194 = vpop.permute.xlu0 %2193
        %2195 = vrot.lane.b32.xlu0 %v2174, 4
        %v2196 = vpop.permute.xlu0 %2195
        %2197 = vrot.lane.b32.xlu0 %v2175, 4
        %v2198 = vpop.permute.xlu0 %2197
        %2199 = vrot.lane.b32.xlu0 %v2176, 4
        %v2200 = vpop.permute.xlu0 %2199
        %v2201 = vsel %vm1274, %v2186, %v2188
        %v2202 = vsel %vm1274, %v2188, %v2190
        %v2203 = vsel %vm1274, %v2190, %v2192
        %v2204 = vsel %vm1274, %v2194, %v2196
        %v2205 = vsel %vm1274, %v2196, %v2198
        %v2206 = vsel %vm1274, %v2198, %v2200
        %2213 = vst [vmem:[#allocation3 + $0x30] sm:$0xff] %v2201
        %2214 = vst [vmem:[#allocation3 + $0x38] sm:$0xff] %v2202
        %2215 = vst [vmem:[#allocation3 + $0x40] sm:$0xff] %v2203
        %2216 = vst [vmem:[#allocation3 + $0x48] sm:$0xff] %v2204
        %2217 = vst [vmem:[#allocation3 + $0x50] sm:$0xff] %v2205
        %2218 = vst [vmem:[#allocation3 + $0x58] sm:$0xff] %v2206
        %v2219 = vld [vmem:[#allocation2 + $0x8] sm:$0xff]
        %v2220 = vld [vmem:[#allocation2 + $0x10] sm:$0xff]
        %v2221 = vld [vmem:[#allocation2 + $0x18] sm:$0xff]
        %v2222 = vld [vmem:[#allocation2 + $0x30] sm:$0xff]
        %v2223 = vld [vmem:[#allocation2 + $0x38] sm:$0xff]
        %v2224 = vld [vmem:[#allocation2 + $0x40] sm:$0xff]
        %2225 = vst [vmem:[#allocation3 + $0x60] sm:$0xff] %v2219
        %2226 = vst [vmem:[#allocation3 + $0x68] sm:$0xff] %v2220
        %2227 = vst [vmem:[#allocation3 + $0x70] sm:$0xff] %v2221
        %2228 = vst [vmem:[#allocation3 + $0x78] sm:$0xff] %v2222
        %2229 = vst [vmem:[#allocation3 + $0x80] sm:$0xff] %v2223
        %2230 = vst [vmem:[#allocation3 + $0x88] sm:$0xff] %v2224
        %v2231 = vld [vmem:[#allocation2 + $0x8] sm:$0xff]
        %v2232 = vld [vmem:[#allocation2 + $0x10] sm:$0xff]
        %v2233 = vld [vmem:[#allocation2 + $0x18] sm:$0xff]
        %v2234 = vld [vmem:[#allocation2 + $0x20] sm:$0xff]
        %v2235 = vld [vmem:[#allocation2 + $0x30] sm:$0xff]
        %v2236 = vld [vmem:[#allocation2 + $0x38] sm:$0xff]
        %v2237 = vld [vmem:[#allocation2 + $0x40] sm:$0xff]
        %v2238 = vld [vmem:[#allocation2 + $0x48] sm:$0xff]
        %2247 = vrot.lane.b32.xlu0 %v2231, 124
        %v2248 = vpop.permute.xlu0 %2247
        %2249 = vrot.lane.b32.xlu0 %v2232, 124
        %v2250 = vpop.permute.xlu0 %2249
        %2251 = vrot.lane.b32.xlu0 %v2233, 124
        %v2252 = vpop.permute.xlu0 %2251
        %2253 = vrot.lane.b32.xlu0 %v2234, 124
        %v2254 = vpop.permute.xlu0 %2253
        %2255 = vrot.lane.b32.xlu0 %v2235, 124
        %v2256 = vpop.permute.xlu0 %2255
        %2257 = vrot.lane.b32.xlu0 %v2236, 124
        %v2258 = vpop.permute.xlu0 %2257
        %2259 = vrot.lane.b32.xlu0 %v2237, 124
        %v2260 = vpop.permute.xlu0 %2259
        %2261 = vrot.lane.b32.xlu0 %v2238, 124
        %v2262 = vpop.permute.xlu0 %2261
        %v2263 = vsel %vm1437, %v2248, %v2250
        %v2264 = vsel %vm1437, %v2250, %v2252
        %v2265 = vsel %vm1437, %v2252, %v2254
        %v2266 = vsel %vm1437, %v2256, %v2258
        %v2267 = vsel %vm1437, %v2258, %v2260
        %v2268 = vsel %vm1437, %v2260, %v2262
        %2275 = vst [vmem:[#allocation3 + $0x90] sm:$0xff] %v2263
        %2276 = vst [vmem:[#allocation3 + $0x98] sm:$0xff] %v2264
        %2277 = vst [vmem:[#allocation3 + $0xa0] sm:$0xff] %v2265
        %2278 = vst [vmem:[#allocation3 + $0xa8] sm:$0xff] %v2266
        %2279 = vst [vmem:[#allocation3 + $0xb0] sm:$0xff] %v2267
        %2280 = vst [vmem:[#allocation3 + $0xb8] sm:$0xff] %v2268
        %v2281 = vld [vmem:[#allocation2 + $0x8] sm:$0xff]
        %v2282 = vld [vmem:[#allocation2 + $0x10] sm:$0xff]
        %v2283 = vld [vmem:[#allocation2 + $0x18] sm:$0xff]
        %v2284 = vld [vmem:[#allocation2 + $0x20] sm:$0xff]
        %v2285 = vld [vmem:[#allocation2 + $0x30] sm:$0xff]
        %v2286 = vld [vmem:[#allocation2 + $0x38] sm:$0xff]
        %v2287 = vld [vmem:[#allocation2 + $0x40] sm:$0xff]
        %v2288 = vld [vmem:[#allocation2 + $0x48] sm:$0xff]
        %2297 = vrot.lane.b32.xlu0 %v2281, 120
        %v2298 = vpop.permute.xlu0 %2297
        %2299 = vrot.lane.b32.xlu0 %v2282, 120
        %v2300 = vpop.permute.xlu0 %2299
        %2301 = vrot.lane.b32.xlu0 %v2283, 120
        %v2302 = vpop.permute.xlu0 %2301
        %2303 = vrot.lane.b32.xlu0 %v2284, 120
        %v2304 = vpop.permute.xlu0 %2303
        %2305 = vrot.lane.b32.xlu0 %v2285, 120
        %v2306 = vpop.permute.xlu0 %2305
        %2307 = vrot.lane.b32.xlu0 %v2286, 120
        %v2308 = vpop.permute.xlu0 %2307
        %2309 = vrot.lane.b32.xlu0 %v2287, 120
        %v2310 = vpop.permute.xlu0 %2309
        %2311 = vrot.lane.b32.xlu0 %v2288, 120
        %v2312 = vpop.permute.xlu0 %2311
        %vm2313 = vcmask 982016
        %v2314 = vsel %vm2313, %v2298, %v2300
        %v2315 = vsel %vm2313, %v2300, %v2302
        %v2316 = vsel %vm2313, %v2302, %v2304
        %v2317 = vsel %vm2313, %v2306, %v2308
        %v2318 = vsel %vm2313, %v2308, %v2310
        %v2319 = vsel %vm2313, %v2310, %v2312
        %2326 = vst [vmem:[#allocation3 + $0xc0] sm:$0xff] %v2314
        %2327 = vst [vmem:[#allocation3 + $0xc8] sm:$0xff] %v2315
        %2328 = vst [vmem:[#allocation3 + $0xd0] sm:$0xff] %v2316
        %2329 = vst [vmem:[#allocation3 + $0xd8] sm:$0xff] %v2317
        %2330 = vst [vmem:[#allocation3 + $0xe0] sm:$0xff] %v2318
        %2331 = vst [vmem:[#allocation3 + $0xe8] sm:$0xff] %v2319
        %s2332 = scalar_lea.vmem %s1, 128
        %v2333 = vld [vmem:[%s2332] sm:$0xff]
        %v2334 = vld [vmem:[%s2332 + $0x8] sm:$0xff]
        %v2335 = vld [vmem:[%s2332 + $0x10] sm:$0xff]
        %v2336 = vld [vmem:[%s2332 + $0x18] sm:$0xff]
        %v2337 = vld [vmem:[%s2332 + $0x20] sm:$0xff]
        %v2338 = vld [vmem:[%s2332 + $0x28] sm:$0xff]
        %v2339 = vld [vmem:[%s2332 + $0x30] sm:$0xff]
        %v2340 = vld [vmem:[%s2332 + $0x38] sm:$0xff]
        %v2341 = vld [vmem:[#allocation3] sm:$0xff]
        %v2342 = vld [vmem:[#allocation3 + $0x8] sm:$0xff]
        %v2343 = vld [vmem:[#allocation3 + $0x10] sm:$0xff]
        %v2344 = vld [vmem:[#allocation3 + $0x18] sm:$0xff]
        %v2345 = vld [vmem:[#allocation3 + $0x20] sm:$0xff]
        %v2346 = vld [vmem:[#allocation3 + $0x28] sm:$0xff]
        %v2347 = vld [vmem:[#allocation3 + $0x30] sm:$0xff]
        %v2348 = vld [vmem:[#allocation3 + $0x38] sm:$0xff]
        %v2349 = vld [vmem:[#allocation3 + $0x40] sm:$0xff]
        %v2350 = vld [vmem:[#allocation3 + $0x48] sm:$0xff]
        %v2351 = vld [vmem:[#allocation3 + $0x50] sm:$0xff]
        %v2352 = vld [vmem:[#allocation3 + $0x58] sm:$0xff]
        %v2353 = vld [vmem:[#allocation3 + $0x60] sm:$0xff]
        %v2354 = vld [vmem:[#allocation3 + $0x68] sm:$0xff]
        %v2355 = vld [vmem:[#allocation3 + $0x70] sm:$0xff]
        %v2356 = vld [vmem:[#allocation3 + $0x78] sm:$0xff]
        %v2357 = vld [vmem:[#allocation3 + $0x80] sm:$0xff]
        %v2358 = vld [vmem:[#allocation3 + $0x88] sm:$0xff]
        %v2359 = vld [vmem:[#allocation3 + $0x90] sm:$0xff]
        %v2360 = vld [vmem:[#allocation3 + $0x98] sm:$0xff]
        %v2361 = vld [vmem:[#allocation3 + $0xa0] sm:$0xff]
        %v2362 = vld [vmem:[#allocation3 + $0xa8] sm:$0xff]
        %v2363 = vld [vmem:[#allocation3 + $0xb0] sm:$0xff]
        %v2364 = vld [vmem:[#allocation3 + $0xb8] sm:$0xff]
        %v2365 = vld [vmem:[#allocation3 + $0xc0] sm:$0xff]
        %v2366 = vld [vmem:[#allocation3 + $0xc8] sm:$0xff]
        %v2367 = vld [vmem:[#allocation3 + $0xd0] sm:$0xff]
        %v2368 = vld [vmem:[#allocation3 + $0xd8] sm:$0xff]
        %v2369 = vld [vmem:[#allocation3 + $0xe0] sm:$0xff]
        %v2370 = vld [vmem:[#allocation3 + $0xe8] sm:$0xff]
        %v2371 = vld [vmem:[#allocation3 + $0xf0] sm:$0xff]
        %v2372 = vld [vmem:[#allocation3 + $0xf8] sm:$0xff]
        %v2373 = vld [vmem:[#allocation3 + $0x100] sm:$0xff]
        %v2374 = vld [vmem:[#allocation3 + $0x108] sm:$0xff]
        %v2375 = vld [vmem:[#allocation3 + $0x110] sm:$0xff]
        %v2376 = vld [vmem:[#allocation3 + $0x118] sm:$0xff]
        %v2377 = vld [vmem:[#allocation3 + $0x120] sm:$0xff]
        %v2378 = vld [vmem:[#allocation3 + $0x128] sm:$0xff]
        %v2379 = vld [vmem:[#allocation3 + $0x130] sm:$0xff]
        %v2380 = vld [vmem:[#allocation3 + $0x138] sm:$0xff]
        %v2381 = vld [vmem:[#allocation3 + $0x140] sm:$0xff]
        %v2382 = vld [vmem:[#allocation3 + $0x148] sm:$0xff]
        %v2383 = vld [vmem:[#allocation3 + $0x150] sm:$0xff]
        %v2384 = vld [vmem:[#allocation3 + $0x158] sm:$0xff]
        %v2385 = vld [vmem:[#allocation3 + $0x160] sm:$0xff]
        %v2386 = vld [vmem:[#allocation3 + $0x168] sm:$0xff]
        %v2387 = vld [vmem:[#allocation3 + $0x170] sm:$0xff]
        %v2388 = vld [vmem:[#allocation3 + $0x178] sm:$0xff]
        %s2389 = scalar_lea.vmem %s2, 128
        %v2390 = vld [vmem:[%s2389] sm:$0xff]
        %v2391 = vld [vmem:[%s2389 + $0x8] sm:$0xff]
        %v2392 = vld [vmem:[%s2389 + $0x10] sm:$0xff]
        %v2393 = vld [vmem:[%s2389 + $0x18] sm:$0xff]
        %v2394 = vld [vmem:[%s2389 + $0x20] sm:$0xff]
        %v2395 = vld [vmem:[%s2389 + $0x28] sm:$0xff]
        %v2396 = vld [vmem:[%s2389 + $0x30] sm:$0xff]
        %v2397 = vld [vmem:[%s2389 + $0x38] sm:$0xff]
        %2399 = vset.pattern.permute.xlu0 0
        %2400 = vperm.xlu0 %2399, %v2390
        %v2401 = vpop.permute.xlu0 %2400
        %2404 = vset.pattern.permute.xlu0 0
        %2405 = vperm.xlu0 %2404, %v2391
        %v2406 = vpop.permute.xlu0 %2405
        %2409 = vset.pattern.permute.xlu0 0
        %2410 = vperm.xlu0 %2409, %v2392
        %v2411 = vpop.permute.xlu0 %2410
        %2414 = vset.pattern.permute.xlu0 0
        %2415 = vperm.xlu0 %2414, %v2393
        %v2416 = vpop.permute.xlu0 %2415
        %2419 = vset.pattern.permute.xlu0 0
        %2420 = vperm.xlu0 %2419, %v2394
        %v2421 = vpop.permute.xlu0 %2420
        %2424 = vset.pattern.permute.xlu0 0
        %2425 = vperm.xlu0 %2424, %v2395
        %v2426 = vpop.permute.xlu0 %2425
        %2429 = vset.pattern.permute.xlu0 0
        %2430 = vperm.xlu0 %2429, %v2396
        %v2431 = vpop.permute.xlu0 %2430
        %2434 = vset.pattern.permute.xlu0 0
        %2435 = vperm.xlu0 %2434, %v2397
        %v2436 = vpop.permute.xlu0 %2435
        %v2446 = vunpack.c.l.b16 %v2333
        %v2447 = vunpack.c.h.b16 %v2333
        %v2448 = vunpack.c.l.b16 %v2334
        %v2449 = vunpack.c.h.b16 %v2334
        %v2450 = vunpack.c.l.b16 %v2335
        %v2451 = vunpack.c.h.b16 %v2335
        %v2452 = vunpack.c.l.b16 %v2336
        %v2453 = vunpack.c.h.b16 %v2336
        %v2454 = vunpack.c.l.b16 %v2337
        %v2455 = vunpack.c.h.b16 %v2337
        %v2456 = vunpack.c.l.b16 %v2338
        %v2457 = vunpack.c.h.b16 %v2338
        %v2458 = vunpack.c.l.b16 %v2339
        %v2459 = vunpack.c.h.b16 %v2339
        %v2460 = vunpack.c.l.b16 %v2340
        %v2461 = vunpack.c.h.b16 %v2340
        %v2462 = vpack.c.b16 %v2448, %v2446
        %v2463 = vpack.c.b16 %v2449, %v2447
        %v2464 = vpack.c.b16 %v2452, %v2450
        %v2465 = vpack.c.b16 %v2453, %v2451
        %v2466 = vpack.c.b16 %v2456, %v2454
        %v2467 = vpack.c.b16 %v2457, %v2455
        %v2468 = vpack.c.b16 %v2460, %v2458
        %v2469 = vpack.c.b16 %v2461, %v2459
        %2478 = vmatprep.subr.bf16.mxu0 %v2342
        %2479 = vmatpush1.bf16.msra.mxu0 %v2341
        %2480 = vmatprep.subr.bf16.mxu0 %v2345
        %2481 = vmatpush1.bf16.msra.mxu0 %v2344
        %2482 = vmatprep.subr.bf16.mxu0 %v2348
        %2483 = vmatpush1.bf16.msra.mxu0 %v2347
        %2484 = vmatprep.subr.bf16.mxu0 %v2351
        %2485 = vmatpush1.bf16.msra.mxu0 %v2350
        %2486 = vmatprep.subr.bf16.mxu0 %v2354
        %2487 = vmatpush1.bf16.msra.mxu0 %v2353
        %2488 = vmatprep.subr.bf16.mxu0 %v2357
        %2489 = vmatpush1.bf16.msra.mxu0 %v2356
        %2490 = vmatprep.subr.bf16.mxu0 %v2360
        %2491 = vmatpush1.bf16.msra.mxu0 %v2359
        %2492 = vmatprep.subr.bf16.mxu0 %v2363
        %2493 = vmatpush1.bf16.msra.mxu0 %v2362
        %2494 = vmatprep.subr.bf16.mxu0 %v2366
        %2495 = vmatpush1.bf16.msra.mxu0 %v2365
        %2496 = vmatprep.subr.bf16.mxu0 %v2369
        %2497 = vmatpush1.bf16.msra.mxu0 %v2368
        %2498 = vmatprep.subr.bf16.mxu0 %v2372
        %2499 = vmatpush1.bf16.msra.mxu0 %v2371
        %2500 = vmatprep.subr.bf16.mxu0 %v2375
        %2501 = vmatpush1.bf16.msra.mxu0 %v2374
        %2502 = vmatprep.subr.bf16.mxu0 %v2378
        %2503 = vmatpush1.bf16.msra.mxu0 %v2377
        %2504 = vmatprep.subr.bf16.mxu0 %v2381
        %2505 = vmatpush1.bf16.msra.mxu0 %v2380
        %2506 = vmatprep.subr.bf16.mxu0 %v2384
        %2507 = vmatpush1.bf16.msra.mxu0 %v2383
        %2508 = vmatprep.subr.bf16.mxu0 %v2387
        %2509 = vmatpush1.bf16.msra.mxu0 %v2386
        %2510 = vmatprep.mubr.bf16.mxu0 %v2463
        %2511 = vmatmul.mubr.bf16.gmra.mrb[0].mxu0 %v2462
        %v2512 = vpop.f32.mrb[0].mxu0
        %v2513 = vadd.f32 %v2401, %v2512
        %v2514 = vpop.f32.mrb[0].mxu0
        %v2515 = vadd.f32 %v2401, %v2514
        %v2516 = vpop.f32.mrb[0].mxu0
        %v2517 = vadd.f32 %v2406, %v2516
        %v2518 = vpop.f32.mrb[0].mxu0
        %v2519 = vadd.f32 %v2406, %v2518
        %2520 = vmatprep.mubr.bf16.mxu0 %v2465
        %2521 = vmatmul.mubr.bf16.gmra.mrb[0].mxu0 %v2464
        %v2522 = vpop.f32.mrb[0].mxu0
        %v2523 = vadd.f32 %v2411, %v2522
        %v2524 = vpop.f32.mrb[0].mxu0
        %v2525 = vadd.f32 %v2411, %v2524
        %v2526 = vpop.f32.mrb[0].mxu0
        %v2527 = vadd.f32 %v2416, %v2526
        %v2528 = vpop.f32.mrb[0].mxu0
        %v2529 = vadd.f32 %v2416, %v2528
        %2530 = vmatprep.mubr.bf16.mxu0 %v2467
        %2531 = vmatmul.mubr.bf16.gmra.mrb[0].mxu0 %v2466
        %v2532 = vpop.f32.mrb[0].mxu0
        %v2533 = vadd.f32 %v2421, %v2532
        %v2534 = vpop.f32.mrb[0].mxu0
        %v2535 = vadd.f32 %v2421, %v2534
        %v2536 = vpop.f32.mrb[0].mxu0
        %v2537 = vadd.f32 %v2426, %v2536
        %v2538 = vpop.f32.mrb[0].mxu0
        %v2539 = vadd.f32 %v2426, %v2538
        %2540 = vmatprep.mubr.bf16.mxu0 %v2469
        %2541 = vmatmul.mubr.bf16.gmra.mrb[0].mxu0 %v2468
        %v2542 = vpop.f32.mrb[0].mxu0
        %v2543 = vadd.f32 %v2431, %v2542
        %v2544 = vpop.f32.mrb[0].mxu0
        %v2545 = vadd.f32 %v2431, %v2544
        %v2546 = vpop.f32.mrb[0].mxu0
        %v2547 = vadd.f32 %v2436, %v2546
        %v2548 = vpop.f32.mrb[0].mxu0
        %v2549 = vadd.f32 %v2436, %v2548
        %2550 = vdwg.mxu0
        %2551 = vmatprep.subr.bf16.mxu0 0
        %2552 = vmatpush1.bf16.msra.mxu0 %v2343
        %2553 = vmatprep.subr.bf16.mxu0 0
        %2554 = vmatpush1.bf16.msra.mxu0 %v2346
        %2555 = vmatprep.subr.bf16.mxu0 0
        %2556 = vmatpush1.bf16.msra.mxu0 %v2349
        %2557 = vmatprep.subr.bf16.mxu0 0
        %2558 = vmatpush1.bf16.msra.mxu0 %v2352
        %2559 = vmatprep.subr.bf16.mxu0 0
        %2560 = vmatpush1.bf16.msra.mxu0 %v2355
        %2561 = vmatprep.subr.bf16.mxu0 0
        %2562 = vmatpush1.bf16.msra.mxu0 %v2358
        %2563 = vmatprep.subr.bf16.mxu0 0
        %2564 = vmatpush1.bf16.msra.mxu0 %v2361
        %2565 = vmatprep.subr.bf16.mxu0 0
        %2566 = vmatpush1.bf16.msra.mxu0 %v2364
        %2567 = vmatprep.subr.bf16.mxu0 0
        %2568 = vmatpush1.bf16.msra.mxu0 %v2367
        %2569 = vmatprep.subr.bf16.mxu0 0
        %2570 = vmatpush1.bf16.msra.mxu0 %v2370
        %2571 = vmatprep.subr.bf16.mxu0 0
        %2572 = vmatpush1.bf16.msra.mxu0 %v2373
        %2573 = vmatprep.subr.bf16.mxu0 0
        %2574 = vmatpush1.bf16.msra.mxu0 %v2376
        %2575 = vmatprep.subr.bf16.mxu0 0
        %2576 = vmatpush1.bf16.msra.mxu0 %v2379
        %2577 = vmatprep.subr.bf16.mxu0 0
        %2578 = vmatpush1.bf16.msra.mxu0 %v2382
        %2579 = vmatprep.subr.bf16.mxu0 0
        %2580 = vmatpush1.bf16.msra.mxu0 %v2385
        %2581 = vmatprep.subr.bf16.mxu0 0
        %2582 = vmatpush1.bf16.msra.mxu0 %v2388
        %2583 = vmatprep.mubr.bf16.mxu0 %v2463
        %2584 = vmatmul.mubr.bf16.gmra.mrb[0].mxu0 %v2462
        %v2585 = vpop.f32.mrb[0].mxu0
        %v2586 = vadd.f32 %v2401, %v2585
        %v2587 = vpop.f32.mrb[0].mxu0
        %v2588 = vpop.f32.mrb[0].mxu0
        %v2589 = vadd.f32 %v2406, %v2588
        %v2590 = vpop.f32.mrb[0].mxu0
        %2591 = vmatprep.mubr.bf16.mxu0 %v2465
        %2592 = vmatmul.mubr.bf16.gmra.mrb[0].mxu0 %v2464
        %v2593 = vpop.f32.mrb[0].mxu0
        %v2594 = vadd.f32 %v2411, %v2593
        %v2595 = vpop.f32.mrb[0].mxu0
        %v2596 = vpop.f32.mrb[0].mxu0
        %v2597 = vadd.f32 %v2416, %v2596
        %v2598 = vpop.f32.mrb[0].mxu0
        %2599 = vmatprep.mubr.bf16.mxu0 %v2467
        %2600 = vmatmul.mubr.bf16.gmra.mrb[0].mxu0 %v2466
        %v2601 = vpop.f32.mrb[0].mxu0
        %v2602 = vadd.f32 %v2421, %v2601
        %v2603 = vpop.f32.mrb[0].mxu0
        %v2604 = vpop.f32.mrb[0].mxu0
        %v2605 = vadd.f32 %v2426, %v2604
        %v2606 = vpop.f32.mrb[0].mxu0
        %2607 = vmatprep.mubr.bf16.mxu0 %v2469
        %2608 = vmatmul.mubr.bf16.gmra.mrb[0].mxu0 %v2468
        %v2609 = vpop.f32.mrb[0].mxu0
        %v2610 = vadd.f32 %v2431, %v2609
        %v2611 = vpop.f32.mrb[0].mxu0
        %v2612 = vpop.f32.mrb[0].mxu0
        %v2613 = vadd.f32 %v2436, %v2612
        %v2614 = vpop.f32.mrb[0].mxu0
        %2615 = vdwg.mxu0
        %v2616 = vtanh.pop %v2513
        %v2617 = vtanh.pop %v2515
        %v2618 = vtanh.pop %v2586
        %v2619 = vtanh.pop %v2517
        %v2620 = vtanh.pop %v2519
        %v2621 = vtanh.pop %v2589
        %v2622 = vtanh.pop %v2523
        %v2623 = vtanh.pop %v2525
        %v2624 = vtanh.pop %v2594
        %v2625 = vtanh.pop %v2527
        %v2626 = vtanh.pop %v2529
        %v2627 = vtanh.pop %v2597
        %v2628 = vmul.f32 %v2533, 0.5
        %v2629 = vmul.f32 %v2535, 0.5
        %v2630 = vmul.f32 %v2602, 0.5
        %v2631 = vmul.f32 %v2537, 0.5
        %v2632 = vmul.f32 %v2539, 0.5
        %v2633 = vmul.f32 %v2605, 0.5
        %v2634 = vmul.f32 %v2543, 0.5
        %v2635 = vmul.f32 %v2545, 0.5
        %v2636 = vmul.f32 %v2610, 0.5
        %v2637 = vmul.f32 %v2547, 0.5
        %v2638 = vmul.f32 %v2549, 0.5
        %v2639 = vmul.f32 %v2613, 0.5
        %v2640 = vtanh.pop %v2628
        %v2641 = vtanh.pop %v2629
        %v2642 = vtanh.pop %v2630
        %v2643 = vtanh.pop %v2631
        %v2644 = vtanh.pop %v2632
        %v2645 = vtanh.pop %v2633
        %v2646 = vtanh.pop %v2634
        %v2647 = vtanh.pop %v2635
        %v2648 = vtanh.pop %v2636
        %v2649 = vtanh.pop %v2637
        %v2650 = vtanh.pop %v2638
        %v2651 = vtanh.pop %v2639
        %v2652 = vmul.f32 %v2640, 0.5
        %v2653 = vmul.f32 %v2641, 0.5
        %v2654 = vmul.f32 %v2642, 0.5
        %v2655 = vmul.f32 %v2643, 0.5
        %v2656 = vmul.f32 %v2644, 0.5
        %v2657 = vmul.f32 %v2645, 0.5
        %v2658 = vmul.f32 %v2646, 0.5
        %v2659 = vmul.f32 %v2647, 0.5
        %v2660 = vmul.f32 %v2648, 0.5
        %v2661 = vmul.f32 %v2649, 0.5
        %v2662 = vmul.f32 %v2650, 0.5
        %v2663 = vmul.f32 %v2651, 0.5
        %v2664 = vadd.f32 %v2652, 0.5
        %v2665 = vadd.f32 %v2653, 0.5
        %v2666 = vadd.f32 %v2654, 0.5
        %v2667 = vadd.f32 %v2655, 0.5
        %v2668 = vadd.f32 %v2656, 0.5
        %v2669 = vadd.f32 %v2657, 0.5
        %v2670 = vadd.f32 %v2658, 0.5
        %v2671 = vadd.f32 %v2659, 0.5
        %v2672 = vadd.f32 %v2660, 0.5
        %v2673 = vadd.f32 %v2661, 0.5
        %v2674 = vadd.f32 %v2662, 0.5
        %v2675 = vadd.f32 %v2663, 0.5
        %v2676 = vmul.f32 %v2616, %v2664
        %v2677 = vmul.f32 %v2617, %v2665
        %v2678 = vmul.f32 %v2618, %v2666
        %v2679 = vmul.f32 %v2619, %v2667
        %v2680 = vmul.f32 %v2620, %v2668
        %v2681 = vmul.f32 %v2621, %v2669
        %v2682 = vmul.f32 %v2622, %v2670
        %v2683 = vmul.f32 %v2623, %v2671
        %v2684 = vmul.f32 %v2624, %v2672
        %v2685 = vmul.f32 %v2625, %v2673
        %v2686 = vmul.f32 %v2626, %v2674
        %v2687 = vmul.f32 %v2627, %v2675
        %v2688 = vpack.c.bf16 %v2679, %v2676
        %v2689 = vpack.c.bf16 %v2680, %v2677
        %v2690 = vpack.c.bf16 %v2681, %v2678
        %v2691 = vpack.c.bf16 %v2685, %v2682
        %v2692 = vpack.c.bf16 %v2686, %v2683
        %v2693 = vpack.c.bf16 %v2687, %v2684
        %s2694 = scalar_lea.vmem %s3, 64
        %v2695 = vld [vmem:[%s2694] sm:$0xf]
        %v2696 = vld [vmem:[%s2694 + $0x4] sm:$0xf]
        %v2697 = vld [vmem:[%s2694 + $0x8] sm:$0xf]
        %v2698 = vld [vmem:[%s2694 + $0xc] sm:$0xf]
        %v2699 = vld [vmem:[%s2694 + $0x10] sm:$0xf]
        %v2700 = vld [vmem:[%s2694 + $0x14] sm:$0xf]
        %v2701 = vld [vmem:[%s2694 + $0x18] sm:$0xf]
        %v2702 = vld [vmem:[%s2694 + $0x1c] sm:$0xf]
        %s2703 = scalar_lea.vmem %s4, 128
        %v2704 = vld [vmem:[%s2703] sm:$0xff]
        %v2705 = vld [vmem:[%s2703 + $0x8] sm:$0xff]
        %v2706 = vld [vmem:[%s2703 + $0x10] sm:$0xff]
        %v2707 = vld [vmem:[%s2703 + $0x18] sm:$0xff]
        %v2708 = vld [vmem:[%s2703 + $0x20] sm:$0xff]
        %v2709 = vld [vmem:[%s2703 + $0x28] sm:$0xff]
        %v2710 = vld [vmem:[%s2703 + $0x30] sm:$0xff]
        %v2711 = vld [vmem:[%s2703 + $0x38] sm:$0xff]
        %2713 = vset.pattern.permute.xlu0 0
        %2714 = vperm.xlu0 %2713, %v2704
        %v2715 = vpop.permute.xlu0 %2714
        %2718 = vset.pattern.permute.xlu0 0
        %2719 = vperm.xlu0 %2718, %v2705
        %v2720 = vpop.permute.xlu0 %2719
        %2723 = vset.pattern.permute.xlu0 0
        %2724 = vperm.xlu0 %2723, %v2706
        %v2725 = vpop.permute.xlu0 %2724
        %2728 = vset.pattern.permute.xlu0 0
        %2729 = vperm.xlu0 %2728, %v2707
        %v2730 = vpop.permute.xlu0 %2729
        %2733 = vset.pattern.permute.xlu0 0
        %2734 = vperm.xlu0 %2733, %v2708
        %v2735 = vpop.permute.xlu0 %2734
        %2738 = vset.pattern.permute.xlu0 0
        %2739 = vperm.xlu0 %2738, %v2709
        %v2740 = vpop.permute.xlu0 %2739
        %2743 = vset.pattern.permute.xlu0 0
        %2744 = vperm.xlu0 %2743, %v2710
        %v2745 = vpop.permute.xlu0 %2744
        %2748 = vset.pattern.permute.xlu0 0
        %2749 = vperm.xlu0 %2748, %v2711
        %v2750 = vpop.permute.xlu0 %2749
        %v2760 = vunpack.c.l.b16 %v2695
        %v2761 = vunpack.c.l.b16 %v2696
        %v2762 = vunpack.c.l.b16 %v2697
        %v2763 = vunpack.c.l.b16 %v2698
        %v2764 = vunpack.c.l.b16 %v2699
        %v2765 = vunpack.c.l.b16 %v2700
        %v2766 = vunpack.c.l.b16 %v2701
        %v2767 = vunpack.c.l.b16 %v2702
        %v2768 = vpack.c.b16 %v2761, %v2760
        %v2769 = vpack.c.b16 %v2763, %v2762
        %v2770 = vpack.c.b16 %v2765, %v2764
        %v2771 = vpack.c.b16 %v2767, %v2766
        %v2773 = vsel %vm1019, %v2768, 0
        %v2776 = vsel %vm1019, %v2769, 0
        %v2779 = vsel %vm1019, %v2770, 0
        %v2782 = vsel %vm1019, %v2771, 0
        %2784 = vmatprep.subr.bf16.mxu0 %v2689
        %2785 = vmatpush1.bf16.msra.mxu0 %v2688
        %2786 = vmatprep.subr.bf16.mxu0 %v2692
        %2787 = vmatpush1.bf16.msra.mxu0 %v2691
        %2788 = vmatprep.subr.bf16.mxu0 0
        %2789 = vmatpush1.bf16.msra.mxu0 0
        %2790 = vmatprep.subr.bf16.mxu0 0
        %2791 = vmatpush1.bf16.msra.mxu0 0
        %2792 = vmatprep.subr.bf16.mxu0 0
        %2793 = vmatpush1.bf16.msra.mxu0 0
        %2794 = vmatprep.subr.bf16.mxu0 0
        %2795 = vmatpush1.bf16.msra.mxu0 0
        %2796 = vmatprep.subr.bf16.mxu0 0
        %2797 = vmatpush1.bf16.msra.mxu0 0
        %2798 = vmatprep.subr.bf16.mxu0 0
        %2799 = vmatpush1.bf16.msra.mxu0 0
        %2800 = vmatprep.subr.bf16.mxu0 0
        %2801 = vmatpush1.bf16.msra.mxu0 0
        %2802 = vmatprep.subr.bf16.mxu0 0
        %2803 = vmatpush1.bf16.msra.mxu0 0
        %2804 = vmatprep.subr.bf16.mxu0 0
        %2805 = vmatpush1.bf16.msra.mxu0 0
        %2806 = vmatprep.subr.bf16.mxu0 0
        %2807 = vmatpush1.bf16.msra.mxu0 0
        %2808 = vmatprep.subr.bf16.mxu0 0
        %2809 = vmatpush1.bf16.msra.mxu0 0
        %2810 = vmatprep.subr.bf16.mxu0 0
        %2811 = vmatpush1.bf16.msra.mxu0 0
        %2812 = vmatprep.subr.bf16.mxu0 0
        %2813 = vmatpush1.bf16.msra.mxu0 0
        %2814 = vmatprep.subr.bf16.mxu0 0
        %2815 = vmatpush1.bf16.msra.mxu0 0
        %2816 = vmatprep.mubr.bf16.mxu0 0
        %2817 = vmatmul.mubr.bf16.gmra.mrb[0].mxu0 %v2773
        %v2818 = vpop.f32.mrb[0].mxu0
        %v2819 = vadd.f32 %v2715, %v2818
        %v2820 = vpop.f32.mrb[0].mxu0
        %v2821 = vadd.f32 %v2715, %v2820
        %v2822 = vpop.f32.mrb[0].mxu0
        %v2823 = vadd.f32 %v2720, %v2822
        %v2824 = vpop.f32.mrb[0].mxu0
        %v2825 = vadd.f32 %v2720, %v2824
        %2826 = vmatprep.mubr.bf16.mxu0 0
        %2827 = vmatmul.mubr.bf16.gmra.mrb[0].mxu0 %v2776
        %v2828 = vpop.f32.mrb[0].mxu0
        %v2829 = vadd.f32 %v2725, %v2828
        %v2830 = vpop.f32.mrb[0].mxu0
        %v2831 = vadd.f32 %v2725, %v2830
        %v2832 = vpop.f32.mrb[0].mxu0
        %v2833 = vadd.f32 %v2730, %v2832
        %v2834 = vpop.f32.mrb[0].mxu0
        %v2835 = vadd.f32 %v2730, %v2834
        %2836 = vmatprep.mubr.bf16.mxu0 0
        %2837 = vmatmul.mubr.bf16.gmra.mrb[0].mxu0 %v2779
        %v2838 = vpop.f32.mrb[0].mxu0
        %v2839 = vadd.f32 %v2735, %v2838
        %v2840 = vpop.f32.mrb[0].mxu0
        %v2841 = vadd.f32 %v2735, %v2840
        %v2842 = vpop.f32.mrb[0].mxu0
        %v2843 = vadd.f32 %v2740, %v2842
        %v2844 = vpop.f32.mrb[0].mxu0
        %v2845 = vadd.f32 %v2740, %v2844
        %2846 = vmatprep.mubr.bf16.mxu0 0
        %2847 = vmatmul.mubr.bf16.gmra.mrb[0].mxu0 %v2782
        %v2848 = vpop.f32.mrb[0].mxu0
        %v2849 = vadd.f32 %v2745, %v2848
        %v2850 = vpop.f32.mrb[0].mxu0
        %v2851 = vadd.f32 %v2745, %v2850
        %v2852 = vpop.f32.mrb[0].mxu0
        %v2853 = vadd.f32 %v2750, %v2852
        %v2854 = vpop.f32.mrb[0].mxu0
        %v2855 = vadd.f32 %v2750, %v2854
        %2856 = vdwg.mxu0
        %2857 = vmatprep.subr.bf16.mxu0 0
        %2858 = vmatpush1.bf16.msra.mxu0 %v2690
        %2859 = vmatprep.subr.bf16.mxu0 0
        %2860 = vmatpush1.bf16.msra.mxu0 %v2693
        %2861 = vmatprep.subr.bf16.mxu0 0
        %2862 = vmatpush1.bf16.msra.mxu0 0
        %2863 = vmatprep.subr.bf16.mxu0 0
        %2864 = vmatpush1.bf16.msra.mxu0 0
        %2865 = vmatprep.subr.bf16.mxu0 0
        %2866 = vmatpush1.bf16.msra.mxu0 0
        %2867 = vmatprep.subr.bf16.mxu0 0
        %2868 = vmatpush1.bf16.msra.mxu0 0
        %2869 = vmatprep.subr.bf16.mxu0 0
        %2870 = vmatpush1.bf16.msra.mxu0 0
        %2871 = vmatprep.subr.bf16.mxu0 0
        %2872 = vmatpush1.bf16.msra.mxu0 0
        %2873 = vmatprep.subr.bf16.mxu0 0
        %2874 = vmatpush1.bf16.msra.mxu0 0
        %2875 = vmatprep.subr.bf16.mxu0 0
        %2876 = vmatpush1.bf16.msra.mxu0 0
        %2877 = vmatprep.subr.bf16.mxu0 0
        %2878 = vmatpush1.bf16.msra.mxu0 0
        %2879 = vmatprep.subr.bf16.mxu0 0
        %2880 = vmatpush1.bf16.msra.mxu0 0
        %2881 = vmatprep.subr.bf16.mxu0 0
        %2882 = vmatpush1.bf16.msra.mxu0 0
        %2883 = vmatprep.subr.bf16.mxu0 0
        %2884 = vmatpush1.bf16.msra.mxu0 0
        %2885 = vmatprep.subr.bf16.mxu0 0
        %2886 = vmatpush1.bf16.msra.mxu0 0
        %2887 = vmatprep.subr.bf16.mxu0 0
        %2888 = vmatpush1.bf16.msra.mxu0 0
        %2889 = vmatprep.mubr.bf16.mxu0 0
        %2890 = vmatmul.mubr.bf16.gmra.mrb[0].mxu0 %v2773
        %v2891 = vpop.f32.mrb[0].mxu0
        %v2892 = vadd.f32 %v2715, %v2891
        %v2893 = vpop.f32.mrb[0].mxu0
        %v2894 = vpop.f32.mrb[0].mxu0
        %v2895 = vadd.f32 %v2720, %v2894
        %v2896 = vpop.f32.mrb[0].mxu0
        %2897 = vmatprep.mubr.bf16.mxu0 0
        %2898 = vmatmul.mubr.bf16.gmra.mrb[0].mxu0 %v2776
        %v2899 = vpop.f32.mrb[0].mxu0
        %v2900 = vadd.f32 %v2725, %v2899
        %v2901 = vpop.f32.mrb[0].mxu0
        %v2902 = vpop.f32.mrb[0].mxu0
        %v2903 = vadd.f32 %v2730, %v2902
        %v2904 = vpop.f32.mrb[0].mxu0
        %2905 = vmatprep.mubr.bf16.mxu0 0
        %2906 = vmatmul.mubr.bf16.gmra.mrb[0].mxu0 %v2779
        %v2907 = vpop.f32.mrb[0].mxu0
        %v2908 = vadd.f32 %v2735, %v2907
        %v2909 = vpop.f32.mrb[0].mxu0
        %v2910 = vpop.f32.mrb[0].mxu0
        %v2911 = vadd.f32 %v2740, %v2910
        %v2912 = vpop.f32.mrb[0].mxu0
        %2913 = vmatprep.mubr.bf16.mxu0 0
        %2914 = vmatmul.mubr.bf16.gmra.mrb[0].mxu0 %v2782
        %v2915 = vpop.f32.mrb[0].mxu0
        %v2916 = vadd.f32 %v2745, %v2915
        %v2917 = vpop.f32.mrb[0].mxu0
        %v2918 = vpop.f32.mrb[0].mxu0
        %v2919 = vadd.f32 %v2750, %v2918
        %v2920 = vpop.f32.mrb[0].mxu0
        %2921 = vdwg.mxu0
        %v2922 = vadd.f32 %v2046, %v2819
        %v2923 = vadd.f32 %v2047, %v2821
        %v2924 = vadd.f32 %v2048, %v2892
        %v2925 = vadd.f32 %v2049, %v2823
        %v2926 = vadd.f32 %v2050, %v2825
        %v2927 = vadd.f32 %v2051, %v2895
        %v2928 = vadd.f32 %v2052, %v2829
        %v2929 = vadd.f32 %v2053, %v2831
        %v2930 = vadd.f32 %v2054, %v2900
        %v2931 = vadd.f32 %v2055, %v2833
        %v2932 = vadd.f32 %v2056, %v2835
        %v2933 = vadd.f32 %v2057, %v2903
        %v2934 = vld [vmem:[#allocation4] sm:$0xff]
        %v2935 = vld [vmem:[#allocation4 + $0x8] sm:$0xff]
        %v2936 = vld [vmem:[#allocation4 + $0x10] sm:$0xff]
        %v2937 = vld [vmem:[#allocation4 + $0x18] sm:$0xff]
        %v2938 = vld [vmem:[#allocation4 + $0x20] sm:$0xff]
        %v2939 = vld [vmem:[#allocation4 + $0x28] sm:$0xff]
        %v2940 = vld [vmem:[#allocation4 + $0x30] sm:$0xff]
        %v2941 = vld [vmem:[#allocation4 + $0x38] sm:$0xff]
        %v2942 = vld [vmem:[#allocation4 + $0x40] sm:$0xff]
        %v2943 = vld [vmem:[#allocation4 + $0x48] sm:$0xff]
        %v2944 = vld [vmem:[#allocation4 + $0x50] sm:$0xff]
        %v2945 = vld [vmem:[#allocation4 + $0x58] sm:$0xff]
        %v2946 = vadd.f32 %v2934, %v2839
        %v2947 = vadd.f32 %v2935, %v2841
        %v2948 = vadd.f32 %v2936, %v2908
        %v2949 = vadd.f32 %v2937, %v2843
        %v2950 = vadd.f32 %v2938, %v2845
        %v2951 = vadd.f32 %v2939, %v2911
        %v2952 = vadd.f32 %v2940, %v2849
        %v2953 = vadd.f32 %v2941, %v2851
        %v2954 = vadd.f32 %v2942, %v2916
        %v2955 = vadd.f32 %v2943, %v2853
        %v2956 = vadd.f32 %v2944, %v2855
        %v2957 = vadd.f32 %v2945, %v2919
        %2958 = vst [vmem:[#allocation4] sm:$0xff] %v2946
        %2959 = vst [vmem:[#allocation4 + $0x8] sm:$0xff] %v2947
        %2960 = vst [vmem:[#allocation4 + $0x10] sm:$0xff] %v2948
        %2961 = vst [vmem:[#allocation4 + $0x18] sm:$0xff] %v2949
        %2962 = vst [vmem:[#allocation4 + $0x20] sm:$0xff] %v2950
        %2963 = vst [vmem:[#allocation4 + $0x28] sm:$0xff] %v2951
        %2964 = vst [vmem:[#allocation4 + $0x30] sm:$0xff] %v2952
        %2965 = vst [vmem:[#allocation4 + $0x38] sm:$0xff] %v2953
        %2966 = vst [vmem:[#allocation4 + $0x40] sm:$0xff] %v2954
        %2967 = vst [vmem:[#allocation4 + $0x48] sm:$0xff] %v2955
        %2968 = vst [vmem:[#allocation4 + $0x50] sm:$0xff] %v2956
        %2969 = vst [vmem:[#allocation4 + $0x58] sm:$0xff] %v2957
        %v2970 = vsel %vm328, %v2922, 0.0
        %v2971 = vsel %vm329, %v2923, 0.0
        %v2972 = vsel %vm330, %v2924, 0.0
        %v2973 = vsel %vm328, %v2925, 0.0
        %v2974 = vsel %vm329, %v2926, 0.0
        %v2975 = vsel %vm330, %v2927, 0.0
        %v2976 = vsel %vm328, %v2928, 0.0
        %v2977 = vsel %vm329, %v2929, 0.0
        %v2978 = vsel %vm330, %v2930, 0.0
        %v2979 = vsel %vm328, %v2931, 0.0
        %v2980 = vsel %vm329, %v2932, 0.0
        %v2981 = vsel %vm330, %v2933, 0.0
        %v2982 = vpack.c.bf16 %v2973, %v2970
        %v2983 = vpack.c.bf16 %v2974, %v2971
        %v2984 = vpack.c.bf16 %v2975, %v2972
        %v2985 = vpack.c.bf16 %v2979, %v2976
        %v2986 = vpack.c.bf16 %v2980, %v2977
        %v2987 = vpack.c.bf16 %v2981, %v2978
        %2988 = vst [vmem:[#allocation2 + $0x8] sm:$0xff] %v2982
        %2989 = vst [vmem:[#allocation2 + $0x10] sm:$0xff] %v2983
        %2990 = vst [vmem:[#allocation2 + $0x18] sm:$0xff] %v2984
        %2991 = vst [vmem:[#allocation2 + $0x30] sm:$0xff] %v2985
        %2992 = vst [vmem:[#allocation2 + $0x38] sm:$0xff] %v2986
        %2993 = vst [vmem:[#allocation2 + $0x40] sm:$0xff] %v2987
        %v2994 = vld [vmem:[#allocation2] sm:$0xff]
        %v2995 = vld [vmem:[#allocation2 + $0x8] sm:$0xff]
        %v2996 = vld [vmem:[#allocation2 + $0x10] sm:$0xff]
        %v2997 = vld [vmem:[#allocation2 + $0x18] sm:$0xff]
        %v2998 = vld [vmem:[#allocation2 + $0x28] sm:$0xff]
        %v2999 = vld [vmem:[#allocation2 + $0x30] sm:$0xff]
        %v3000 = vld [vmem:[#allocation2 + $0x38] sm:$0xff]
        %v3001 = vld [vmem:[#allocation2 + $0x40] sm:$0xff]
        %3010 = vrot.lane.b32.xlu0 %v2994, 16
        %v3011 = vpop.permute.xlu0 %3010
        %3012 = vrot.lane.b32.xlu0 %v2995, 16
        %v3013 = vpop.permute.xlu0 %3012
        %3014 = vrot.lane.b32.xlu0 %v2996, 16
        %v3015 = vpop.permute.xlu0 %3014
        %3016 = vrot.lane.b32.xlu0 %v2997, 16
        %v3017 = vpop.permute.xlu0 %3016
        %3018 = vrot.lane.b32.xlu0 %v2998, 16
        %v3019 = vpop.permute.xlu0 %3018
        %3020 = vrot.lane.b32.xlu0 %v2999, 16
        %v3021 = vpop.permute.xlu0 %3020
        %3022 = vrot.lane.b32.xlu0 %v3000, 16
        %v3023 = vpop.permute.xlu0 %3022
        %3024 = vrot.lane.b32.xlu0 %v3001, 16
        %v3025 = vpop.permute.xlu0 %3024
        %vm3026 = vcmask 130048
        %v3027 = vsel %vm3026, %v3011, %v3013
        %v3028 = vsel %vm3026, %v3013, %v3015
        %v3029 = vsel %vm3026, %v3015, %v3017
        %v3030 = vsel %vm3026, %v3019, %v3021
        %v3031 = vsel %vm3026, %v3021, %v3023
        %v3032 = vsel %vm3026, %v3023, %v3025
        %3039 = vst [vmem:[#allocation3] sm:$0xff] %v3027
        %3040 = vst [vmem:[#allocation3 + $0x8] sm:$0xff] %v3028
        %3041 = vst [vmem:[#allocation3 + $0x10] sm:$0xff] %v3029
        %3042 = vst [vmem:[#allocation3 + $0x18] sm:$0xff] %v3030
        %3043 = vst [vmem:[#allocation3 + $0x20] sm:$0xff] %v3031
        %3044 = vst [vmem:[#allocation3 + $0x28] sm:$0xff] %v3032
        %v3045 = vld [vmem:[#allocation2] sm:$0xff]
        %v3046 = vld [vmem:[#allocation2 + $0x8] sm:$0xff]
        %v3047 = vld [vmem:[#allocation2 + $0x10] sm:$0xff]
        %v3048 = vld [vmem:[#allocation2 + $0x18] sm:$0xff]
        %v3049 = vld [vmem:[#allocation2 + $0x28] sm:$0xff]
        %v3050 = vld [vmem:[#allocation2 + $0x30] sm:$0xff]
        %v3051 = vld [vmem:[#allocation2 + $0x38] sm:$0xff]
        %v3052 = vld [vmem:[#allocation2 + $0x40] sm:$0xff]
        %3061 = vrot.lane.b32.xlu0 %v3045, 8
        %v3062 = vpop.permute.xlu0 %3061
        %3063 = vrot.lane.b32.xlu0 %v3046, 8
        %v3064 = vpop.permute.xlu0 %3063
        %3065 = vrot.lane.b32.xlu0 %v3047, 8
        %v3066 = vpop.permute.xlu0 %3065
        %3067 = vrot.lane.b32.xlu0 %v3048, 8
        %v3068 = vpop.permute.xlu0 %3067
        %3069 = vrot.lane.b32.xlu0 %v3049, 8
        %v3070 = vpop.permute.xlu0 %3069
        %3071 = vrot.lane.b32.xlu0 %v3050, 8
        %v3072 = vpop.permute.xlu0 %3071
        %3073 = vrot.lane.b32.xlu0 %v3051, 8
        %v3074 = vpop.permute.xlu0 %3073
        %3075 = vrot.lane.b32.xlu0 %v3052, 8
        %v3076 = vpop.permute.xlu0 %3075
        %v3077 = vsel %vm2150, %v3062, %v3064
        %v3078 = vsel %vm2150, %v3064, %v3066
        %v3079 = vsel %vm2150, %v3066, %v3068
        %v3080 = vsel %vm2150, %v3070, %v3072
        %v3081 = vsel %vm2150, %v3072, %v3074
        %v3082 = vsel %vm2150, %v3074, %v3076
        %3089 = vst [vmem:[#allocation3 + $0x30] sm:$0xff] %v3077
        %3090 = vst [vmem:[#allocation3 + $0x38] sm:$0xff] %v3078
        %3091 = vst [vmem:[#allocation3 + $0x40] sm:$0xff] %v3079
        %3092 = vst [vmem:[#allocation3 + $0x48] sm:$0xff] %v3080
        %3093 = vst [vmem:[#allocation3 + $0x50] sm:$0xff] %v3081
        %3094 = vst [vmem:[#allocation3 + $0x58] sm:$0xff] %v3082
        %v3095 = vld [vmem:[#allocation2 + $0x8] sm:$0xff]
        %v3096 = vld [vmem:[#allocation2 + $0x10] sm:$0xff]
        %v3097 = vld [vmem:[#allocation2 + $0x18] sm:$0xff]
        %v3098 = vld [vmem:[#allocation2 + $0x30] sm:$0xff]
        %v3099 = vld [vmem:[#allocation2 + $0x38] sm:$0xff]
        %v3100 = vld [vmem:[#allocation2 + $0x40] sm:$0xff]
        %3101 = vst [vmem:[#allocation3 + $0x60] sm:$0xff] %v3095
        %3102 = vst [vmem:[#allocation3 + $0x68] sm:$0xff] %v3096
        %3103 = vst [vmem:[#allocation3 + $0x70] sm:$0xff] %v3097
        %3104 = vst [vmem:[#allocation3 + $0x78] sm:$0xff] %v3098
        %3105 = vst [vmem:[#allocation3 + $0x80] sm:$0xff] %v3099
        %3106 = vst [vmem:[#allocation3 + $0x88] sm:$0xff] %v3100
        %v3107 = vld [vmem:[#allocation2 + $0x8] sm:$0xff]
        %v3108 = vld [vmem:[#allocation2 + $0x10] sm:$0xff]
        %v3109 = vld [vmem:[#allocation2 + $0x18] sm:$0xff]
        %v3110 = vld [vmem:[#allocation2 + $0x20] sm:$0xff]
        %v3111 = vld [vmem:[#allocation2 + $0x30] sm:$0xff]
        %v3112 = vld [vmem:[#allocation2 + $0x38] sm:$0xff]
        %v3113 = vld [vmem:[#allocation2 + $0x40] sm:$0xff]
        %v3114 = vld [vmem:[#allocation2 + $0x48] sm:$0xff]
        %3123 = vrot.lane.b32.xlu0 %v3107, 120
        %v3124 = vpop.permute.xlu0 %3123
        %3125 = vrot.lane.b32.xlu0 %v3108, 120
        %v3126 = vpop.permute.xlu0 %3125
        %3127 = vrot.lane.b32.xlu0 %v3109, 120
        %v3128 = vpop.permute.xlu0 %3127
        %3129 = vrot.lane.b32.xlu0 %v3110, 120
        %v3130 = vpop.permute.xlu0 %3129
        %3131 = vrot.lane.b32.xlu0 %v3111, 120
        %v3132 = vpop.permute.xlu0 %3131
        %3133 = vrot.lane.b32.xlu0 %v3112, 120
        %v3134 = vpop.permute.xlu0 %3133
        %3135 = vrot.lane.b32.xlu0 %v3113, 120
        %v3136 = vpop.permute.xlu0 %3135
        %3137 = vrot.lane.b32.xlu0 %v3114, 120
        %v3138 = vpop.permute.xlu0 %3137
        %v3139 = vsel %vm2313, %v3124, %v3126
        %v3140 = vsel %vm2313, %v3126, %v3128
        %v3141 = vsel %vm2313, %v3128, %v3130
        %v3142 = vsel %vm2313, %v3132, %v3134
        %v3143 = vsel %vm2313, %v3134, %v3136
        %v3144 = vsel %vm2313, %v3136, %v3138
        %3151 = vst [vmem:[#allocation3 + $0x90] sm:$0xff] %v3139
        %3152 = vst [vmem:[#allocation3 + $0x98] sm:$0xff] %v3140
        %3153 = vst [vmem:[#allocation3 + $0xa0] sm:$0xff] %v3141
        %3154 = vst [vmem:[#allocation3 + $0xa8] sm:$0xff] %v3142
        %3155 = vst [vmem:[#allocation3 + $0xb0] sm:$0xff] %v3143
        %3156 = vst [vmem:[#allocation3 + $0xb8] sm:$0xff] %v3144
        %v3157 = vld [vmem:[#allocation2 + $0x8] sm:$0xff]
        %v3158 = vld [vmem:[#allocation2 + $0x10] sm:$0xff]
        %v3159 = vld [vmem:[#allocation2 + $0x18] sm:$0xff]
        %v3160 = vld [vmem:[#allocation2 + $0x20] sm:$0xff]
        %v3161 = vld [vmem:[#allocation2 + $0x30] sm:$0xff]
        %v3162 = vld [vmem:[#allocation2 + $0x38] sm:$0xff]
        %v3163 = vld [vmem:[#allocation2 + $0x40] sm:$0xff]
        %v3164 = vld [vmem:[#allocation2 + $0x48] sm:$0xff]
        %3173 = vrot.lane.b32.xlu0 %v3157, 112
        %v3174 = vpop.permute.xlu0 %3173
        %3175 = vrot.lane.b32.xlu0 %v3158, 112
        %v3176 = vpop.permute.xlu0 %3175
        %3177 = vrot.lane.b32.xlu0 %v3159, 112
        %v3178 = vpop.permute.xlu0 %3177
        %3179 = vrot.lane.b32.xlu0 %v3160, 112
        %v3180 = vpop.permute.xlu0 %3179
        %3181 = vrot.lane.b32.xlu0 %v3161, 112
        %v3182 = vpop.permute.xlu0 %3181
        %3183 = vrot.lane.b32.xlu0 %v3162, 112
        %v3184 = vpop.permute.xlu0 %3183
        %3185 = vrot.lane.b32.xlu0 %v3163, 112
        %v3186 = vpop.permute.xlu0 %3185
        %3187 = vrot.lane.b32.xlu0 %v3164, 112
        %v3188 = vpop.permute.xlu0 %3187
        %vm3189 = vcmask 916480
        %v3190 = vsel %vm3189, %v3174, %v3176
        %v3191 = vsel %vm3189, %v3176, %v3178
        %v3192 = vsel %vm3189, %v3178, %v3180
        %v3193 = vsel %vm3189, %v3182, %v3184
        %v3194 = vsel %vm3189, %v3184, %v3186
        %v3195 = vsel %vm3189, %v3186, %v3188
        %3202 = vst [vmem:[#allocation3 + $0xc0] sm:$0xff] %v3190
        %3203 = vst [vmem:[#allocation3 + $0xc8] sm:$0xff] %v3191
        %3204 = vst [vmem:[#allocation3 + $0xd0] sm:$0xff] %v3192
        %3205 = vst [vmem:[#allocation3 + $0xd8] sm:$0xff] %v3193
        %3206 = vst [vmem:[#allocation3 + $0xe0] sm:$0xff] %v3194
        %3207 = vst [vmem:[#allocation3 + $0xe8] sm:$0xff] %v3195
        %s3208 = scalar_lea.vmem %s1, 192
        %v3209 = vld [vmem:[%s3208] sm:$0xff]
        %v3210 = vld [vmem:[%s3208 + $0x8] sm:$0xff]
        %v3211 = vld [vmem:[%s3208 + $0x10] sm:$0xff]
        %v3212 = vld [vmem:[%s3208 + $0x18] sm:$0xff]
        %v3213 = vld [vmem:[%s3208 + $0x20] sm:$0xff]
        %v3214 = vld [vmem:[%s3208 + $0x28] sm:$0xff]
        %v3215 = vld [vmem:[%s3208 + $0x30] sm:$0xff]
        %v3216 = vld [vmem:[%s3208 + $0x38] sm:$0xff]
        %v3217 = vld [vmem:[#allocation3] sm:$0xff]
        %v3218 = vld [vmem:[#allocation3 + $0x8] sm:$0xff]
        %v3219 = vld [vmem:[#allocation3 + $0x10] sm:$0xff]
        %v3220 = vld [vmem:[#allocation3 + $0x18] sm:$0xff]
        %v3221 = vld [vmem:[#allocation3 + $0x20] sm:$0xff]
        %v3222 = vld [vmem:[#allocation3 + $0x28] sm:$0xff]
        %v3223 = vld [vmem:[#allocation3 + $0x30] sm:$0xff]
        %v3224 = vld [vmem:[#allocation3 + $0x38] sm:$0xff]
        %v3225 = vld [vmem:[#allocation3 + $0x40] sm:$0xff]
        %v3226 = vld [vmem:[#allocation3 + $0x48] sm:$0xff]
        %v3227 = vld [vmem:[#allocation3 + $0x50] sm:$0xff]
        %v3228 = vld [vmem:[#allocation3 + $0x58] sm:$0xff]
        %v3229 = vld [vmem:[#allocation3 + $0x60] sm:$0xff]
        %v3230 = vld [vmem:[#allocation3 + $0x68] sm:$0xff]
        %v3231 = vld [vmem:[#allocation3 + $0x70] sm:$0xff]
        %v3232 = vld [vmem:[#allocation3 + $0x78] sm:$0xff]
        %v3233 = vld [vmem:[#allocation3 + $0x80] sm:$0xff]
        %v3234 = vld [vmem:[#allocation3 + $0x88] sm:$0xff]
        %v3235 = vld [vmem:[#allocation3 + $0x90] sm:$0xff]
        %v3236 = vld [vmem:[#allocation3 + $0x98] sm:$0xff]
        %v3237 = vld [vmem:[#allocation3 + $0xa0] sm:$0xff]
        %v3238 = vld [vmem:[#allocation3 + $0xa8] sm:$0xff]
        %v3239 = vld [vmem:[#allocation3 + $0xb0] sm:$0xff]
        %v3240 = vld [vmem:[#allocation3 + $0xb8] sm:$0xff]
        %v3241 = vld [vmem:[#allocation3 + $0xc0] sm:$0xff]
        %v3242 = vld [vmem:[#allocation3 + $0xc8] sm:$0xff]
        %v3243 = vld [vmem:[#allocation3 + $0xd0] sm:$0xff]
        %v3244 = vld [vmem:[#allocation3 + $0xd8] sm:$0xff]
        %v3245 = vld [vmem:[#allocation3 + $0xe0] sm:$0xff]
        %v3246 = vld [vmem:[#allocation3 + $0xe8] sm:$0xff]
        %v3247 = vld [vmem:[#allocation3 + $0xf0] sm:$0xff]
        %v3248 = vld [vmem:[#allocation3 + $0xf8] sm:$0xff]
        %v3249 = vld [vmem:[#allocation3 + $0x100] sm:$0xff]
        %v3250 = vld [vmem:[#allocation3 + $0x108] sm:$0xff]
        %v3251 = vld [vmem:[#allocation3 + $0x110] sm:$0xff]
        %v3252 = vld [vmem:[#allocation3 + $0x118] sm:$0xff]
        %v3253 = vld [vmem:[#allocation3 + $0x120] sm:$0xff]
        %v3254 = vld [vmem:[#allocation3 + $0x128] sm:$0xff]
        %v3255 = vld [vmem:[#allocation3 + $0x130] sm:$0xff]
        %v3256 = vld [vmem:[#allocation3 + $0x138] sm:$0xff]
        %v3257 = vld [vmem:[#allocation3 + $0x140] sm:$0xff]
        %v3258 = vld [vmem:[#allocation3 + $0x148] sm:$0xff]
        %v3259 = vld [vmem:[#allocation3 + $0x150] sm:$0xff]
        %v3260 = vld [vmem:[#allocation3 + $0x158] sm:$0xff]
        %v3261 = vld [vmem:[#allocation3 + $0x160] sm:$0xff]
        %v3262 = vld [vmem:[#allocation3 + $0x168] sm:$0xff]
        %v3263 = vld [vmem:[#allocation3 + $0x170] sm:$0xff]
        %v3264 = vld [vmem:[#allocation3 + $0x178] sm:$0xff]
        %s3265 = scalar_lea.vmem %s2, 192
        %v3266 = vld [vmem:[%s3265] sm:$0xff]
        %v3267 = vld [vmem:[%s3265 + $0x8] sm:$0xff]
        %v3268 = vld [vmem:[%s3265 + $0x10] sm:$0xff]
        %v3269 = vld [vmem:[%s3265 + $0x18] sm:$0xff]
        %v3270 = vld [vmem:[%s3265 + $0x20] sm:$0xff]
        %v3271 = vld [vmem:[%s3265 + $0x28] sm:$0xff]
        %v3272 = vld [vmem:[%s3265 + $0x30] sm:$0xff]
        %v3273 = vld [vmem:[%s3265 + $0x38] sm:$0xff]
        %3275 = vset.pattern.permute.xlu0 0
        %3276 = vperm.xlu0 %3275, %v3266
        %v3277 = vpop.permute.xlu0 %3276
        %3280 = vset.pattern.permute.xlu0 0
        %3281 = vperm.xlu0 %3280, %v3267
        %v3282 = vpop.permute.xlu0 %3281
        %3285 = vset.pattern.permute.xlu0 0
        %3286 = vperm.xlu0 %3285, %v3268
        %v3287 = vpop.permute.xlu0 %3286
        %3290 = vset.pattern.permute.xlu0 0
        %3291 = vperm.xlu0 %3290, %v3269
        %v3292 = vpop.permute.xlu0 %3291
        %3295 = vset.pattern.permute.xlu0 0
        %3296 = vperm.xlu0 %3295, %v3270
        %v3297 = vpop.permute.xlu0 %3296
        %3300 = vset.pattern.permute.xlu0 0
        %3301 = vperm.xlu0 %3300, %v3271
        %v3302 = vpop.permute.xlu0 %3301
        %3305 = vset.pattern.permute.xlu0 0
        %3306 = vperm.xlu0 %3305, %v3272
        %v3307 = vpop.permute.xlu0 %3306
        %3310 = vset.pattern.permute.xlu0 0
        %3311 = vperm.xlu0 %3310, %v3273
        %v3312 = vpop.permute.xlu0 %3311
        %v3322 = vunpack.c.l.b16 %v3209
        %v3323 = vunpack.c.h.b16 %v3209
        %v3324 = vunpack.c.l.b16 %v3210
        %v3325 = vunpack.c.h.b16 %v3210
        %v3326 = vunpack.c.l.b16 %v3211
        %v3327 = vunpack.c.h.b16 %v3211
        %v3328 = vunpack.c.l.b16 %v3212
        %v3329 = vunpack.c.h.b16 %v3212
        %v3330 = vunpack.c.l.b16 %v3213
        %v3331 = vunpack.c.h.b16 %v3213
        %v3332 = vunpack.c.l.b16 %v3214
        %v3333 = vunpack.c.h.b16 %v3214
        %v3334 = vunpack.c.l.b16 %v3215
        %v3335 = vunpack.c.h.b16 %v3215
        %v3336 = vunpack.c.l.b16 %v3216
        %v3337 = vunpack.c.h.b16 %v3216
        %v3338 = vpack.c.b16 %v3324, %v3322
        %v3339 = vpack.c.b16 %v3325, %v3323
        %v3340 = vpack.c.b16 %v3328, %v3326
        %v3341 = vpack.c.b16 %v3329, %v3327
        %v3342 = vpack.c.b16 %v3332, %v3330
        %v3343 = vpack.c.b16 %v3333, %v3331
        %v3344 = vpack.c.b16 %v3336, %v3334
        %v3345 = vpack.c.b16 %v3337, %v3335
        %3354 = vmatprep.subr.bf16.mxu0 %v3218
        %3355 = vmatpush1.bf16.msra.mxu0 %v3217
        %3356 = vmatprep.subr.bf16.mxu0 %v3221
        %3357 = vmatpush1.bf16.msra.mxu0 %v3220
        %3358 = vmatprep.subr.bf16.mxu0 %v3224
        %3359 = vmatpush1.bf16.msra.mxu0 %v3223
        %3360 = vmatprep.subr.bf16.mxu0 %v3227
        %3361 = vmatpush1.bf16.msra.mxu0 %v3226
        %3362 = vmatprep.subr.bf16.mxu0 %v3230
        %3363 = vmatpush1.bf16.msra.mxu0 %v3229
        %3364 = vmatprep.subr.bf16.mxu0 %v3233
        %3365 = vmatpush1.bf16.msra.mxu0 %v3232
        %3366 = vmatprep.subr.bf16.mxu0 %v3236
        %3367 = vmatpush1.bf16.msra.mxu0 %v3235
        %3368 = vmatprep.subr.bf16.mxu0 %v3239
        %3369 = vmatpush1.bf16.msra.mxu0 %v3238
        %3370 = vmatprep.subr.bf16.mxu0 %v3242
        %3371 = vmatpush1.bf16.msra.mxu0 %v3241
        %3372 = vmatprep.subr.bf16.mxu0 %v3245
        %3373 = vmatpush1.bf16.msra.mxu0 %v3244
        %3374 = vmatprep.subr.bf16.mxu0 %v3248
        %3375 = vmatpush1.bf16.msra.mxu0 %v3247
        %3376 = vmatprep.subr.bf16.mxu0 %v3251
        %3377 = vmatpush1.bf16.msra.mxu0 %v3250
        %3378 = vmatprep.subr.bf16.mxu0 %v3254
        %3379 = vmatpush1.bf16.msra.mxu0 %v3253
        %3380 = vmatprep.subr.bf16.mxu0 %v3257
        %3381 = vmatpush1.bf16.msra.mxu0 %v3256
        %3382 = vmatprep.subr.bf16.mxu0 %v3260
        %3383 = vmatpush1.bf16.msra.mxu0 %v3259
        %3384 = vmatprep.subr.bf16.mxu0 %v3263
        %3385 = vmatpush1.bf16.msra.mxu0 %v3262
        %3386 = vmatprep.mubr.bf16.mxu0 %v3339
        %3387 = vmatmul.mubr.bf16.gmra.mrb[0].mxu0 %v3338
        %v3388 = vpop.f32.mrb[0].mxu0
        %v3389 = vadd.f32 %v3277, %v3388
        %v3390 = vpop.f32.mrb[0].mxu0
        %v3391 = vadd.f32 %v3277, %v3390
        %v3392 = vpop.f32.mrb[0].mxu0
        %v3393 = vadd.f32 %v3282, %v3392
        %v3394 = vpop.f32.mrb[0].mxu0
        %v3395 = vadd.f32 %v3282, %v3394
        %3396 = vmatprep.mubr.bf16.mxu0 %v3341
        %3397 = vmatmul.mubr.bf16.gmra.mrb[0].mxu0 %v3340
        %v3398 = vpop.f32.mrb[0].mxu0
        %v3399 = vadd.f32 %v3287, %v3398
        %v3400 = vpop.f32.mrb[0].mxu0
        %v3401 = vadd.f32 %v3287, %v3400
        %v3402 = vpop.f32.mrb[0].mxu0
        %v3403 = vadd.f32 %v3292, %v3402
        %v3404 = vpop.f32.mrb[0].mxu0
        %v3405 = vadd.f32 %v3292, %v3404
        %3406 = vmatprep.mubr.bf16.mxu0 %v3343
        %3407 = vmatmul.mubr.bf16.gmra.mrb[0].mxu0 %v3342
        %v3408 = vpop.f32.mrb[0].mxu0
        %v3409 = vadd.f32 %v3297, %v3408
        %v3410 = vpop.f32.mrb[0].mxu0
        %v3411 = vadd.f32 %v3297, %v3410
        %v3412 = vpop.f32.mrb[0].mxu0
        %v3413 = vadd.f32 %v3302, %v3412
        %v3414 = vpop.f32.mrb[0].mxu0
        %v3415 = vadd.f32 %v3302, %v3414
        %3416 = vmatprep.mubr.bf16.mxu0 %v3345
        %3417 = vmatmul.mubr.bf16.gmra.mrb[0].mxu0 %v3344
        %v3418 = vpop.f32.mrb[0].mxu0
        %v3419 = vadd.f32 %v3307, %v3418
        %v3420 = vpop.f32.mrb[0].mxu0
        %v3421 = vadd.f32 %v3307, %v3420
        %v3422 = vpop.f32.mrb[0].mxu0
        %v3423 = vadd.f32 %v3312, %v3422
        %v3424 = vpop.f32.mrb[0].mxu0
        %v3425 = vadd.f32 %v3312, %v3424
        %3426 = vdwg.mxu0
        %3427 = vmatprep.subr.bf16.mxu0 0
        %3428 = vmatpush1.bf16.msra.mxu0 %v3219
        %3429 = vmatprep.subr.bf16.mxu0 0
        %3430 = vmatpush1.bf16.msra.mxu0 %v3222
        %3431 = vmatprep.subr.bf16.mxu0 0
        %3432 = vmatpush1.bf16.msra.mxu0 %v3225
        %3433 = vmatprep.subr.bf16.mxu0 0
        %3434 = vmatpush1.bf16.msra.mxu0 %v3228
        %3435 = vmatprep.subr.bf16.mxu0 0
        %3436 = vmatpush1.bf16.msra.mxu0 %v3231
        %3437 = vmatprep.subr.bf16.mxu0 0
        %3438 = vmatpush1.bf16.msra.mxu0 %v3234
        %3439 = vmatprep.subr.bf16.mxu0 0
        %3440 = vmatpush1.bf16.msra.mxu0 %v3237
        %3441 = vmatprep.subr.bf16.mxu0 0
        %3442 = vmatpush1.bf16.msra.mxu0 %v3240
        %3443 = vmatprep.subr.bf16.mxu0 0
        %3444 = vmatpush1.bf16.msra.mxu0 %v3243
        %3445 = vmatprep.subr.bf16.mxu0 0
        %3446 = vmatpush1.bf16.msra.mxu0 %v3246
        %3447 = vmatprep.subr.bf16.mxu0 0
        %3448 = vmatpush1.bf16.msra.mxu0 %v3249
        %3449 = vmatprep.subr.bf16.mxu0 0
        %3450 = vmatpush1.bf16.msra.mxu0 %v3252
        %3451 = vmatprep.subr.bf16.mxu0 0
        %3452 = vmatpush1.bf16.msra.mxu0 %v3255
        %3453 = vmatprep.subr.bf16.mxu0 0
        %3454 = vmatpush1.bf16.msra.mxu0 %v3258
        %3455 = vmatprep.subr.bf16.mxu0 0
        %3456 = vmatpush1.bf16.msra.mxu0 %v3261
        %3457 = vmatprep.subr.bf16.mxu0 0
        %3458 = vmatpush1.bf16.msra.mxu0 %v3264
        %3459 = vmatprep.mubr.bf16.mxu0 %v3339
        %3460 = vmatmul.mubr.bf16.gmra.mrb[0].mxu0 %v3338
        %v3461 = vpop.f32.mrb[0].mxu0
        %v3462 = vadd.f32 %v3277, %v3461
        %v3463 = vpop.f32.mrb[0].mxu0
        %v3464 = vpop.f32.mrb[0].mxu0
        %v3465 = vadd.f32 %v3282, %v3464
        %v3466 = vpop.f32.mrb[0].mxu0
        %3467 = vmatprep.mubr.bf16.mxu0 %v3341
        %3468 = vmatmul.mubr.bf16.gmra.mrb[0].mxu0 %v3340
        %v3469 = vpop.f32.mrb[0].mxu0
        %v3470 = vadd.f32 %v3287, %v3469
        %v3471 = vpop.f32.mrb[0].mxu0
        %v3472 = vpop.f32.mrb[0].mxu0
        %v3473 = vadd.f32 %v3292, %v3472
        %v3474 = vpop.f32.mrb[0].mxu0
        %3475 = vmatprep.mubr.bf16.mxu0 %v3343
        %3476 = vmatmul.mubr.bf16.gmra.mrb[0].mxu0 %v3342
        %v3477 = vpop.f32.mrb[0].mxu0
        %v3478 = vadd.f32 %v3297, %v3477
        %v3479 = vpop.f32.mrb[0].mxu0
        %v3480 = vpop.f32.mrb[0].mxu0
        %v3481 = vadd.f32 %v3302, %v3480
        %v3482 = vpop.f32.mrb[0].mxu0
        %3483 = vmatprep.mubr.bf16.mxu0 %v3345
        %3484 = vmatmul.mubr.bf16.gmra.mrb[0].mxu0 %v3344
        %v3485 = vpop.f32.mrb[0].mxu0
        %v3486 = vadd.f32 %v3307, %v3485
        %v3487 = vpop.f32.mrb[0].mxu0
        %v3488 = vpop.f32.mrb[0].mxu0
        %v3489 = vadd.f32 %v3312, %v3488
        %v3490 = vpop.f32.mrb[0].mxu0
        %3491 = vdwg.mxu0
        %v3492 = vtanh.pop %v3389
        %v3493 = vtanh.pop %v3391
        %v3494 = vtanh.pop %v3462
        %v3495 = vtanh.pop %v3393
        %v3496 = vtanh.pop %v3395
        %v3497 = vtanh.pop %v3465
        %v3498 = vtanh.pop %v3399
        %v3499 = vtanh.pop %v3401
        %v3500 = vtanh.pop %v3470
        %v3501 = vtanh.pop %v3403
        %v3502 = vtanh.pop %v3405
        %v3503 = vtanh.pop %v3473
        %v3504 = vmul.f32 %v3409, 0.5
        %v3505 = vmul.f32 %v3411, 0.5
        %v3506 = vmul.f32 %v3478, 0.5
        %v3507 = vmul.f32 %v3413, 0.5
        %v3508 = vmul.f32 %v3415, 0.5
        %v3509 = vmul.f32 %v3481, 0.5
        %v3510 = vmul.f32 %v3419, 0.5
        %v3511 = vmul.f32 %v3421, 0.5
        %v3512 = vmul.f32 %v3486, 0.5
        %v3513 = vmul.f32 %v3423, 0.5
        %v3514 = vmul.f32 %v3425, 0.5
        %v3515 = vmul.f32 %v3489, 0.5
        %v3516 = vtanh.pop %v3504
        %v3517 = vtanh.pop %v3505
        %v3518 = vtanh.pop %v3506
        %v3519 = vtanh.pop %v3507
        %v3520 = vtanh.pop %v3508
        %v3521 = vtanh.pop %v3509
        %v3522 = vtanh.pop %v3510
        %v3523 = vtanh.pop %v3511
        %v3524 = vtanh.pop %v3512
        %v3525 = vtanh.pop %v3513
        %v3526 = vtanh.pop %v3514
        %v3527 = vtanh.pop %v3515
        %v3528 = vmul.f32 %v3516, 0.5
        %v3529 = vmul.f32 %v3517, 0.5
        %v3530 = vmul.f32 %v3518, 0.5
        %v3531 = vmul.f32 %v3519, 0.5
        %v3532 = vmul.f32 %v3520, 0.5
        %v3533 = vmul.f32 %v3521, 0.5
        %v3534 = vmul.f32 %v3522, 0.5
        %v3535 = vmul.f32 %v3523, 0.5
        %v3536 = vmul.f32 %v3524, 0.5
        %v3537 = vmul.f32 %v3525, 0.5
        %v3538 = vmul.f32 %v3526, 0.5
        %v3539 = vmul.f32 %v3527, 0.5
        %v3540 = vadd.f32 %v3528, 0.5
        %v3541 = vadd.f32 %v3529, 0.5
        %v3542 = vadd.f32 %v3530, 0.5
        %v3543 = vadd.f32 %v3531, 0.5
        %v3544 = vadd.f32 %v3532, 0.5
        %v3545 = vadd.f32 %v3533, 0.5
        %v3546 = vadd.f32 %v3534, 0.5
        %v3547 = vadd.f32 %v3535, 0.5
        %v3548 = vadd.f32 %v3536, 0.5
        %v3549 = vadd.f32 %v3537, 0.5
        %v3550 = vadd.f32 %v3538, 0.5
        %v3551 = vadd.f32 %v3539, 0.5
        %v3552 = vmul.f32 %v3492, %v3540
        %v3553 = vmul.f32 %v3493, %v3541
        %v3554 = vmul.f32 %v3494, %v3542
        %v3555 = vmul.f32 %v3495, %v3543
        %v3556 = vmul.f32 %v3496, %v3544
        %v3557 = vmul.f32 %v3497, %v3545
        %v3558 = vmul.f32 %v3498, %v3546
        %v3559 = vmul.f32 %v3499, %v3547
        %v3560 = vmul.f32 %v3500, %v3548
        %v3561 = vmul.f32 %v3501, %v3549
        %v3562 = vmul.f32 %v3502, %v3550
        %v3563 = vmul.f32 %v3503, %v3551
        %v3564 = vpack.c.bf16 %v3555, %v3552
        %v3565 = vpack.c.bf16 %v3556, %v3553
        %v3566 = vpack.c.bf16 %v3557, %v3554
        %v3567 = vpack.c.bf16 %v3561, %v3558
        %v3568 = vpack.c.bf16 %v3562, %v3559
        %v3569 = vpack.c.bf16 %v3563, %v3560
        %s3570 = scalar_lea.vmem %s3, 96
        %v3571 = vld [vmem:[%s3570] sm:$0xf]
        %v3572 = vld [vmem:[%s3570 + $0x4] sm:$0xf]
        %v3573 = vld [vmem:[%s3570 + $0x8] sm:$0xf]
        %v3574 = vld [vmem:[%s3570 + $0xc] sm:$0xf]
        %v3575 = vld [vmem:[#allocation4] sm:$0xff]
        %v3576 = vld [vmem:[#allocation4 + $0x8] sm:$0xff]
        %v3577 = vld [vmem:[#allocation4 + $0x10] sm:$0xff]
        %v3578 = vld [vmem:[#allocation4 + $0x18] sm:$0xff]
        %v3579 = vld [vmem:[#allocation4 + $0x20] sm:$0xff]
        %v3580 = vld [vmem:[#allocation4 + $0x28] sm:$0xff]
        %v3581 = vld [vmem:[#allocation4 + $0x30] sm:$0xff]
        %v3582 = vld [vmem:[#allocation4 + $0x38] sm:$0xff]
        %v3583 = vld [vmem:[#allocation4 + $0x40] sm:$0xff]
        %v3584 = vld [vmem:[#allocation4 + $0x48] sm:$0xff]
        %v3585 = vld [vmem:[#allocation4 + $0x50] sm:$0xff]
        %v3586 = vld [vmem:[#allocation4 + $0x58] sm:$0xff]
        %s3587 = scalar_lea.vmem %s4, 192
        %v3588 = vld [vmem:[%s3587] sm:$0xff]
        %v3589 = vld [vmem:[%s3587 + $0x8] sm:$0xff]
        %v3590 = vld [vmem:[%s3587 + $0x10] sm:$0xff]
        %v3591 = vld [vmem:[%s3587 + $0x18] sm:$0xff]
        %3593 = vset.pattern.permute.xlu0 0
        %3594 = vperm.xlu0 %3593, %v3588
        %v3595 = vpop.permute.xlu0 %3594
        %3598 = vset.pattern.permute.xlu0 0
        %3599 = vperm.xlu0 %3598, %v3589
        %v3600 = vpop.permute.xlu0 %3599
        %3603 = vset.pattern.permute.xlu0 0
        %3604 = vperm.xlu0 %3603, %v3590
        %v3605 = vpop.permute.xlu0 %3604
        %3608 = vset.pattern.permute.xlu0 0
        %3609 = vperm.xlu0 %3608, %v3591
        %v3610 = vpop.permute.xlu0 %3609
        %v3616 = vunpack.c.l.b16 %v3571
        %v3617 = vunpack.c.l.b16 %v3572
        %v3618 = vunpack.c.l.b16 %v3573
        %v3619 = vunpack.c.l.b16 %v3574
        %v3620 = vpack.c.b16 %v3617, %v3616
        %v3621 = vpack.c.b16 %v3619, %v3618
        %v3623 = vsel %vm1019, %v3620, 0
        %v3626 = vsel %vm1019, %v3621, 0
        %3628 = vmatprep.subr.bf16.mxu0 %v3565
        %3629 = vmatpush1.bf16.msra.mxu0 %v3564
        %3630 = vmatprep.subr.bf16.mxu0 %v3568
        %3631 = vmatpush1.bf16.msra.mxu0 %v3567
        %3632 = vmatprep.subr.bf16.mxu0 0
        %3633 = vmatpush1.bf16.msra.mxu0 0
        %3634 = vmatprep.subr.bf16.mxu0 0
        %3635 = vmatpush1.bf16.msra.mxu0 0
        %3636 = vmatprep.subr.bf16.mxu0 0
        %3637 = vmatpush1.bf16.msra.mxu0 0
        %3638 = vmatprep.subr.bf16.mxu0 0
        %3639 = vmatpush1.bf16.msra.mxu0 0
        %3640 = vmatprep.subr.bf16.mxu0 0
        %3641 = vmatpush1.bf16.msra.mxu0 0
        %3642 = vmatprep.subr.bf16.mxu0 0
        %3643 = vmatpush1.bf16.msra.mxu0 0
        %3644 = vmatprep.subr.bf16.mxu0 0
        %3645 = vmatpush1.bf16.msra.mxu0 0
        %3646 = vmatprep.subr.bf16.mxu0 0
        %3647 = vmatpush1.bf16.msra.mxu0 0
        %3648 = vmatprep.subr.bf16.mxu0 0
        %3649 = vmatpush1.bf16.msra.mxu0 0
        %3650 = vmatprep.subr.bf16.mxu0 0
        %3651 = vmatpush1.bf16.msra.mxu0 0
        %3652 = vmatprep.subr.bf16.mxu0 0
        %3653 = vmatpush1.bf16.msra.mxu0 0
        %3654 = vmatprep.subr.bf16.mxu0 0
        %3655 = vmatpush1.bf16.msra.mxu0 0
        %3656 = vmatprep.subr.bf16.mxu0 0
        %3657 = vmatpush1.bf16.msra.mxu0 0
        %3658 = vmatprep.subr.bf16.mxu0 0
        %3659 = vmatpush1.bf16.msra.mxu0 0
        %3660 = vmatprep.mubr.bf16.mxu0 0
        %3661 = vmatmul.mubr.bf16.gmra.mrb[0].mxu0 %v3623
        %v3662 = vpop.f32.mrb[0].mxu0
        %v3663 = vadd.f32 %v3595, %v3662
        %v3664 = vpop.f32.mrb[0].mxu0
        %v3665 = vadd.f32 %v3595, %v3664
        %v3666 = vpop.f32.mrb[0].mxu0
        %v3667 = vadd.f32 %v3600, %v3666
        %v3668 = vpop.f32.mrb[0].mxu0
        %v3669 = vadd.f32 %v3600, %v3668
        %3670 = vmatprep.mubr.bf16.mxu0 0
        %3671 = vmatmul.mubr.bf16.gmra.mrb[0].mxu0 %v3626
        %v3672 = vpop.f32.mrb[0].mxu0
        %v3673 = vadd.f32 %v3605, %v3672
        %v3674 = vpop.f32.mrb[0].mxu0
        %v3675 = vadd.f32 %v3605, %v3674
        %v3676 = vpop.f32.mrb[0].mxu0
        %v3677 = vadd.f32 %v3610, %v3676
        %v3678 = vpop.f32.mrb[0].mxu0
        %v3679 = vadd.f32 %v3610, %v3678
        %3680 = vdwg.mxu0
        %3681 = vmatprep.subr.bf16.mxu0 0
        %3682 = vmatpush1.bf16.msra.mxu0 %v3566
        %3683 = vmatprep.subr.bf16.mxu0 0
        %3684 = vmatpush1.bf16.msra.mxu0 %v3569
        %3685 = vmatprep.subr.bf16.mxu0 0
        %3686 = vmatpush1.bf16.msra.mxu0 0
        %3687 = vmatprep.subr.bf16.mxu0 0
        %3688 = vmatpush1.bf16.msra.mxu0 0
        %3689 = vmatprep.subr.bf16.mxu0 0
        %3690 = vmatpush1.bf16.msra.mxu0 0
        %3691 = vmatprep.subr.bf16.mxu0 0
        %3692 = vmatpush1.bf16.msra.mxu0 0
        %3693 = vmatprep.subr.bf16.mxu0 0
        %3694 = vmatpush1.bf16.msra.mxu0 0
        %3695 = vmatprep.subr.bf16.mxu0 0
        %3696 = vmatpush1.bf16.msra.mxu0 0
        %3697 = vmatprep.subr.bf16.mxu0 0
        %3698 = vmatpush1.bf16.msra.mxu0 0
        %3699 = vmatprep.subr.bf16.mxu0 0
        %3700 = vmatpush1.bf16.msra.mxu0 0
        %3701 = vmatprep.subr.bf16.mxu0 0
        %3702 = vmatpush1.bf16.msra.mxu0 0
        %3703 = vmatprep.subr.bf16.mxu0 0
        %3704 = vmatpush1.bf16.msra.mxu0 0
        %3705 = vmatprep.subr.bf16.mxu0 0
        %3706 = vmatpush1.bf16.msra.mxu0 0
        %3707 = vmatprep.subr.bf16.mxu0 0
        %3708 = vmatpush1.bf16.msra.mxu0 0
        %3709 = vmatprep.subr.bf16.mxu0 0
        %3710 = vmatpush1.bf16.msra.mxu0 0
        %3711 = vmatprep.subr.bf16.mxu0 0
        %3712 = vmatpush1.bf16.msra.mxu0 0
        %3713 = vmatprep.mubr.bf16.mxu0 0
        %3714 = vmatmul.mubr.bf16.gmra.mrb[0].mxu0 %v3623
        %v3715 = vpop.f32.mrb[0].mxu0
        %v3716 = vadd.f32 %v3595, %v3715
        %v3717 = vpop.f32.mrb[0].mxu0
        %v3718 = vpop.f32.mrb[0].mxu0
        %v3719 = vadd.f32 %v3600, %v3718
        %v3720 = vpop.f32.mrb[0].mxu0
        %3721 = vmatprep.mubr.bf16.mxu0 0
        %3722 = vmatmul.mubr.bf16.gmra.mrb[0].mxu0 %v3626
        %v3723 = vpop.f32.mrb[0].mxu0
        %v3724 = vadd.f32 %v3605, %v3723
        %v3725 = vpop.f32.mrb[0].mxu0
        %v3726 = vpop.f32.mrb[0].mxu0
        %v3727 = vadd.f32 %v3610, %v3726
        %v3728 = vpop.f32.mrb[0].mxu0
        %3729 = vdwg.mxu0
        %v3730 = vadd.f32 %v3575, %v3663
        %v3731 = vadd.f32 %v3576, %v3665
        %v3732 = vadd.f32 %v3577, %v3716
        %v3733 = vadd.f32 %v3578, %v3667
        %v3734 = vadd.f32 %v3579, %v3669
        %v3735 = vadd.f32 %v3580, %v3719
        %v3736 = vadd.f32 %v3581, %v3673
        %v3737 = vadd.f32 %v3582, %v3675
        %v3738 = vadd.f32 %v3583, %v3724
        %v3739 = vadd.f32 %v3584, %v3677
        %v3740 = vadd.f32 %v3585, %v3679
        %v3741 = vadd.f32 %v3586, %v3727
        %3742 = vst [vmem:[#allocation4] sm:$0xff] %v3730
        %3743 = vst [vmem:[#allocation4 + $0x8] sm:$0xff] %v3731
        %3744 = vst [vmem:[#allocation4 + $0x10] sm:$0xff] %v3732
        %3745 = vst [vmem:[#allocation4 + $0x18] sm:$0xff] %v3733
        %3746 = vst [vmem:[#allocation4 + $0x20] sm:$0xff] %v3734
        %3747 = vst [vmem:[#allocation4 + $0x28] sm:$0xff] %v3735
        %3748 = vst [vmem:[#allocation4 + $0x30] sm:$0xff] %v3736
        %3749 = vst [vmem:[#allocation4 + $0x38] sm:$0xff] %v3737
        %3750 = vst [vmem:[#allocation4 + $0x40] sm:$0xff] %v3738
        %3751 = vst [vmem:[#allocation4 + $0x48] sm:$0xff] %v3739
        %3752 = vst [vmem:[#allocation4 + $0x50] sm:$0xff] %v3740
        %3753 = vst [vmem:[#allocation4 + $0x58] sm:$0xff] %v3741
        %v3754 = vld [vmem:[%s5] sm:$0xf]
        %v3755 = vld [vmem:[#allocation4] sm:$0xff]
        %v3756 = vld [vmem:[#allocation4 + $0x8] sm:$0xff]
        %v3757 = vld [vmem:[#allocation4 + $0x10] sm:$0xff]
        %v3758 = vld [vmem:[#allocation4 + $0x18] sm:$0xff]
        %v3759 = vld [vmem:[#allocation4 + $0x20] sm:$0xff]
        %v3760 = vld [vmem:[#allocation4 + $0x28] sm:$0xff]
        %v3761 = vld [vmem:[#allocation4 + $0x30] sm:$0xff]
        %v3762 = vld [vmem:[#allocation4 + $0x38] sm:$0xff]
        %v3763 = vld [vmem:[#allocation4 + $0x40] sm:$0xff]
        %v3764 = vld [vmem:[#allocation4 + $0x48] sm:$0xff]
        %v3765 = vld [vmem:[#allocation4 + $0x50] sm:$0xff]
        %v3766 = vld [vmem:[#allocation4 + $0x58] sm:$0xff]
        %v3767 = vpack.c.bf16 %v3758, %v3755
        %v3768 = vpack.c.bf16 %v3759, %v3756
        %v3769 = vpack.c.bf16 %v3760, %v3757
        %v3770 = vpack.c.bf16 %v3764, %v3761
        %v3771 = vpack.c.bf16 %v3765, %v3762
        %v3772 = vpack.c.bf16 %v3766, %v3763
        %v3773 = vld [vmem:[%s6] sm:$0xff]
        %3775 = vset.pattern.permute.xlu0 0
        %3776 = vperm.xlu0 %3775, %v3773
        %v3777 = vpop.permute.xlu0 %3776
        %v3780 = vsel %vm1019, %v3754, 0
        %3782 = vmatprep.subr.bf16.mxu0 %v3768
        %3783 = vmatpush1.bf16.msra.mxu0 %v3767
        %3784 = vmatprep.subr.bf16.mxu0 %v3771
        %3785 = vmatpush1.bf16.msra.mxu0 %v3770
        %3786 = vmatprep.subr.bf16.mxu0 0
        %3787 = vmatpush1.bf16.msra.mxu0 0
        %3788 = vmatprep.subr.bf16.mxu0 0
        %3789 = vmatpush1.bf16.msra.mxu0 0
        %3790 = vmatprep.subr.bf16.mxu0 0
        %3791 = vmatpush1.bf16.msra.mxu0 0
        %3792 = vmatprep.subr.bf16.mxu0 0
        %3793 = vmatpush1.bf16.msra.mxu0 0
        %3794 = vmatprep.subr.bf16.mxu0 0
        %3795 = vmatpush1.bf16.msra.mxu0 0
        %3796 = vmatprep.subr.bf16.mxu0 0
        %3797 = vmatpush1.bf16.msra.mxu0 0
        %3798 = vmatprep.subr.bf16.mxu0 0
        %3799 = vmatpush1.bf16.msra.mxu0 0
        %3800 = vmatprep.subr.bf16.mxu0 0
        %3801 = vmatpush1.bf16.msra.mxu0 0
        %3802 = vmatprep.subr.bf16.mxu0 0
        %3803 = vmatpush1.bf16.msra.mxu0 0
        %3804 = vmatprep.subr.bf16.mxu0 0
        %3805 = vmatpush1.bf16.msra.mxu0 0
        %3806 = vmatprep.subr.bf16.mxu0 0
        %3807 = vmatpush1.bf16.msra.mxu0 0
        %3808 = vmatprep.subr.bf16.mxu0 0
        %3809 = vmatpush1.bf16.msra.mxu0 0
        %3810 = vmatprep.subr.bf16.mxu0 0
        %3811 = vmatpush1.bf16.msra.mxu0 0
        %3812 = vmatprep.subr.bf16.mxu0 0
        %3813 = vmatpush1.bf16.msra.mxu0 0
        %3814 = vmatprep.mubr.bf16.mxu0 0
        %3815 = vmatmul.mubr.bf16.gmra.mrb[0].mxu0 %v3780
        %v3816 = vpop.f32.mrb[0].mxu0
        %v3817 = vadd.f32 %v3777, %v3816
        %v3818 = vpop.f32.mrb[0].mxu0
        %v3819 = vadd.f32 %v3777, %v3818
        %v3820 = vpop.f32.mrb[0].mxu0
        %v3821 = vpop.f32.mrb[0].mxu0
        %3822 = vdwg.mxu0
        %3823 = vmatprep.subr.bf16.mxu0 0
        %3824 = vmatpush1.bf16.msra.mxu0 %v3769
        %3825 = vmatprep.subr.bf16.mxu0 0
        %3826 = vmatpush1.bf16.msra.mxu0 %v3772
        %3827 = vmatprep.subr.bf16.mxu0 0
        %3828 = vmatpush1.bf16.msra.mxu0 0
        %3829 = vmatprep.subr.bf16.mxu0 0
        %3830 = vmatpush1.bf16.msra.mxu0 0
        %3831 = vmatprep.subr.bf16.mxu0 0
        %3832 = vmatpush1.bf16.msra.mxu0 0
        %3833 = vmatprep.subr.bf16.mxu0 0
        %3834 = vmatpush1.bf16.msra.mxu0 0
        %3835 = vmatprep.subr.bf16.mxu0 0
        %3836 = vmatpush1.bf16.msra.mxu0 0
        %3837 = vmatprep.subr.bf16.mxu0 0
        %3838 = vmatpush1.bf16.msra.mxu0 0
        %3839 = vmatprep.subr.bf16.mxu0 0
        %3840 = vmatpush1.bf16.msra.mxu0 0
        %3841 = vmatprep.subr.bf16.mxu0 0
        %3842 = vmatpush1.bf16.msra.mxu0 0
        %3843 = vmatprep.subr.bf16.mxu0 0
        %3844 = vmatpush1.bf16.msra.mxu0 0
        %3845 = vmatprep.subr.bf16.mxu0 0
        %3846 = vmatpush1.bf16.msra.mxu0 0
        %3847 = vmatprep.subr.bf16.mxu0 0
        %3848 = vmatpush1.bf16.msra.mxu0 0
        %3849 = vmatprep.subr.bf16.mxu0 0
        %3850 = vmatpush1.bf16.msra.mxu0 0
        %3851 = vmatprep.subr.bf16.mxu0 0
        %3852 = vmatpush1.bf16.msra.mxu0 0
        %3853 = vmatprep.subr.bf16.mxu0 0
        %3854 = vmatpush1.bf16.msra.mxu0 0
        %3855 = vmatprep.mubr.bf16.mxu0 0
        %3856 = vmatmul.mubr.bf16.gmra.mrb[0].mxu0 %v3780
        %v3857 = vpop.f32.mrb[0].mxu0
        %v3858 = vadd.f32 %v3777, %v3857
        %v3859 = vpop.f32.mrb[0].mxu0
        %v3860 = vpop.f32.mrb[0].mxu0
        %v3861 = vpop.f32.mrb[0].mxu0
        %3862 = vdwg.mxu0
        %3863 = vst [vmem:[%s271] sm:$0xff] %v3817
        %3864 = vst [vmem:[%s271 + $0x8] sm:$0xff] %v3819
        %3865 = vst [vmem:[%s271 + $0x10] sm:$0xff] %v3858
        %s3866 = sand.u32 %s181, 1
        %s3867 = scalar_lea.sflag [#allocation6], %s3866
        %s3868 = sand.u32 %s181, 1
        %s3869 = smul.addr %s3868, 24
        %s3870 = scalar_lea.vmem [#allocation5], %s3869
        // Predicated region
        $region49: #{tpu_custom_call.1} parent=47 // pred_check
          %p3871 = pneg %p191
        $region50: #{tpu_custom_call.1} parent=47 // pred_check_branch
          %3873 = sbr.rel (%p3871) target = $region52
        $region51: #{tpu_custom_call.1} parent=47 // pred_region
          %s3875 = ssub.s32 384, 384
          %3876 = vsyncadd %s3867, %s3875
          %s3877 = smul.addr %s21, 3
          %s3878 = smul.addr %s3877, 128
          %s3879 = scalar_lea.hbm %s7, %s3878
          %s3881 = sshll.u32 %s3870, 4
          %s3882 = int_to_ptr.vmem [resolvable:$true] %s3881
          %3884 = dma.vmem_to_hbm [thread:$0]  %s3882, 384, %s3879, %s3867
        $region52: #{tpu_custom_call.1} parent=47 // pred_fallthru
          _
      $region48: #{tpu_custom_call.1} parent=5 // pred_fallthru
        _
      %p3885 = scmp.le.s32.totalorder 2, %s16
      // Predicated region
      $region53: #{tpu_custom_call.1} parent=5 // pred_check
        %p3886 = pneg %p3885
      $region54: #{tpu_custom_call.1} parent=5 // pred_check_branch
        %3888 = sbr.rel (%p3886) target = $region56
      $region55: #{tpu_custom_call.1} parent=5 // pred_region
        %s3889 = ssub.s32 %s16, 2
        // Predicated region
        $region57: #{tpu_custom_call.1} parent=55 // pred_check
          %p3890 = pneg %p197
        $region58: #{tpu_custom_call.1} parent=55 // pred_check_branch
          %3892 = sbr.rel (%p3890) target = $region60
        $region59: #{tpu_custom_call.1} parent=55 // pred_region
          %s3893 = sand.u32 %s182, 1
          %s3894 = scalar_lea.sflag [#allocation6], %s3893
          %s3895 = sand.u32 %s182, 1
          %s3896 = smul.addr %s3895, 24
          %s3897 = scalar_lea.vmem [#allocation5], %s3896
          %3898 = dma.done %s3894, 384
        $region60: #{tpu_custom_call.1} parent=55 // pred_fallthru
          _
      $region56: #{tpu_custom_call.1} parent=5 // pred_fallthru
        _
    $region6: #{tpu_custom_call.1} parent=1 // loop_footer
      %s20 = sadd.s32 1, %s16
    $region7: #{tpu_custom_call.1} parent=1 // loop_footer_branch
      %15 = sbr.rel target = $region3
    $region8: #{tpu_custom_call.1} parent=1 // loop_exit
      _
    %3899 = vsyncpa [#allocation6], 1
    %s3900 = scalar_lea.sflag [#allocation6], 1
    %3901 = vsyncpa %s3900, 1

</llo_original>
